<compile_context>
chip_gen: v7x
topology: tpu7x:2x2x1
jax: 0.10.0
libtpu: 0.0.40
codegen_flags: <defaults>
</compile_context>

<pallas_src>
import numpy as np
import jax
import jax.numpy as jnp
from jax.experimental import pallas as pl
from jax.experimental.pallas import tpu as pltpu

# ----------------------------- model sizes (small) -------------------------
VOCAB = 100
EMB = 32      # embedding_size
HID = 32      # hidden_size
BATCH = 2
SEQ = 8
NUM_LAYERS = 1  # kernel implements the num_layers=1 case of the reference


# ------------------------------- Pallas kernel -----------------------------
def encdec_kernel(
    emb_bi_ref, mask_col_ref, bsum_ref,
    w_ienc_ref, b_ienc_ref, w_henc_ref, b_hn_enc_ref,   # fused bi-GRU encoder
    ww_enc_ref, ww_dec_ref, bw_ref, wv_col_ref,         # attention (split W, folded V)
    w_idec_ref, b_idec_ref, w_hdec_ref, b_hn_dec_ref,   # decoder GRU (gate-packed)
    x_out_ref, h_out_ref,                               # outputs: (B,H), (B,H)
    enc_scr,                                            # scratch: (T*B, H)
):
    B, H = h_out_ref.shape
    T = emb_bi_ref.shape[0] // B

    def dot(a, b):
        # Default matmul precision (no multi-pass "highest" emulation on the
        # serial h-chain); accumulate in f32 on the MXU.
        return jnp.dot(a, b, preferred_element_type=jnp.float32)

    # ---------------- encoder: fused forward+backward GRU ----------------
    # Gate-column layout on the 6H axis: [r_f | r_b | z_f | z_b | n_f | n_b].
    # Row block s of emb_bi holds [emb(t=s) | emb(t=T-1-s)], so one matmul
    # yields every input-gate pre-activation of both directions (biases for
    # the r/z gates already include the hidden-side bias).
    gi_enc = dot(emb_bi_ref[...], w_ienc_ref[...]) + b_ienc_ref[...]   # (T*B, 6H)
    w_henc = w_henc_ref[...]                                           # (2H, 6H) block-diag
    b_hn_enc = b_hn_enc_ref[...]                                       # (1, 2H) [bhn_f|bhn_b]

    h_cat = jnp.zeros((B, 2 * H), jnp.float32)      # [h_fwd | h_bwd]
    hs = []                                          # per-step hiddens stay in vregs
    for s in range(T):
        gi = gi_enc[s * B:(s + 1) * B, :]            # off the h-chain (precomputed)
        gh = dot(h_cat, w_henc)                      # ONE MXU op on the serial chain
        rz = jax.nn.sigmoid(gi[:, :4 * H] + gh[:, :4 * H])   # one 128-lane EUP push
        r = rz[:, :2 * H]
        z = rz[:, 2 * H:]
        n = jnp.tanh(gi[:, 4 * H:] + r * (gh[:, 4 * H:] + b_hn_enc))
        h_cat = (1.0 - z) * n + z * h_cat
        hs.append(h_cat)

    # Both directions finish at step T-1; reference sums fwd/bwd final hiddens.
    h_enc = hs[-1][:, :H] + hs[-1][:, H:]            # (B, H)

    # Encoder outputs out[t] = h_fwd(after time t) + h_bwd(after time t).
    # Per-step values were held in registers; the summed slab is written once
    # here.  NOTE: every row of enc_scr is written before it is read below.
    for t in range(T):
        enc_scr[t * B:(t + 1) * B, :] = hs[t][:, :H] + hs[T - 1 - t][:, H:]
    enc_out = enc_scr[...]                           # (T*B, H)

    # ---------------- Bahdanau attention (2-D, MXU-driven) ----------------
    sel = bsum_ref[:, :B]                            # (T*B, B) one-hot batch id
    h_term = dot(h_enc, ww_dec_ref[...]) + bw_ref[...]        # (B, H)
    # zt = tanh(enc @ W_enc^T + h_enc[b] @ W_dec^T + bw); the per-batch term is
    # broadcast over time by a tiny matmul instead of jnp.tile.
    zt = jnp.tanh(dot(enc_out, ww_enc_ref[...]) + dot(sel, h_term))
    score = dot(zt, wv_col_ref[...])                 # (T*B, 1); V's bias cancels in softmax
    score = jnp.where(mask_col_ref[...] == 0.0, -1e9, score)
    m = jnp.max(score, axis=0, keepdims=True)        # global max for stability
    e = jnp.exp(score - m)
    denom = dot(bsum_ref[...], e)                    # per-batch sums, already row-broadcast
    attn = e / denom                                 # (T*B, 1) softmax over seq per batch
    ctx = enc_out * attn                             # lane-broadcast multiply, stays 2-D

    # ---------------- decoder GRU (gates packed [r | z | n]) ----------------
    gi_dec = dot(ctx, w_idec_ref[...]) + b_idec_ref[...]       # (T*B, 3H), hoisted
    w_hdec = w_hdec_ref[...]
    b_hn_dec = b_hn_dec_ref[...]

    h_d = h_enc
    for t in range(T):
        gi = gi_dec[t * B:(t + 1) * B, :]
        gh = dot(h_d, w_hdec)                        # ONE MXU op on the serial chain
        rz = jax.nn.sigmoid(gi[:, :2 * H] + gh[:, :2 * H])
        r = rz[:, :H]
        z = rz[:, H:]
        n = jnp.tanh(gi[:, 2 * H:] + r * (gh[:, 2 * H:] + b_hn_dec))
        h_d = (1.0 - z) * n + z * h_d
        if t == 0:
            x_out_ref[...] = h_d                     # decoder output at t = 0
    h_out_ref[...] = h_d


# --------------------------- kernel-layout params ----------------------------
def prepare_kernel_params(p):
    """One-time re-layout of the PyTorch-convention weights for the kernel."""
    H, E = HID, EMB
    f32 = np.float32

    def gsplit(w):            # (3H, in) -> r, z, n, each transposed to (in, H)
        w = np.asarray(w, f32)
        return w[0:H].T, w[H:2 * H].T, w[2 * H:3 * H].T

    def b3(b):                # (3H,) -> r, z, n
        b = np.asarray(b, f32)
        return b[0:H], b[H:2 * H], b[2 * H:3 * H]

    # --- encoder: fused fwd/bwd, column layout [r_f r_b z_f z_b n_f n_b] ---
    wir_f, wiz_f, win_f = gsplit(p["wih_f"])
    wir_b, wiz_b, win_b = gsplit(p["wih_b"])
    w_ienc = np.zeros((2 * E, 6 * H), f32)
    w_ienc[:E, 0 * H:1 * H] = wir_f
    w_ienc[:E, 2 * H:3 * H] = wiz_f
    w_ienc[:E, 4 * H:5 * H] = win_f
    w_ienc[E:, 1 * H:2 * H] = wir_b
    w_ienc[E:, 3 * H:4 * H] = wiz_b
    w_ienc[E:, 5 * H:6 * H] = win_b

    whr_f, whz_f, whn_f = gsplit(p["whh_f"])
    whr_b, whz_b, whn_b = gsplit(p["whh_b"])
    w_henc = np.zeros((2 * H, 6 * H), f32)
    w_henc[:H, 0 * H:1 * H] = whr_f
    w_henc[:H, 2 * H:3 * H] = whz_f
    w_henc[:H, 4 * H:5 * H] = whn_f
    w_henc[H:, 1 * H:2 * H] = whr_b
    w_henc[H:, 3 * H:4 * H] = whz_b
    w_henc[H:, 5 * H:6 * H] = whn_b

    bir_f, biz_f, bin_f = b3(p["bih_f"])
    bhr_f, bhz_f, bhn_f = b3(p["bhh_f"])
    bir_b, biz_b, bin_b = b3(p["bih_b"])
    bhr_b, bhz_b, bhn_b = b3(p["bhh_b"])
    b_ienc = np.concatenate([bir_f + bhr_f, bir_b + bhr_b,
                             biz_f + bhz_f, biz_b + bhz_b,
                             bin_f, bin_b]).reshape(1, 6 * H)
    b_hn_enc = np.concatenate([bhn_f, bhn_b]).reshape(1, 2 * H)

    # --- attention: split W, column-summed V (its bias cancels in softmax) ---
    ww = np.asarray(p["ww"], f32)
    wv = np.asarray(p["wv"], f32)
    ww_enc = ww[:, :H].T
    ww_dec = ww[:, H:].T
    bw = np.asarray(p["bw"], f32).reshape(1, H)
    wv_col = wv.sum(axis=0).reshape(H, 1)

    # --- decoder: gate-packed [r | z | n] ---
    wir_d, wiz_d, win_d = gsplit(p["wih_d"])
    whr_d, whz_d, whn_d = gsplit(p["whh_d"])
    w_idec = np.concatenate([wir_d, wiz_d, win_d], axis=1)
    w_hdec = np.concatenate([whr_d, whz_d, whn_d], axis=1)
    bir_d, biz_d, bin_d = b3(p["bih_d"])
    bhr_d, bhz_d, bhn_d = b3(p["bhh_d"])
    b_idec = np.concatenate([bir_d + bhr_d, biz_d + bhz_d, bin_d]).reshape(1, 3 * H)
    b_hn_dec = bhn_d.reshape(1, H)

    # same-batch selector: bsum[i, j] = 1 iff rows i, j belong to the same batch;
    # its first B columns are the one-hot batch-id matrix used for broadcasting.
    bsum = np.tile(np.eye(BATCH, dtype=f32), (SEQ, SEQ))

    kp = {
        "emb_table": p["emb_table"],
        "w_ienc": w_ienc, "b_ienc": b_ienc, "w_henc": w_henc, "b_hn_enc": b_hn_enc,
        "ww_enc": ww_enc, "ww_dec": ww_dec, "bw": bw, "wv_col": wv_col,
        "w_idec": w_idec, "b_idec": b_idec, "w_hdec": w_hdec, "b_hn_dec": b_hn_dec,
        "bsum": bsum,
    }
    return jax.tree.map(lambda x: jnp.asarray(x, jnp.float32), kp)


# ------------------------------- wrapper ------------------------------------
@jax.jit
def encoder_decoder_forward(tokens, mask, kp):
    """tokens: (B, T) int32, mask: (B, T) int32. Returns (x (B,H), hidden (1,B,H))."""
    B, T = tokens.shape
    H = HID

    emb = kp["emb_table"][tokens].astype(jnp.float32)           # (B, T, E) gather (glue)
    emb_t = jnp.transpose(emb, (1, 0, 2))                       # (T, B, E) time-major
    emb_bi = jnp.concatenate(
        [emb_t.reshape(T * B, EMB),
         jnp.flip(emb_t, axis=0).reshape(T * B, EMB)], axis=1)  # (T*B, 2E): [fwd | bwd]
    mask_col = jnp.transpose(mask, (1, 0)).astype(jnp.float32).reshape(T * B, 1)

    args = (
        emb_bi, mask_col, kp["bsum"],
        kp["w_ienc"], kp["b_ienc"], kp["w_henc"], kp["b_hn_enc"],
        kp["ww_enc"], kp["ww_dec"], kp["bw"], kp["wv_col"],
        kp["w_idec"], kp["b_idec"], kp["w_hdec"], kp["b_hn_dec"],
    )

    vmem = pl.BlockSpec(memory_space=pltpu.MemorySpace.VMEM)
    # Single TensorCore, no grid: the whole problem (a few KB) lives in VMEM.
    # NOTE: for larger batches, add a batch grid axis with
    # dimension_semantics=("parallel",) so v7x's second TensorCore is used.
    x_out, h_out = pl.pallas_call(
        encdec_kernel,
        out_shape=(
            jax.ShapeDtypeStruct((B, H), jnp.float32),
            jax.ShapeDtypeStruct((B, H), jnp.float32),
        ),
        in_specs=[vmem] * len(args),
        out_specs=(vmem, vmem),
        scratch_shapes=[pltpu.VMEM((T * B, H), jnp.float32)],   # summed encoder outputs
    )(*args)

    return x_out, h_out[None]                      # hidden as (num_layers=1, B, H)


# --------------------------- pure-JAX reference ------------------------------
def ref_forward(tokens, mask, p):
    B, T = tokens.shape
    H = HID
    hp = jax.lax.Precision.HIGHEST

    def mm(a, b):
        return jnp.matmul(a, b, precision=hp)

    emb = p["emb_table"][tokens].astype(jnp.float32)            # (B, T, E)

    def gru_cell(x, h, wih, whh, bih, bhh):
        gi = mm(x, wih.T) + bih
        gh = mm(h, whh.T) + bhh
        r = jax.nn.sigmoid(gi[:, :H] + gh[:, :H])
        z = jax.nn.sigmoid(gi[:, H:2 * H] + gh[:, H:2 * H])
        n = jnp.tanh(gi[:, 2 * H:] + r * gh[:, 2 * H:])
        return (1.0 - z) * n + z * h

    h_f = jnp.zeros((B, H), jnp.float32)
    out_f = []
    for t in range(T):
        h_f = gru_cell(emb[:, t], h_f, p["wih_f"], p["whh_f"], p["bih_f"], p["bhh_f"])
        out_f.append(h_f)
    h_b = jnp.zeros((B, H), jnp.float32)
    out_b = [None] * T
    for t in reversed(range(T)):
        h_b = gru_cell(emb[:, t], h_b, p["wih_b"], p["whh_b"], p["bih_b"], p["bhh_b"])
        out_b[t] = h_b
    enc_out = jnp.stack([out_f[t] + out_b[t] for t in range(T)], axis=1)    # (B,T,H)
    h_enc = h_f + h_b

    dec_h = jnp.broadcast_to(h_enc[:, None, :], (B, T, H))
    cat = jnp.concatenate([enc_out, dec_h], axis=-1)
    zt = jnp.tanh(mm(cat, p["ww"].T) + p["bw"])
    v = mm(zt, p["wv"].T) + p["bv"]
    score = jnp.sum(v, axis=2, keepdims=True)                               # (B,T,1)
    score = jnp.where((mask == 0)[..., None], -1e9, score)
    attn = jax.nn.softmax(score, axis=1)
    ctx = enc_out * attn

    h_d = h_enc
    outs = []
    for t in range(T):
        h_d = gru_cell(ctx[:, t], h_d, p["wih_d"], p["whh_d"], p["bih_d"], p["bhh_d"])
        outs.append(h_d)
    return outs[0], h_d[None]


# ------------------------------ param init -----------------------------------
def init_params(key):
    ks = list(jax.random.split(key, 24))
    s = 1.0 / np.sqrt(HID)

    def u(k, shape):
        return jax.random.uniform(k, shape, jnp.float32, -s, s)

    emb_table = 0.1 * jax.random.normal(ks[0], (VOCAB, EMB), jnp.float32)
    emb_table = emb_table.at[0].set(0.0)  # padding_idx=0

    return {
        "emb_table": emb_table,
        # encoder forward direction
        "wih_f": u(ks[1], (3 * HID, EMB)), "whh_f": u(ks[2], (3 * HID, HID)),
        "bih_f": u(ks[3], (3 * HID,)), "bhh_f": u(ks[4], (3 * HID,)),
        # encoder backward direction
        "wih_b": u(ks[5], (3 * HID, EMB)), "whh_b": u(ks[6], (3 * HID, HID)),
        "bih_b": u(ks[7], (3 * HID,)), "bhh_b": u(ks[8], (3 * HID,)),
        # attention
        "ww": u(ks[9], (HID, 2 * HID)), "bw": u(ks[10], (HID,)),
        "wv": u(ks[11], (HID, HID)), "bv": u(ks[12], (HID,)),
        # decoder GRU
        "wih_d": u(ks[13], (3 * HID, HID)), "whh_d": u(ks[14], (3 * HID, HID)),
        "bih_d": u(ks[15], (3 * HID,)), "bhh_d": u(ks[16], (3 * HID,)),
    }


# --------------------------------- main ---------------------------------------
if __name__ == "__main__":
    key = jax.random.PRNGKey(0)
    params = init_params(key)
    kparams = prepare_kernel_params(params)   # one-time weight re-layout (hoisted)

    tok_key = jax.random.fold_in(key, 123)
    tokens = jax.random.randint(tok_key, (BATCH, SEQ), 1, VOCAB, dtype=jnp.int32)
    # padding at the tail of the second sequence
    mask = jnp.ones((BATCH, SEQ), dtype=jnp.int32)
    mask = mask.at[1, SEQ - 2:].set(0)
    tokens = tokens.at[1, SEQ - 2:].set(0)

    x, hidden = encoder_decoder_forward(tokens, mask, kparams)
    jax.block_until_ready((x, hidden))

    # Tolerance allows for default-precision MXU (bf16-pass) rounding in the
    # kernel versus the HIGHEST-precision reference; structural/wiring errors
    # would be orders of magnitude larger.
    x_ref, h_ref = ref_forward(tokens, mask, params)
    np.testing.assert_allclose(np.asarray(x), np.asarray(x_ref), rtol=2e-2, atol=2e-2)
    np.testing.assert_allclose(np.asarray(hidden), np.asarray(h_ref), rtol=2e-2, atol=2e-2)

    print("KERNEL_OK")
</pallas_src>

<mosaic_0001>
module attributes {stable_mosaic.version = 11 : i64} {
  func.func @encdec_kernel(%arg0: memref<16x64xf32, #tpu.memory_space<vmem>>, %arg1: memref<16x1xf32, #tpu.memory_space<vmem>>, %arg2: memref<16x16xf32, #tpu.memory_space<vmem>>, %arg3: memref<64x192xf32, #tpu.memory_space<vmem>>, %arg4: memref<1x192xf32, #tpu.memory_space<vmem>>, %arg5: memref<64x192xf32, #tpu.memory_space<vmem>>, %arg6: memref<1x64xf32, #tpu.memory_space<vmem>>, %arg7: memref<32x32xf32, #tpu.memory_space<vmem>>, %arg8: memref<32x32xf32, #tpu.memory_space<vmem>>, %arg9: memref<1x32xf32, #tpu.memory_space<vmem>>, %arg10: memref<32x1xf32, #tpu.memory_space<vmem>>, %arg11: memref<32x96xf32, #tpu.memory_space<vmem>>, %arg12: memref<1x96xf32, #tpu.memory_space<vmem>>, %arg13: memref<32x96xf32, #tpu.memory_space<vmem>>, %arg14: memref<1x32xf32, #tpu.memory_space<vmem>>, %arg15: memref<2x32xf32, #tpu.memory_space<vmem>>, %arg16: memref<2x32xf32, #tpu.memory_space<vmem>>, %arg17: memref<16x32xf32, #tpu.memory_space<vmem>>) attributes {dimension_semantics = [], scalar_prefetch = 0 : i64, scratch_operands = 1 : i64, tpu.core_type = #tpu.core_type<tc>} {
    %c0 = arith.constant 0 : index
    %c0_0 = arith.constant 0 : index
    %0 = vector.load %arg0[%c0, %c0_0] : memref<16x64xf32, #tpu.memory_space<vmem>>, vector<16x64xf32>
    %c0_1 = arith.constant 0 : index
    %c0_2 = arith.constant 0 : index
    %1 = vector.load %arg3[%c0_1, %c0_2] : memref<64x192xf32, #tpu.memory_space<vmem>>, vector<64x192xf32>
    %cst = arith.constant dense<0.000000e+00> : vector<16x192xf32>
    %2 = tpu.matmul %0, %1, %cst {dimension_numbers = #tpu.dot_dimension_numbers<[1], [0], [0], [1], [0, 0, 1, 1], [], []>} : vector<16x64xf32>, vector<64x192xf32>, vector<16x192xf32> -> vector<16x192xf32>
    %c0_3 = arith.constant 0 : index
    %c0_4 = arith.constant 0 : index
    %3 = vector.load %arg4[%c0_3, %c0_4] : memref<1x192xf32, #tpu.memory_space<vmem>>, vector<1x192xf32>
    %4 = vector.broadcast %3 : vector<1x192xf32> to vector<16x192xf32>
    %5 = arith.addf %2, %4 : vector<16x192xf32>
    %c0_5 = arith.constant 0 : index
    %c0_6 = arith.constant 0 : index
    %6 = vector.load %arg5[%c0_5, %c0_6] : memref<64x192xf32, #tpu.memory_space<vmem>>, vector<64x192xf32>
    %c0_7 = arith.constant 0 : index
    %c0_8 = arith.constant 0 : index
    %7 = vector.load %arg6[%c0_7, %c0_8] : memref<1x64xf32, #tpu.memory_space<vmem>>, vector<1x64xf32>
    %cst_9 = arith.constant 0.000000e+00 : f32
    %8 = vector.broadcast %cst_9 : f32 to vector<2x64xf32>
    %9 = vector.extract_strided_slice %5 {offsets = [0, 0], sizes = [2, 192], strides = [1, 1]} : vector<16x192xf32> to vector<2x192xf32>
    %cst_10 = arith.constant dense<0.000000e+00> : vector<2x192xf32>
    %10 = tpu.matmul %8, %6, %cst_10 {dimension_numbers = #tpu.dot_dimension_numbers<[1], [0], [0], [1], [0, 0, 1, 1], [], []>} : vector<2x64xf32>, vector<64x192xf32>, vector<2x192xf32> -> vector<2x192xf32>
    %11 = vector.extract_strided_slice %9 {offsets = [0, 0], sizes = [2, 128], strides = [1, 1]} : vector<2x192xf32> to vector<2x128xf32>
    %12 = vector.extract_strided_slice %10 {offsets = [0, 0], sizes = [2, 128], strides = [1, 1]} : vector<2x192xf32> to vector<2x128xf32>
    %13 = arith.addf %11, %12 : vector<2x128xf32>
    %14 = arith.negf %13 : vector<2x128xf32>
    %15 = math.exp %14 : vector<2x128xf32>
    %cst_11 = arith.constant 1.000000e+00 : f32
    %16 = vector.broadcast %cst_11 : f32 to vector<2x128xf32>
    %17 = arith.addf %16, %15 : vector<2x128xf32>
    %18 = arith.divf %16, %17 : vector<2x128xf32>
    %19 = vector.extract_strided_slice %18 {offsets = [0, 0], sizes = [2, 64], strides = [1, 1]} : vector<2x128xf32> to vector<2x64xf32>
    %20 = vector.extract_strided_slice %18 {offsets = [0, 64], sizes = [2, 64], strides = [1, 1]} : vector<2x128xf32> to vector<2x64xf32>
    %21 = vector.extract_strided_slice %9 {offsets = [0, 128], sizes = [2, 64], strides = [1, 1]} : vector<2x192xf32> to vector<2x64xf32>
    %22 = vector.extract_strided_slice %10 {offsets = [0, 128], sizes = [2, 64], strides = [1, 1]} : vector<2x192xf32> to vector<2x64xf32>
    %23 = vector.broadcast %7 : vector<1x64xf32> to vector<2x64xf32>
    %24 = arith.addf %22, %23 : vector<2x64xf32>
    %25 = arith.mulf %19, %24 : vector<2x64xf32>
    %26 = arith.addf %21, %25 : vector<2x64xf32>
    %27 = math.tanh %26 : vector<2x64xf32>
    %cst_12 = arith.constant 1.000000e+00 : f32
    %28 = vector.broadcast %cst_12 : f32 to vector<2x64xf32>
    %29 = arith.subf %28, %20 : vector<2x64xf32>
    %30 = arith.mulf %29, %27 : vector<2x64xf32>
    %31 = arith.mulf %20, %8 : vector<2x64xf32>
    %32 = arith.addf %30, %31 : vector<2x64xf32>
    %33 = vector.extract_strided_slice %5 {offsets = [2, 0], sizes = [2, 192], strides = [1, 1]} : vector<16x192xf32> to vector<2x192xf32>
    %cst_13 = arith.constant dense<0.000000e+00> : vector<2x192xf32>
    %34 = tpu.matmul %32, %6, %cst_13 {dimension_numbers = #tpu.dot_dimension_numbers<[1], [0], [0], [1], [0, 0, 1, 1], [], []>} : vector<2x64xf32>, vector<64x192xf32>, vector<2x192xf32> -> vector<2x192xf32>
    %35 = vector.extract_strided_slice %33 {offsets = [0, 0], sizes = [2, 128], strides = [1, 1]} : vector<2x192xf32> to vector<2x128xf32>
    %36 = vector.extract_strided_slice %34 {offsets = [0, 0], sizes = [2, 128], strides = [1, 1]} : vector<2x192xf32> to vector<2x128xf32>
    %37 = arith.addf %35, %36 : vector<2x128xf32>
    %38 = arith.negf %37 : vector<2x128xf32>
    %39 = math.exp %38 : vector<2x128xf32>
    %cst_14 = arith.constant 1.000000e+00 : f32
    %40 = vector.broadcast %cst_14 : f32 to vector<2x128xf32>
    %41 = arith.addf %40, %39 : vector<2x128xf32>
    %42 = arith.divf %40, %41 : vector<2x128xf32>
    %43 = vector.extract_strided_slice %42 {offsets = [0, 0], sizes = [2, 64], strides = [1, 1]} : vector<2x128xf32> to vector<2x64xf32>
    %44 = vector.extract_strided_slice %42 {offsets = [0, 64], sizes = [2, 64], strides = [1, 1]} : vector<2x128xf32> to vector<2x64xf32>
    %45 = vector.extract_strided_slice %33 {offsets = [0, 128], sizes = [2, 64], strides = [1, 1]} : vector<2x192xf32> to vector<2x64xf32>
    %46 = vector.extract_strided_slice %34 {offsets = [0, 128], sizes = [2, 64], strides = [1, 1]} : vector<2x192xf32> to vector<2x64xf32>
    %47 = vector.broadcast %7 : vector<1x64xf32> to vector<2x64xf32>
    %48 = arith.addf %46, %47 : vector<2x64xf32>
    %49 = arith.mulf %43, %48 : vector<2x64xf32>
    %50 = arith.addf %45, %49 : vector<2x64xf32>
    %51 = math.tanh %50 : vector<2x64xf32>
    %cst_15 = arith.constant 1.000000e+00 : f32
    %52 = vector.broadcast %cst_15 : f32 to vector<2x64xf32>
    %53 = arith.subf %52, %44 : vector<2x64xf32>
    %54 = arith.mulf %53, %51 : vector<2x64xf32>
    %55 = arith.mulf %44, %32 : vector<2x64xf32>
    %56 = arith.addf %54, %55 : vector<2x64xf32>
    %57 = vector.extract_strided_slice %5 {offsets = [4, 0], sizes = [2, 192], strides = [1, 1]} : vector<16x192xf32> to vector<2x192xf32>
    %cst_16 = arith.constant dense<0.000000e+00> : vector<2x192xf32>
    %58 = tpu.matmul %56, %6, %cst_16 {dimension_numbers = #tpu.dot_dimension_numbers<[1], [0], [0], [1], [0, 0, 1, 1], [], []>} : vector<2x64xf32>, vector<64x192xf32>, vector<2x192xf32> -> vector<2x192xf32>
    %59 = vector.extract_strided_slice %57 {offsets = [0, 0], sizes = [2, 128], strides = [1, 1]} : vector<2x192xf32> to vector<2x128xf32>
    %60 = vector.extract_strided_slice %58 {offsets = [0, 0], sizes = [2, 128], strides = [1, 1]} : vector<2x192xf32> to vector<2x128xf32>
    %61 = arith.addf %59, %60 : vector<2x128xf32>
    %62 = arith.negf %61 : vector<2x128xf32>
    %63 = math.exp %62 : vector<2x128xf32>
    %cst_17 = arith.constant 1.000000e+00 : f32
    %64 = vector.broadcast %cst_17 : f32 to vector<2x128xf32>
    %65 = arith.addf %64, %63 : vector<2x128xf32>
    %66 = arith.divf %64, %65 : vector<2x128xf32>
    %67 = vector.extract_strided_slice %66 {offsets = [0, 0], sizes = [2, 64], strides = [1, 1]} : vector<2x128xf32> to vector<2x64xf32>
    %68 = vector.extract_strided_slice %66 {offsets = [0, 64], sizes = [2, 64], strides = [1, 1]} : vector<2x128xf32> to vector<2x64xf32>
    %69 = vector.extract_strided_slice %57 {offsets = [0, 128], sizes = [2, 64], strides = [1, 1]} : vector<2x192xf32> to vector<2x64xf32>
    %70 = vector.extract_strided_slice %58 {offsets = [0, 128], sizes = [2, 64], strides = [1, 1]} : vector<2x192xf32> to vector<2x64xf32>
    %71 = vector.broadcast %7 : vector<1x64xf32> to vector<2x64xf32>
    %72 = arith.addf %70, %71 : vector<2x64xf32>
    %73 = arith.mulf %67, %72 : vector<2x64xf32>
    %74 = arith.addf %69, %73 : vector<2x64xf32>
    %75 = math.tanh %74 : vector<2x64xf32>
    %cst_18 = arith.constant 1.000000e+00 : f32
    %76 = vector.broadcast %cst_18 : f32 to vector<2x64xf32>
    %77 = arith.subf %76, %68 : vector<2x64xf32>
    %78 = arith.mulf %77, %75 : vector<2x64xf32>
    %79 = arith.mulf %68, %56 : vector<2x64xf32>
    %80 = arith.addf %78, %79 : vector<2x64xf32>
    %81 = vector.extract_strided_slice %5 {offsets = [6, 0], sizes = [2, 192], strides = [1, 1]} : vector<16x192xf32> to vector<2x192xf32>
    %cst_19 = arith.constant dense<0.000000e+00> : vector<2x192xf32>
    %82 = tpu.matmul %80, %6, %cst_19 {dimension_numbers = #tpu.dot_dimension_numbers<[1], [0], [0], [1], [0, 0, 1, 1], [], []>} : vector<2x64xf32>, vector<64x192xf32>, vector<2x192xf32> -> vector<2x192xf32>
    %83 = vector.extract_strided_slice %81 {offsets = [0, 0], sizes = [2, 128], strides = [1, 1]} : vector<2x192xf32> to vector<2x128xf32>
    %84 = vector.extract_strided_slice %82 {offsets = [0, 0], sizes = [2, 128], strides = [1, 1]} : vector<2x192xf32> to vector<2x128xf32>
    %85 = arith.addf %83, %84 : vector<2x128xf32>
    %86 = arith.negf %85 : vector<2x128xf32>
    %87 = math.exp %86 : vector<2x128xf32>
    %cst_20 = arith.constant 1.000000e+00 : f32
    %88 = vector.broadcast %cst_20 : f32 to vector<2x128xf32>
    %89 = arith.addf %88, %87 : vector<2x128xf32>
    %90 = arith.divf %88, %89 : vector<2x128xf32>
    %91 = vector.extract_strided_slice %90 {offsets = [0, 0], sizes = [2, 64], strides = [1, 1]} : vector<2x128xf32> to vector<2x64xf32>
    %92 = vector.extract_strided_slice %90 {offsets = [0, 64], sizes = [2, 64], strides = [1, 1]} : vector<2x128xf32> to vector<2x64xf32>
    %93 = vector.extract_strided_slice %81 {offsets = [0, 128], sizes = [2, 64], strides = [1, 1]} : vector<2x192xf32> to vector<2x64xf32>
    %94 = vector.extract_strided_slice %82 {offsets = [0, 128], sizes = [2, 64], strides = [1, 1]} : vector<2x192xf32> to vector<2x64xf32>
    %95 = vector.broadcast %7 : vector<1x64xf32> to vector<2x64xf32>
    %96 = arith.addf %94, %95 : vector<2x64xf32>
    %97 = arith.mulf %91, %96 : vector<2x64xf32>
    %98 = arith.addf %93, %97 : vector<2x64xf32>
    %99 = math.tanh %98 : vector<2x64xf32>
    %cst_21 = arith.constant 1.000000e+00 : f32
    %100 = vector.broadcast %cst_21 : f32 to vector<2x64xf32>
    %101 = arith.subf %100, %92 : vector<2x64xf32>
    %102 = arith.mulf %101, %99 : vector<2x64xf32>
    %103 = arith.mulf %92, %80 : vector<2x64xf32>
    %104 = arith.addf %102, %103 : vector<2x64xf32>
    %105 = vector.extract_strided_slice %5 {offsets = [8, 0], sizes = [2, 192], strides = [1, 1]} : vector<16x192xf32> to vector<2x192xf32>
    %cst_22 = arith.constant dense<0.000000e+00> : vector<2x192xf32>
    %106 = tpu.matmul %104, %6, %cst_22 {dimension_numbers = #tpu.dot_dimension_numbers<[1], [0], [0], [1], [0, 0, 1, 1], [], []>} : vector<2x64xf32>, vector<64x192xf32>, vector<2x192xf32> -> vector<2x192xf32>
    %107 = vector.extract_strided_slice %105 {offsets = [0, 0], sizes = [2, 128], strides = [1, 1]} : vector<2x192xf32> to vector<2x128xf32>
    %108 = vector.extract_strided_slice %106 {offsets = [0, 0], sizes = [2, 128], strides = [1, 1]} : vector<2x192xf32> to vector<2x128xf32>
    %109 = arith.addf %107, %108 : vector<2x128xf32>
    %110 = arith.negf %109 : vector<2x128xf32>
    %111 = math.exp %110 : vector<2x128xf32>
    %cst_23 = arith.constant 1.000000e+00 : f32
    %112 = vector.broadcast %cst_23 : f32 to vector<2x128xf32>
    %113 = arith.addf %112, %111 : vector<2x128xf32>
    %114 = arith.divf %112, %113 : vector<2x128xf32>
    %115 = vector.extract_strided_slice %114 {offsets = [0, 0], sizes = [2, 64], strides = [1, 1]} : vector<2x128xf32> to vector<2x64xf32>
    %116 = vector.extract_strided_slice %114 {offsets = [0, 64], sizes = [2, 64], strides = [1, 1]} : vector<2x128xf32> to vector<2x64xf32>
    %117 = vector.extract_strided_slice %105 {offsets = [0, 128], sizes = [2, 64], strides = [1, 1]} : vector<2x192xf32> to vector<2x64xf32>
    %118 = vector.extract_strided_slice %106 {offsets = [0, 128], sizes = [2, 64], strides = [1, 1]} : vector<2x192xf32> to vector<2x64xf32>
    %119 = vector.broadcast %7 : vector<1x64xf32> to vector<2x64xf32>
    %120 = arith.addf %118, %119 : vector<2x64xf32>
    %121 = arith.mulf %115, %120 : vector<2x64xf32>
    %122 = arith.addf %117, %121 : vector<2x64xf32>
    %123 = math.tanh %122 : vector<2x64xf32>
    %cst_24 = arith.constant 1.000000e+00 : f32
    %124 = vector.broadcast %cst_24 : f32 to vector<2x64xf32>
    %125 = arith.subf %124, %116 : vector<2x64xf32>
    %126 = arith.mulf %125, %123 : vector<2x64xf32>
    %127 = arith.mulf %116, %104 : vector<2x64xf32>
    %128 = arith.addf %126, %127 : vector<2x64xf32>
    %129 = vector.extract_strided_slice %5 {offsets = [10, 0], sizes = [2, 192], strides = [1, 1]} : vector<16x192xf32> to vector<2x192xf32>
    %cst_25 = arith.constant dense<0.000000e+00> : vector<2x192xf32>
    %130 = tpu.matmul %128, %6, %cst_25 {dimension_numbers = #tpu.dot_dimension_numbers<[1], [0], [0], [1], [0, 0, 1, 1], [], []>} : vector<2x64xf32>, vector<64x192xf32>, vector<2x192xf32> -> vector<2x192xf32>
    %131 = vector.extract_strided_slice %129 {offsets = [0, 0], sizes = [2, 128], strides = [1, 1]} : vector<2x192xf32> to vector<2x128xf32>
    %132 = vector.extract_strided_slice %130 {offsets = [0, 0], sizes = [2, 128], strides = [1, 1]} : vector<2x192xf32> to vector<2x128xf32>
    %133 = arith.addf %131, %132 : vector<2x128xf32>
    %134 = arith.negf %133 : vector<2x128xf32>
    %135 = math.exp %134 : vector<2x128xf32>
    %cst_26 = arith.constant 1.000000e+00 : f32
    %136 = vector.broadcast %cst_26 : f32 to vector<2x128xf32>
    %137 = arith.addf %136, %135 : vector<2x128xf32>
    %138 = arith.divf %136, %137 : vector<2x128xf32>
    %139 = vector.extract_strided_slice %138 {offsets = [0, 0], sizes = [2, 64], strides = [1, 1]} : vector<2x128xf32> to vector<2x64xf32>
    %140 = vector.extract_strided_slice %138 {offsets = [0, 64], sizes = [2, 64], strides = [1, 1]} : vector<2x128xf32> to vector<2x64xf32>
    %141 = vector.extract_strided_slice %129 {offsets = [0, 128], sizes = [2, 64], strides = [1, 1]} : vector<2x192xf32> to vector<2x64xf32>
    %142 = vector.extract_strided_slice %130 {offsets = [0, 128], sizes = [2, 64], strides = [1, 1]} : vector<2x192xf32> to vector<2x64xf32>
    %143 = vector.broadcast %7 : vector<1x64xf32> to vector<2x64xf32>
    %144 = arith.addf %142, %143 : vector<2x64xf32>
    %145 = arith.mulf %139, %144 : vector<2x64xf32>
    %146 = arith.addf %141, %145 : vector<2x64xf32>
    %147 = math.tanh %146 : vector<2x64xf32>
    %cst_27 = arith.constant 1.000000e+00 : f32
    %148 = vector.broadcast %cst_27 : f32 to vector<2x64xf32>
    %149 = arith.subf %148, %140 : vector<2x64xf32>
    %150 = arith.mulf %149, %147 : vector<2x64xf32>
    %151 = arith.mulf %140, %128 : vector<2x64xf32>
    %152 = arith.addf %150, %151 : vector<2x64xf32>
    %153 = vector.extract_strided_slice %5 {offsets = [12, 0], sizes = [2, 192], strides = [1, 1]} : vector<16x192xf32> to vector<2x192xf32>
    %cst_28 = arith.constant dense<0.000000e+00> : vector<2x192xf32>
    %154 = tpu.matmul %152, %6, %cst_28 {dimension_numbers = #tpu.dot_dimension_numbers<[1], [0], [0], [1], [0, 0, 1, 1], [], []>} : vector<2x64xf32>, vector<64x192xf32>, vector<2x192xf32> -> vector<2x192xf32>
    %155 = vector.extract_strided_slice %153 {offsets = [0, 0], sizes = [2, 128], strides = [1, 1]} : vector<2x192xf32> to vector<2x128xf32>
    %156 = vector.extract_strided_slice %154 {offsets = [0, 0], sizes = [2, 128], strides = [1, 1]} : vector<2x192xf32> to vector<2x128xf32>
    %157 = arith.addf %155, %156 : vector<2x128xf32>
    %158 = arith.negf %157 : vector<2x128xf32>
    %159 = math.exp %158 : vector<2x128xf32>
    %cst_29 = arith.constant 1.000000e+00 : f32
    %160 = vector.broadcast %cst_29 : f32 to vector<2x128xf32>
    %161 = arith.addf %160, %159 : vector<2x128xf32>
    %162 = arith.divf %160, %161 : vector<2x128xf32>
    %163 = vector.extract_strided_slice %162 {offsets = [0, 0], sizes = [2, 64], strides = [1, 1]} : vector<2x128xf32> to vector<2x64xf32>
    %164 = vector.extract_strided_slice %162 {offsets = [0, 64], sizes = [2, 64], strides = [1, 1]} : vector<2x128xf32> to vector<2x64xf32>
    %165 = vector.extract_strided_slice %153 {offsets = [0, 128], sizes = [2, 64], strides = [1, 1]} : vector<2x192xf32> to vector<2x64xf32>
    %166 = vector.extract_strided_slice %154 {offsets = [0, 128], sizes = [2, 64], strides = [1, 1]} : vector<2x192xf32> to vector<2x64xf32>
    %167 = vector.broadcast %7 : vector<1x64xf32> to vector<2x64xf32>
    %168 = arith.addf %166, %167 : vector<2x64xf32>
    %169 = arith.mulf %163, %168 : vector<2x64xf32>
    %170 = arith.addf %165, %169 : vector<2x64xf32>
    %171 = math.tanh %170 : vector<2x64xf32>
    %cst_30 = arith.constant 1.000000e+00 : f32
    %172 = vector.broadcast %cst_30 : f32 to vector<2x64xf32>
    %173 = arith.subf %172, %164 : vector<2x64xf32>
    %174 = arith.mulf %173, %171 : vector<2x64xf32>
    %175 = arith.mulf %164, %152 : vector<2x64xf32>
    %176 = arith.addf %174, %175 : vector<2x64xf32>
    %177 = vector.extract_strided_slice %5 {offsets = [14, 0], sizes = [2, 192], strides = [1, 1]} : vector<16x192xf32> to vector<2x192xf32>
    %cst_31 = arith.constant dense<0.000000e+00> : vector<2x192xf32>
    %178 = tpu.matmul %176, %6, %cst_31 {dimension_numbers = #tpu.dot_dimension_numbers<[1], [0], [0], [1], [0, 0, 1, 1], [], []>} : vector<2x64xf32>, vector<64x192xf32>, vector<2x192xf32> -> vector<2x192xf32>
    %179 = vector.extract_strided_slice %177 {offsets = [0, 0], sizes = [2, 128], strides = [1, 1]} : vector<2x192xf32> to vector<2x128xf32>
    %180 = vector.extract_strided_slice %178 {offsets = [0, 0], sizes = [2, 128], strides = [1, 1]} : vector<2x192xf32> to vector<2x128xf32>
    %181 = arith.addf %179, %180 : vector<2x128xf32>
    %182 = arith.negf %181 : vector<2x128xf32>
    %183 = math.exp %182 : vector<2x128xf32>
    %cst_32 = arith.constant 1.000000e+00 : f32
    %184 = vector.broadcast %cst_32 : f32 to vector<2x128xf32>
    %185 = arith.addf %184, %183 : vector<2x128xf32>
    %186 = arith.divf %184, %185 : vector<2x128xf32>
    %187 = vector.extract_strided_slice %186 {offsets = [0, 0], sizes = [2, 64], strides = [1, 1]} : vector<2x128xf32> to vector<2x64xf32>
    %188 = vector.extract_strided_slice %186 {offsets = [0, 64], sizes = [2, 64], strides = [1, 1]} : vector<2x128xf32> to vector<2x64xf32>
    %189 = vector.extract_strided_slice %177 {offsets = [0, 128], sizes = [2, 64], strides = [1, 1]} : vector<2x192xf32> to vector<2x64xf32>
    %190 = vector.extract_strided_slice %178 {offsets = [0, 128], sizes = [2, 64], strides = [1, 1]} : vector<2x192xf32> to vector<2x64xf32>
    %191 = vector.broadcast %7 : vector<1x64xf32> to vector<2x64xf32>
    %192 = arith.addf %190, %191 : vector<2x64xf32>
    %193 = arith.mulf %187, %192 : vector<2x64xf32>
    %194 = arith.addf %189, %193 : vector<2x64xf32>
    %195 = math.tanh %194 : vector<2x64xf32>
    %cst_33 = arith.constant 1.000000e+00 : f32
    %196 = vector.broadcast %cst_33 : f32 to vector<2x64xf32>
    %197 = arith.subf %196, %188 : vector<2x64xf32>
    %198 = arith.mulf %197, %195 : vector<2x64xf32>
    %199 = arith.mulf %188, %176 : vector<2x64xf32>
    %200 = arith.addf %198, %199 : vector<2x64xf32>
    %201 = vector.extract_strided_slice %200 {offsets = [0, 0], sizes = [2, 32], strides = [1, 1]} : vector<2x64xf32> to vector<2x32xf32>
    %202 = vector.extract_strided_slice %200 {offsets = [0, 32], sizes = [2, 32], strides = [1, 1]} : vector<2x64xf32> to vector<2x32xf32>
    %203 = arith.addf %201, %202 : vector<2x32xf32>
    %204 = vector.extract_strided_slice %32 {offsets = [0, 0], sizes = [2, 32], strides = [1, 1]} : vector<2x64xf32> to vector<2x32xf32>
    %205 = vector.extract_strided_slice %200 {offsets = [0, 32], sizes = [2, 32], strides = [1, 1]} : vector<2x64xf32> to vector<2x32xf32>
    %206 = arith.addf %204, %205 : vector<2x32xf32>
    %c0_34 = arith.constant 0 : index
    %c0_35 = arith.constant 0 : index
    %207 = vector.load %arg17[%c0_34, %c0_35] : memref<16x32xf32, #tpu.memory_space<vmem>>, vector<2x32xf32>
    tpu.vector_store %arg17[%c0_34, %c0_35], %206 {strides = array<i32>} : memref<16x32xf32, #tpu.memory_space<vmem>>, vector<2x32xf32>,
    %208 = vector.extract_strided_slice %56 {offsets = [0, 0], sizes = [2, 32], strides = [1, 1]} : vector<2x64xf32> to vector<2x32xf32>
    %209 = vector.extract_strided_slice %176 {offsets = [0, 32], sizes = [2, 32], strides = [1, 1]} : vector<2x64xf32> to vector<2x32xf32>
    %210 = arith.addf %208, %209 : vector<2x32xf32>
    %c2 = arith.constant 2 : index
    %c0_36 = arith.constant 0 : index
    %211 = vector.load %arg17[%c2, %c0_36] : memref<16x32xf32, #tpu.memory_space<vmem>>, vector<2x32xf32>
    tpu.vector_store %arg17[%c2, %c0_36], %210 {strides = array<i32>} : memref<16x32xf32, #tpu.memory_space<vmem>>, vector<2x32xf32>,
    %212 = vector.extract_strided_slice %80 {offsets = [0, 0], sizes = [2, 32], strides = [1, 1]} : vector<2x64xf32> to vector<2x32xf32>
    %213 = vector.extract_strided_slice %152 {offsets = [0, 32], sizes = [2, 32], strides = [1, 1]} : vector<2x64xf32> to vector<2x32xf32>
    %214 = arith.addf %212, %213 : vector<2x32xf32>
    %c4 = arith.constant 4 : index
    %c0_37 = arith.constant 0 : index
    %215 = vector.load %arg17[%c4, %c0_37] : memref<16x32xf32, #tpu.memory_space<vmem>>, vector<2x32xf32>
    tpu.vector_store %arg17[%c4, %c0_37], %214 {strides = array<i32>} : memref<16x32xf32, #tpu.memory_space<vmem>>, vector<2x32xf32>,
    %216 = vector.extract_strided_slice %104 {offsets = [0, 0], sizes = [2, 32], strides = [1, 1]} : vector<2x64xf32> to vector<2x32xf32>
    %217 = vector.extract_strided_slice %128 {offsets = [0, 32], sizes = [2, 32], strides = [1, 1]} : vector<2x64xf32> to vector<2x32xf32>
    %218 = arith.addf %216, %217 : vector<2x32xf32>
    %c6 = arith.constant 6 : index
    %c0_38 = arith.constant 0 : index
    %219 = vector.load %arg17[%c6, %c0_38] : memref<16x32xf32, #tpu.memory_space<vmem>>, vector<2x32xf32>
    tpu.vector_store %arg17[%c6, %c0_38], %218 {strides = array<i32>} : memref<16x32xf32, #tpu.memory_space<vmem>>, vector<2x32xf32>,
    %220 = vector.extract_strided_slice %128 {offsets = [0, 0], sizes = [2, 32], strides = [1, 1]} : vector<2x64xf32> to vector<2x32xf32>
    %221 = vector.extract_strided_slice %104 {offsets = [0, 32], sizes = [2, 32], strides = [1, 1]} : vector<2x64xf32> to vector<2x32xf32>
    %222 = arith.addf %220, %221 : vector<2x32xf32>
    %c8 = arith.constant 8 : index
    %c0_39 = arith.constant 0 : index
    %223 = vector.load %arg17[%c8, %c0_39] : memref<16x32xf32, #tpu.memory_space<vmem>>, vector<2x32xf32>
    tpu.vector_store %arg17[%c8, %c0_39], %222 {strides = array<i32>} : memref<16x32xf32, #tpu.memory_space<vmem>>, vector<2x32xf32>,
    %224 = vector.extract_strided_slice %152 {offsets = [0, 0], sizes = [2, 32], strides = [1, 1]} : vector<2x64xf32> to vector<2x32xf32>
    %225 = vector.extract_strided_slice %80 {offsets = [0, 32], sizes = [2, 32], strides = [1, 1]} : vector<2x64xf32> to vector<2x32xf32>
    %226 = arith.addf %224, %225 : vector<2x32xf32>
    %c10 = arith.constant 10 : index
    %c0_40 = arith.constant 0 : index
    %227 = vector.load %arg17[%c10, %c0_40] : memref<16x32xf32, #tpu.memory_space<vmem>>, vector<2x32xf32>
    tpu.vector_store %arg17[%c10, %c0_40], %226 {strides = array<i32>} : memref<16x32xf32, #tpu.memory_space<vmem>>, vector<2x32xf32>,
    %228 = vector.extract_strided_slice %176 {offsets = [0, 0], sizes = [2, 32], strides = [1, 1]} : vector<2x64xf32> to vector<2x32xf32>
    %229 = vector.extract_strided_slice %56 {offsets = [0, 32], sizes = [2, 32], strides = [1, 1]} : vector<2x64xf32> to vector<2x32xf32>
    %230 = arith.addf %228, %229 : vector<2x32xf32>
    %c12 = arith.constant 12 : index
    %c0_41 = arith.constant 0 : index
    %231 = vector.load %arg17[%c12, %c0_41] : memref<16x32xf32, #tpu.memory_space<vmem>>, vector<2x32xf32>
    tpu.vector_store %arg17[%c12, %c0_41], %230 {strides = array<i32>} : memref<16x32xf32, #tpu.memory_space<vmem>>, vector<2x32xf32>,
    %232 = vector.extract_strided_slice %200 {offsets = [0, 0], sizes = [2, 32], strides = [1, 1]} : vector<2x64xf32> to vector<2x32xf32>
    %233 = vector.extract_strided_slice %32 {offsets = [0, 32], sizes = [2, 32], strides = [1, 1]} : vector<2x64xf32> to vector<2x32xf32>
    %234 = arith.addf %232, %233 : vector<2x32xf32>
    %c14 = arith.constant 14 : index
    %c0_42 = arith.constant 0 : index
    %235 = vector.load %arg17[%c14, %c0_42] : memref<16x32xf32, #tpu.memory_space<vmem>>, vector<2x32xf32>
    tpu.vector_store %arg17[%c14, %c0_42], %234 {strides = array<i32>} : memref<16x32xf32, #tpu.memory_space<vmem>>, vector<2x32xf32>,
    %c0_43 = arith.constant 0 : index
    %c0_44 = arith.constant 0 : index
    %236 = vector.load %arg17[%c0_43, %c0_44] : memref<16x32xf32, #tpu.memory_space<vmem>>, vector<16x32xf32>
    %c0_45 = arith.constant 0 : index
    %c0_46 = arith.constant 0 : index
    %237 = vector.load %arg2[%c0_45, %c0_46] : memref<16x16xf32, #tpu.memory_space<vmem>>, vector<16x2xf32>
    %c0_47 = arith.constant 0 : index
    %c0_48 = arith.constant 0 : index
    %238 = vector.load %arg8[%c0_47, %c0_48] : memref<32x32xf32, #tpu.memory_space<vmem>>, vector<32x32xf32>
    %cst_49 = arith.constant dense<0.000000e+00> : vector<2x32xf32>
    %239 = tpu.matmul %203, %238, %cst_49 {dimension_numbers = #tpu.dot_dimension_numbers<[1], [0], [0], [1], [0, 0, 1, 1], [], []>} : vector<2x32xf32>, vector<32x32xf32>, vector<2x32xf32> -> vector<2x32xf32>
    %c0_50 = arith.constant 0 : index
    %c0_51 = arith.constant 0 : index
    %240 = vector.load %arg9[%c0_50, %c0_51] : memref<1x32xf32, #tpu.memory_space<vmem>>, vector<1x32xf32>
    %241 = vector.broadcast %240 : vector<1x32xf32> to vector<2x32xf32>
    %242 = arith.addf %239, %241 : vector<2x32xf32>
    %c0_52 = arith.constant 0 : index
    %c0_53 = arith.constant 0 : index
    %243 = vector.load %arg7[%c0_52, %c0_53] : memref<32x32xf32, #tpu.memory_space<vmem>>, vector<32x32xf32>
    %cst_54 = arith.constant dense<0.000000e+00> : vector<16x32xf32>
    %244 = tpu.matmul %236, %243, %cst_54 {dimension_numbers = #tpu.dot_dimension_numbers<[1], [0], [0], [1], [0, 0, 1, 1], [], []>} : vector<16x32xf32>, vector<32x32xf32>, vector<16x32xf32> -> vector<16x32xf32>
    %cst_55 = arith.constant dense<0.000000e+00> : vector<16x32xf32>
    %245 = tpu.matmul %237, %242, %cst_55 {dimension_numbers = #tpu.dot_dimension_numbers<[1], [0], [0], [1], [0, 0, 1, 1], [], []>} : vector<16x2xf32>, vector<2x32xf32>, vector<16x32xf32> -> vector<16x32xf32>
    %246 = arith.addf %244, %245 : vector<16x32xf32>
    %247 = math.tanh %246 : vector<16x32xf32>
    %c0_56 = arith.constant 0 : index
    %c0_57 = arith.constant 0 : index
    %248 = vector.load %arg10[%c0_56, %c0_57] : memref<32x1xf32, #tpu.memory_space<vmem>>, vector<32x1xf32>
    %cst_58 = arith.constant dense<0.000000e+00> : vector<16x1xf32>
    %249 = tpu.matmul %247, %248, %cst_58 {dimension_numbers = #tpu.dot_dimension_numbers<[1], [0], [0], [1], [0, 0, 1, 1], [], []>} : vector<16x32xf32>, vector<32x1xf32>, vector<16x1xf32> -> vector<16x1xf32>
    %c0_59 = arith.constant 0 : index
    %c0_60 = arith.constant 0 : index
    %250 = vector.load %arg1[%c0_59, %c0_60] : memref<16x1xf32, #tpu.memory_space<vmem>>, vector<16x1xf32>
    %cst_61 = arith.constant 0.000000e+00 : f32
    %251 = vector.broadcast %cst_61 : f32 to vector<16x1xf32>
    %252 = arith.cmpf oeq, %250, %251 : vector<16x1xf32>
    %cst_62 = arith.constant -1.000000e+09 : f32
    %253 = vector.broadcast %cst_62 : f32 to vector<16x1xf32>
    %254 = arith.select %252, %253, %249 : vector<16x1xi1>, vector<16x1xf32>
    %cst_63 = arith.constant dense<0xFF800000> : vector<1xf32>
    %255 = vector.multi_reduction <maximumf>, %254, %cst_63 [0] : vector<16x1xf32> to vector<1xf32>
    %256 = vector.shape_cast %255 : vector<1xf32> to vector<1x1xf32>
    %257 = vector.broadcast %256 : vector<1x1xf32> to vector<16x1xf32>
    %258 = arith.subf %254, %257 : vector<16x1xf32>
    %259 = math.exp %258 : vector<16x1xf32>
    %c0_64 = arith.constant 0 : index
    %c0_65 = arith.constant 0 : index
    %260 = vector.load %arg2[%c0_64, %c0_65] : memref<16x16xf32, #tpu.memory_space<vmem>>, vector<16x16xf32>
    %cst_66 = arith.constant dense<0.000000e+00> : vector<16x1xf32>
    %261 = tpu.matmul %260, %259, %cst_66 {dimension_numbers = #tpu.dot_dimension_numbers<[1], [0], [0], [1], [0, 0, 1, 1], [], []>} : vector<16x16xf32>, vector<16x1xf32>, vector<16x1xf32> -> vector<16x1xf32>
    %262 = arith.divf %259, %261 : vector<16x1xf32>
    %263 = vector.broadcast %262 : vector<16x1xf32> to vector<16x32xf32>
    %264 = arith.mulf %236, %263 : vector<16x32xf32>
    %c0_67 = arith.constant 0 : index
    %c0_68 = arith.constant 0 : index
    %265 = vector.load %arg11[%c0_67, %c0_68] : memref<32x96xf32, #tpu.memory_space<vmem>>, vector<32x96xf32>
    %cst_69 = arith.constant dense<0.000000e+00> : vector<16x96xf32>
    %266 = tpu.matmul %264, %265, %cst_69 {dimension_numbers = #tpu.dot_dimension_numbers<[1], [0], [0], [1], [0, 0, 1, 1], [], []>} : vector<16x32xf32>, vector<32x96xf32>, vector<16x96xf32> -> vector<16x96xf32>
    %c0_70 = arith.constant 0 : index
    %c0_71 = arith.constant 0 : index
    %267 = vector.load %arg12[%c0_70, %c0_71] : memref<1x96xf32, #tpu.memory_space<vmem>>, vector<1x96xf32>
    %268 = vector.broadcast %267 : vector<1x96xf32> to vector<16x96xf32>
    %269 = arith.addf %266, %268 : vector<16x96xf32>
    %c0_72 = arith.constant 0 : index
    %c0_73 = arith.constant 0 : index
    %270 = vector.load %arg13[%c0_72, %c0_73] : memref<32x96xf32, #tpu.memory_space<vmem>>, vector<32x96xf32>
    %c0_74 = arith.constant 0 : index
    %c0_75 = arith.constant 0 : index
    %271 = vector.load %arg14[%c0_74, %c0_75] : memref<1x32xf32, #tpu.memory_space<vmem>>, vector<1x32xf32>
    %272 = vector.extract_strided_slice %269 {offsets = [0, 0], sizes = [2, 96], strides = [1, 1]} : vector<16x96xf32> to vector<2x96xf32>
    %cst_76 = arith.constant dense<0.000000e+00> : vector<2x96xf32>
    %273 = tpu.matmul %203, %270, %cst_76 {dimension_numbers = #tpu.dot_dimension_numbers<[1], [0], [0], [1], [0, 0, 1, 1], [], []>} : vector<2x32xf32>, vector<32x96xf32>, vector<2x96xf32> -> vector<2x96xf32>
    %274 = vector.extract_strided_slice %272 {offsets = [0, 0], sizes = [2, 64], strides = [1, 1]} : vector<2x96xf32> to vector<2x64xf32>
    %275 = vector.extract_strided_slice %273 {offsets = [0, 0], sizes = [2, 64], strides = [1, 1]} : vector<2x96xf32> to vector<2x64xf32>
    %276 = arith.addf %274, %275 : vector<2x64xf32>
    %277 = arith.negf %276 : vector<2x64xf32>
    %278 = math.exp %277 : vector<2x64xf32>
    %cst_77 = arith.constant 1.000000e+00 : f32
    %279 = vector.broadcast %cst_77 : f32 to vector<2x64xf32>
    %280 = arith.addf %279, %278 : vector<2x64xf32>
    %281 = arith.divf %279, %280 : vector<2x64xf32>
    %282 = vector.extract_strided_slice %281 {offsets = [0, 0], sizes = [2, 32], strides = [1, 1]} : vector<2x64xf32> to vector<2x32xf32>
    %283 = vector.extract_strided_slice %281 {offsets = [0, 32], sizes = [2, 32], strides = [1, 1]} : vector<2x64xf32> to vector<2x32xf32>
    %284 = vector.extract_strided_slice %272 {offsets = [0, 64], sizes = [2, 32], strides = [1, 1]} : vector<2x96xf32> to vector<2x32xf32>
    %285 = vector.extract_strided_slice %273 {offsets = [0, 64], sizes = [2, 32], strides = [1, 1]} : vector<2x96xf32> to vector<2x32xf32>
    %286 = vector.broadcast %271 : vector<1x32xf32> to vector<2x32xf32>
    %287 = arith.addf %285, %286 : vector<2x32xf32>
    %288 = arith.mulf %282, %287 : vector<2x32xf32>
    %289 = arith.addf %284, %288 : vector<2x32xf32>
    %290 = math.tanh %289 : vector<2x32xf32>
    %cst_78 = arith.constant 1.000000e+00 : f32
    %291 = vector.broadcast %cst_78 : f32 to vector<2x32xf32>
    %292 = arith.subf %291, %283 : vector<2x32xf32>
    %293 = arith.mulf %292, %290 : vector<2x32xf32>
    %294 = arith.mulf %283, %203 : vector<2x32xf32>
    %295 = arith.addf %293, %294 : vector<2x32xf32>
    %c0_79 = arith.constant 0 : index
    %c0_80 = arith.constant 0 : index
    %296 = vector.load %arg15[%c0_79, %c0_80] : memref<2x32xf32, #tpu.memory_space<vmem>>, vector<2x32xf32>
    tpu.vector_store %arg15[%c0_79, %c0_80], %295 {strides = array<i32>} : memref<2x32xf32, #tpu.memory_space<vmem>>, vector<2x32xf32>,
    %297 = vector.extract_strided_slice %269 {offsets = [2, 0], sizes = [2, 96], strides = [1, 1]} : vector<16x96xf32> to vector<2x96xf32>
    %cst_81 = arith.constant dense<0.000000e+00> : vector<2x96xf32>
    %298 = tpu.matmul %295, %270, %cst_81 {dimension_numbers = #tpu.dot_dimension_numbers<[1], [0], [0], [1], [0, 0, 1, 1], [], []>} : vector<2x32xf32>, vector<32x96xf32>, vector<2x96xf32> -> vector<2x96xf32>
    %299 = vector.extract_strided_slice %297 {offsets = [0, 0], sizes = [2, 64], strides = [1, 1]} : vector<2x96xf32> to vector<2x64xf32>
    %300 = vector.extract_strided_slice %298 {offsets = [0, 0], sizes = [2, 64], strides = [1, 1]} : vector<2x96xf32> to vector<2x64xf32>
    %301 = arith.addf %299, %300 : vector<2x64xf32>
    %302 = arith.negf %301 : vector<2x64xf32>
    %303 = math.exp %302 : vector<2x64xf32>
    %cst_82 = arith.constant 1.000000e+00 : f32
    %304 = vector.broadcast %cst_82 : f32 to vector<2x64xf32>
    %305 = arith.addf %304, %303 : vector<2x64xf32>
    %306 = arith.divf %304, %305 : vector<2x64xf32>
    %307 = vector.extract_strided_slice %306 {offsets = [0, 0], sizes = [2, 32], strides = [1, 1]} : vector<2x64xf32> to vector<2x32xf32>
    %308 = vector.extract_strided_slice %306 {offsets = [0, 32], sizes = [2, 32], strides = [1, 1]} : vector<2x64xf32> to vector<2x32xf32>
    %309 = vector.extract_strided_slice %297 {offsets = [0, 64], sizes = [2, 32], strides = [1, 1]} : vector<2x96xf32> to vector<2x32xf32>
    %310 = vector.extract_strided_slice %298 {offsets = [0, 64], sizes = [2, 32], strides = [1, 1]} : vector<2x96xf32> to vector<2x32xf32>
    %311 = vector.broadcast %271 : vector<1x32xf32> to vector<2x32xf32>
    %312 = arith.addf %310, %311 : vector<2x32xf32>
    %313 = arith.mulf %307, %312 : vector<2x32xf32>
    %314 = arith.addf %309, %313 : vector<2x32xf32>
    %315 = math.tanh %314 : vector<2x32xf32>
    %cst_83 = arith.constant 1.000000e+00 : f32
    %316 = vector.broadcast %cst_83 : f32 to vector<2x32xf32>
    %317 = arith.subf %316, %308 : vector<2x32xf32>
    %318 = arith.mulf %317, %315 : vector<2x32xf32>
    %319 = arith.mulf %308, %295 : vector<2x32xf32>
    %320 = arith.addf %318, %319 : vector<2x32xf32>
    %321 = vector.extract_strided_slice %269 {offsets = [4, 0], sizes = [2, 96], strides = [1, 1]} : vector<16x96xf32> to vector<2x96xf32>
    %cst_84 = arith.constant dense<0.000000e+00> : vector<2x96xf32>
    %322 = tpu.matmul %320, %270, %cst_84 {dimension_numbers = #tpu.dot_dimension_numbers<[1], [0], [0], [1], [0, 0, 1, 1], [], []>} : vector<2x32xf32>, vector<32x96xf32>, vector<2x96xf32> -> vector<2x96xf32>
    %323 = vector.extract_strided_slice %321 {offsets = [0, 0], sizes = [2, 64], strides = [1, 1]} : vector<2x96xf32> to vector<2x64xf32>
    %324 = vector.extract_strided_slice %322 {offsets = [0, 0], sizes = [2, 64], strides = [1, 1]} : vector<2x96xf32> to vector<2x64xf32>
    %325 = arith.addf %323, %324 : vector<2x64xf32>
    %326 = arith.negf %325 : vector<2x64xf32>
    %327 = math.exp %326 : vector<2x64xf32>
    %cst_85 = arith.constant 1.000000e+00 : f32
    %328 = vector.broadcast %cst_85 : f32 to vector<2x64xf32>
    %329 = arith.addf %328, %327 : vector<2x64xf32>
    %330 = arith.divf %328, %329 : vector<2x64xf32>
    %331 = vector.extract_strided_slice %330 {offsets = [0, 0], sizes = [2, 32], strides = [1, 1]} : vector<2x64xf32> to vector<2x32xf32>
    %332 = vector.extract_strided_slice %330 {offsets = [0, 32], sizes = [2, 32], strides = [1, 1]} : vector<2x64xf32> to vector<2x32xf32>
    %333 = vector.extract_strided_slice %321 {offsets = [0, 64], sizes = [2, 32], strides = [1, 1]} : vector<2x96xf32> to vector<2x32xf32>
    %334 = vector.extract_strided_slice %322 {offsets = [0, 64], sizes = [2, 32], strides = [1, 1]} : vector<2x96xf32> to vector<2x32xf32>
    %335 = vector.broadcast %271 : vector<1x32xf32> to vector<2x32xf32>
    %336 = arith.addf %334, %335 : vector<2x32xf32>
    %337 = arith.mulf %331, %336 : vector<2x32xf32>
    %338 = arith.addf %333, %337 : vector<2x32xf32>
    %339 = math.tanh %338 : vector<2x32xf32>
    %cst_86 = arith.constant 1.000000e+00 : f32
    %340 = vector.broadcast %cst_86 : f32 to vector<2x32xf32>
    %341 = arith.subf %340, %332 : vector<2x32xf32>
    %342 = arith.mulf %341, %339 : vector<2x32xf32>
    %343 = arith.mulf %332, %320 : vector<2x32xf32>
    %344 = arith.addf %342, %343 : vector<2x32xf32>
    %345 = vector.extract_strided_slice %269 {offsets = [6, 0], sizes = [2, 96], strides = [1, 1]} : vector<16x96xf32> to vector<2x96xf32>
    %cst_87 = arith.constant dense<0.000000e+00> : vector<2x96xf32>
    %346 = tpu.matmul %344, %270, %cst_87 {dimension_numbers = #tpu.dot_dimension_numbers<[1], [0], [0], [1], [0, 0, 1, 1], [], []>} : vector<2x32xf32>, vector<32x96xf32>, vector<2x96xf32> -> vector<2x96xf32>
    %347 = vector.extract_strided_slice %345 {offsets = [0, 0], sizes = [2, 64], strides = [1, 1]} : vector<2x96xf32> to vector<2x64xf32>
    %348 = vector.extract_strided_slice %346 {offsets = [0, 0], sizes = [2, 64], strides = [1, 1]} : vector<2x96xf32> to vector<2x64xf32>
    %349 = arith.addf %347, %348 : vector<2x64xf32>
    %350 = arith.negf %349 : vector<2x64xf32>
    %351 = math.exp %350 : vector<2x64xf32>
    %cst_88 = arith.constant 1.000000e+00 : f32
    %352 = vector.broadcast %cst_88 : f32 to vector<2x64xf32>
    %353 = arith.addf %352, %351 : vector<2x64xf32>
    %354 = arith.divf %352, %353 : vector<2x64xf32>
    %355 = vector.extract_strided_slice %354 {offsets = [0, 0], sizes = [2, 32], strides = [1, 1]} : vector<2x64xf32> to vector<2x32xf32>
    %356 = vector.extract_strided_slice %354 {offsets = [0, 32], sizes = [2, 32], strides = [1, 1]} : vector<2x64xf32> to vector<2x32xf32>
    %357 = vector.extract_strided_slice %345 {offsets = [0, 64], sizes = [2, 32], strides = [1, 1]} : vector<2x96xf32> to vector<2x32xf32>
    %358 = vector.extract_strided_slice %346 {offsets = [0, 64], sizes = [2, 32], strides = [1, 1]} : vector<2x96xf32> to vector<2x32xf32>
    %359 = vector.broadcast %271 : vector<1x32xf32> to vector<2x32xf32>
    %360 = arith.addf %358, %359 : vector<2x32xf32>
    %361 = arith.mulf %355, %360 : vector<2x32xf32>
    %362 = arith.addf %357, %361 : vector<2x32xf32>
    %363 = math.tanh %362 : vector<2x32xf32>
    %cst_89 = arith.constant 1.000000e+00 : f32
    %364 = vector.broadcast %cst_89 : f32 to vector<2x32xf32>
    %365 = arith.subf %364, %356 : vector<2x32xf32>
    %366 = arith.mulf %365, %363 : vector<2x32xf32>
    %367 = arith.mulf %356, %344 : vector<2x32xf32>
    %368 = arith.addf %366, %367 : vector<2x32xf32>
    %369 = vector.extract_strided_slice %269 {offsets = [8, 0], sizes = [2, 96], strides = [1, 1]} : vector<16x96xf32> to vector<2x96xf32>
    %cst_90 = arith.constant dense<0.000000e+00> : vector<2x96xf32>
    %370 = tpu.matmul %368, %270, %cst_90 {dimension_numbers = #tpu.dot_dimension_numbers<[1], [0], [0], [1], [0, 0, 1, 1], [], []>} : vector<2x32xf32>, vector<32x96xf32>, vector<2x96xf32> -> vector<2x96xf32>
    %371 = vector.extract_strided_slice %369 {offsets = [0, 0], sizes = [2, 64], strides = [1, 1]} : vector<2x96xf32> to vector<2x64xf32>
    %372 = vector.extract_strided_slice %370 {offsets = [0, 0], sizes = [2, 64], strides = [1, 1]} : vector<2x96xf32> to vector<2x64xf32>
    %373 = arith.addf %371, %372 : vector<2x64xf32>
    %374 = arith.negf %373 : vector<2x64xf32>
    %375 = math.exp %374 : vector<2x64xf32>
    %cst_91 = arith.constant 1.000000e+00 : f32
    %376 = vector.broadcast %cst_91 : f32 to vector<2x64xf32>
    %377 = arith.addf %376, %375 : vector<2x64xf32>
    %378 = arith.divf %376, %377 : vector<2x64xf32>
    %379 = vector.extract_strided_slice %378 {offsets = [0, 0], sizes = [2, 32], strides = [1, 1]} : vector<2x64xf32> to vector<2x32xf32>
    %380 = vector.extract_strided_slice %378 {offsets = [0, 32], sizes = [2, 32], strides = [1, 1]} : vector<2x64xf32> to vector<2x32xf32>
    %381 = vector.extract_strided_slice %369 {offsets = [0, 64], sizes = [2, 32], strides = [1, 1]} : vector<2x96xf32> to vector<2x32xf32>
    %382 = vector.extract_strided_slice %370 {offsets = [0, 64], sizes = [2, 32], strides = [1, 1]} : vector<2x96xf32> to vector<2x32xf32>
    %383 = vector.broadcast %271 : vector<1x32xf32> to vector<2x32xf32>
    %384 = arith.addf %382, %383 : vector<2x32xf32>
    %385 = arith.mulf %379, %384 : vector<2x32xf32>
    %386 = arith.addf %381, %385 : vector<2x32xf32>
    %387 = math.tanh %386 : vector<2x32xf32>
    %cst_92 = arith.constant 1.000000e+00 : f32
    %388 = vector.broadcast %cst_92 : f32 to vector<2x32xf32>
    %389 = arith.subf %388, %380 : vector<2x32xf32>
    %390 = arith.mulf %389, %387 : vector<2x32xf32>
    %391 = arith.mulf %380, %368 : vector<2x32xf32>
    %392 = arith.addf %390, %391 : vector<2x32xf32>
    %393 = vector.extract_strided_slice %269 {offsets = [10, 0], sizes = [2, 96], strides = [1, 1]} : vector<16x96xf32> to vector<2x96xf32>
    %cst_93 = arith.constant dense<0.000000e+00> : vector<2x96xf32>
    %394 = tpu.matmul %392, %270, %cst_93 {dimension_numbers = #tpu.dot_dimension_numbers<[1], [0], [0], [1], [0, 0, 1, 1], [], []>} : vector<2x32xf32>, vector<32x96xf32>, vector<2x96xf32> -> vector<2x96xf32>
    %395 = vector.extract_strided_slice %393 {offsets = [0, 0], sizes = [2, 64], strides = [1, 1]} : vector<2x96xf32> to vector<2x64xf32>
    %396 = vector.extract_strided_slice %394 {offsets = [0, 0], sizes = [2, 64], strides = [1, 1]} : vector<2x96xf32> to vector<2x64xf32>
    %397 = arith.addf %395, %396 : vector<2x64xf32>
    %398 = arith.negf %397 : vector<2x64xf32>
    %399 = math.exp %398 : vector<2x64xf32>
    %cst_94 = arith.constant 1.000000e+00 : f32
    %400 = vector.broadcast %cst_94 : f32 to vector<2x64xf32>
    %401 = arith.addf %400, %399 : vector<2x64xf32>
    %402 = arith.divf %400, %401 : vector<2x64xf32>
    %403 = vector.extract_strided_slice %402 {offsets = [0, 0], sizes = [2, 32], strides = [1, 1]} : vector<2x64xf32> to vector<2x32xf32>
    %404 = vector.extract_strided_slice %402 {offsets = [0, 32], sizes = [2, 32], strides = [1, 1]} : vector<2x64xf32> to vector<2x32xf32>
    %405 = vector.extract_strided_slice %393 {offsets = [0, 64], sizes = [2, 32], strides = [1, 1]} : vector<2x96xf32> to vector<2x32xf32>
    %406 = vector.extract_strided_slice %394 {offsets = [0, 64], sizes = [2, 32], strides = [1, 1]} : vector<2x96xf32> to vector<2x32xf32>
    %407 = vector.broadcast %271 : vector<1x32xf32> to vector<2x32xf32>
    %408 = arith.addf %406, %407 : vector<2x32xf32>
    %409 = arith.mulf %403, %408 : vector<2x32xf32>
    %410 = arith.addf %405, %409 : vector<2x32xf32>
    %411 = math.tanh %410 : vector<2x32xf32>
    %cst_95 = arith.constant 1.000000e+00 : f32
    %412 = vector.broadcast %cst_95 : f32 to vector<2x32xf32>
    %413 = arith.subf %412, %404 : vector<2x32xf32>
    %414 = arith.mulf %413, %411 : vector<2x32xf32>
    %415 = arith.mulf %404, %392 : vector<2x32xf32>
    %416 = arith.addf %414, %415 : vector<2x32xf32>
    %417 = vector.extract_strided_slice %269 {offsets = [12, 0], sizes = [2, 96], strides = [1, 1]} : vector<16x96xf32> to vector<2x96xf32>
    %cst_96 = arith.constant dense<0.000000e+00> : vector<2x96xf32>
    %418 = tpu.matmul %416, %270, %cst_96 {dimension_numbers = #tpu.dot_dimension_numbers<[1], [0], [0], [1], [0, 0, 1, 1], [], []>} : vector<2x32xf32>, vector<32x96xf32>, vector<2x96xf32> -> vector<2x96xf32>
    %419 = vector.extract_strided_slice %417 {offsets = [0, 0], sizes = [2, 64], strides = [1, 1]} : vector<2x96xf32> to vector<2x64xf32>
    %420 = vector.extract_strided_slice %418 {offsets = [0, 0], sizes = [2, 64], strides = [1, 1]} : vector<2x96xf32> to vector<2x64xf32>
    %421 = arith.addf %419, %420 : vector<2x64xf32>
    %422 = arith.negf %421 : vector<2x64xf32>
    %423 = math.exp %422 : vector<2x64xf32>
    %cst_97 = arith.constant 1.000000e+00 : f32
    %424 = vector.broadcast %cst_97 : f32 to vector<2x64xf32>
    %425 = arith.addf %424, %423 : vector<2x64xf32>
    %426 = arith.divf %424, %425 : vector<2x64xf32>
    %427 = vector.extract_strided_slice %426 {offsets = [0, 0], sizes = [2, 32], strides = [1, 1]} : vector<2x64xf32> to vector<2x32xf32>
    %428 = vector.extract_strided_slice %426 {offsets = [0, 32], sizes = [2, 32], strides = [1, 1]} : vector<2x64xf32> to vector<2x32xf32>
    %429 = vector.extract_strided_slice %417 {offsets = [0, 64], sizes = [2, 32], strides = [1, 1]} : vector<2x96xf32> to vector<2x32xf32>
    %430 = vector.extract_strided_slice %418 {offsets = [0, 64], sizes = [2, 32], strides = [1, 1]} : vector<2x96xf32> to vector<2x32xf32>
    %431 = vector.broadcast %271 : vector<1x32xf32> to vector<2x32xf32>
    %432 = arith.addf %430, %431 : vector<2x32xf32>
    %433 = arith.mulf %427, %432 : vector<2x32xf32>
    %434 = arith.addf %429, %433 : vector<2x32xf32>
    %435 = math.tanh %434 : vector<2x32xf32>
    %cst_98 = arith.constant 1.000000e+00 : f32
    %436 = vector.broadcast %cst_98 : f32 to vector<2x32xf32>
    %437 = arith.subf %436, %428 : vector<2x32xf32>
    %438 = arith.mulf %437, %435 : vector<2x32xf32>
    %439 = arith.mulf %428, %416 : vector<2x32xf32>
    %440 = arith.addf %438, %439 : vector<2x32xf32>
    %441 = vector.extract_strided_slice %269 {offsets = [14, 0], sizes = [2, 96], strides = [1, 1]} : vector<16x96xf32> to vector<2x96xf32>
    %cst_99 = arith.constant dense<0.000000e+00> : vector<2x96xf32>
    %442 = tpu.matmul %440, %270, %cst_99 {dimension_numbers = #tpu.dot_dimension_numbers<[1], [0], [0], [1], [0, 0, 1, 1], [], []>} : vector<2x32xf32>, vector<32x96xf32>, vector<2x96xf32> -> vector<2x96xf32>
    %443 = vector.extract_strided_slice %441 {offsets = [0, 0], sizes = [2, 64], strides = [1, 1]} : vector<2x96xf32> to vector<2x64xf32>
    %444 = vector.extract_strided_slice %442 {offsets = [0, 0], sizes = [2, 64], strides = [1, 1]} : vector<2x96xf32> to vector<2x64xf32>
    %445 = arith.addf %443, %444 : vector<2x64xf32>
    %446 = arith.negf %445 : vector<2x64xf32>
    %447 = math.exp %446 : vector<2x64xf32>
    %cst_100 = arith.constant 1.000000e+00 : f32
    %448 = vector.broadcast %cst_100 : f32 to vector<2x64xf32>
    %449 = arith.addf %448, %447 : vector<2x64xf32>
    %450 = arith.divf %448, %449 : vector<2x64xf32>
    %451 = vector.extract_strided_slice %450 {offsets = [0, 0], sizes = [2, 32], strides = [1, 1]} : vector<2x64xf32> to vector<2x32xf32>
    %452 = vector.extract_strided_slice %450 {offsets = [0, 32], sizes = [2, 32], strides = [1, 1]} : vector<2x64xf32> to vector<2x32xf32>
    %453 = vector.extract_strided_slice %441 {offsets = [0, 64], sizes = [2, 32], strides = [1, 1]} : vector<2x96xf32> to vector<2x32xf32>
    %454 = vector.extract_strided_slice %442 {offsets = [0, 64], sizes = [2, 32], strides = [1, 1]} : vector<2x96xf32> to vector<2x32xf32>
    %455 = vector.broadcast %271 : vector<1x32xf32> to vector<2x32xf32>
    %456 = arith.addf %454, %455 : vector<2x32xf32>
    %457 = arith.mulf %451, %456 : vector<2x32xf32>
    %458 = arith.addf %453, %457 : vector<2x32xf32>
    %459 = math.tanh %458 : vector<2x32xf32>
    %cst_101 = arith.constant 1.000000e+00 : f32
    %460 = vector.broadcast %cst_101 : f32 to vector<2x32xf32>
    %461 = arith.subf %460, %452 : vector<2x32xf32>
    %462 = arith.mulf %461, %459 : vector<2x32xf32>
    %463 = arith.mulf %452, %440 : vector<2x32xf32>
    %464 = arith.addf %462, %463 : vector<2x32xf32>
    %c0_102 = arith.constant 0 : index
    %c0_103 = arith.constant 0 : index
    %465 = vector.load %arg16[%c0_102, %c0_103] : memref<2x32xf32, #tpu.memory_space<vmem>>, vector<2x32xf32>
    tpu.vector_store %arg16[%c0_102, %c0_103], %464 {strides = array<i32>} : memref<2x32xf32, #tpu.memory_space<vmem>>, vector<2x32xf32>,
    return
  }
}

</mosaic_0001>

<llo_original>
// kernel: encoder_decoder_forward.1
$region0: #{encoder_decoder_forward.1}
  #allocation0 [shape = 'u32[]', space=smem, size = 0x4, offset = 0x4, fixed_abs, tag = 'smem constant byte address 0x4 - core index']
  #allocation1 [shape = 'u32[144,128]{1,0:T(1,128)}', space=vmem, size = 0x12000, scoped, tag = 'internal scratch']
  #allocation2 [shape = 'f32[16,32]{1,0:T(8,128)}', space=vmem, size = 0x2000, scoped, tag = 'scratch operand']
  %s0 = inlined_call_operand.vmem [shape: f32[16,64], index: 0, kind: input, shape index: {}]
  %s1 = inlined_call_operand.vmem [shape: f32[16,1], index: 1, kind: input, shape index: {}]
  %s2 = inlined_call_operand.vmem [shape: f32[16,16], index: 2, kind: input, shape index: {}]
  %s3 = inlined_call_operand.vmem [shape: f32[64,192], index: 3, kind: input, shape index: {}]
  %s4 = inlined_call_operand.vmem [shape: f32[1,192], index: 4, kind: input, shape index: {}]
  %s5 = inlined_call_operand.vmem [shape: f32[64,192], index: 5, kind: input, shape index: {}]
  %s6 = inlined_call_operand.vmem [shape: f32[1,64], index: 6, kind: input, shape index: {}]
  %s7 = inlined_call_operand.vmem [shape: f32[32,32], index: 7, kind: input, shape index: {}]
  %s8 = inlined_call_operand.vmem [shape: f32[32,32], index: 8, kind: input, shape index: {}]
  %s9 = inlined_call_operand.vmem [shape: f32[1,32], index: 9, kind: input, shape index: {}]
  %s10 = inlined_call_operand.vmem [shape: f32[32,1], index: 10, kind: input, shape index: {}]
  %s11 = inlined_call_operand.vmem [shape: f32[32,96], index: 11, kind: input, shape index: {}]
  %s12 = inlined_call_operand.vmem [shape: f32[1,96], index: 12, kind: input, shape index: {}]
  %s13 = inlined_call_operand.vmem [shape: f32[32,96], index: 13, kind: input, shape index: {}]
  %s14 = inlined_call_operand.vmem [shape: f32[1,32], index: 14, kind: input, shape index: {}]
  %s15 = inlined_call_operand.hbm [shape: f32[2,32], index: 15, kind: output, shape index: {0}]
  %s16 = inlined_call_operand.hbm [shape: f32[2,32], index: 16, kind: output, shape index: {1}]
  %17 = xla_tuple %s15, %s16
  %s18 = sld [smem:[#allocation0]]
  $region78: #{encoder_decoder_forward.1} parent=0
    _
  %s20 = ssub.s32 1, %s18
  %s21 = scalar_select 0, %s20, %s18
  $region1: #{encoder_decoder_forward.1} parent=0
    #allocation3 [shape = 'u8[1024]{0}', space=vmem, size = 0x400, scoped, tag = 'output window, operand 0, single buffered']
    #allocation4 [shape = 's32[1]{0}', space=sflag, size = 0x4, scoped, tag = 'scoped memory for encoder_decoder_forward.1']
    #allocation5 [shape = 'u8[1024]{0}', space=vmem, size = 0x400, scoped, tag = 'output window, operand 1, single buffered']
    #allocation6 [shape = 's32[1]{0}', space=sflag, size = 0x4, scoped, tag = 'scoped memory for encoder_decoder_forward.1']
    %22 = vsyncpa [#allocation4], 0
    %23 = vsyncpa [#allocation6], 0
    // Predicated region
    $region2: #{encoder_decoder_forward.1} parent=1 // pred_check
      _
    $region3: #{encoder_decoder_forward.1} parent=1 // pred_check_branch
      %25 = sbr.rel (0) target = $region5
    $region4: #{encoder_decoder_forward.1} parent=1 // pred_region
      _
    $region5: #{encoder_decoder_forward.1} parent=1 // pred_fallthru
      _
    // Predicated region
    $region6: #{encoder_decoder_forward.1} parent=1 // pred_check
      _
    $region7: #{encoder_decoder_forward.1} parent=1 // pred_check_branch
      %27 = sbr.rel (0) target = $region9
    $region8: #{encoder_decoder_forward.1} parent=1 // pred_region
      _
    $region9: #{encoder_decoder_forward.1} parent=1 // pred_fallthru
      _
    // Predicated region
    $region10: #{encoder_decoder_forward.1} parent=1 // pred_check
      _
    $region11: #{encoder_decoder_forward.1} parent=1 // pred_check_branch
      %29 = sbr.rel (0) target = $region13
    $region12: #{encoder_decoder_forward.1} parent=1 // pred_region
      _
    $region13: #{encoder_decoder_forward.1} parent=1 // pred_fallthru
      _
    // Predicated region
    $region14: #{encoder_decoder_forward.1} parent=1 // pred_check
      _
    $region15: #{encoder_decoder_forward.1} parent=1 // pred_check_branch
      %31 = sbr.rel (0) target = $region17
    $region16: #{encoder_decoder_forward.1} parent=1 // pred_region
      _
    $region17: #{encoder_decoder_forward.1} parent=1 // pred_fallthru
      _
    // Predicated region
    $region18: #{encoder_decoder_forward.1} parent=1 // pred_check
      _
    $region19: #{encoder_decoder_forward.1} parent=1 // pred_check_branch
      %33 = sbr.rel (0) target = $region21
    $region20: #{encoder_decoder_forward.1} parent=1 // pred_region
      _
    $region21: #{encoder_decoder_forward.1} parent=1 // pred_fallthru
      _
    // Predicated region
    $region22: #{encoder_decoder_forward.1} parent=1 // pred_check
      _
    $region23: #{encoder_decoder_forward.1} parent=1 // pred_check_branch
      %35 = sbr.rel (0) target = $region25
    $region24: #{encoder_decoder_forward.1} parent=1 // pred_region
      _
    $region25: #{encoder_decoder_forward.1} parent=1 // pred_fallthru
      _
    // Predicated region
    $region26: #{encoder_decoder_forward.1} parent=1 // pred_check
      _
    $region27: #{encoder_decoder_forward.1} parent=1 // pred_check_branch
      %37 = sbr.rel (0) target = $region29
    $region28: #{encoder_decoder_forward.1} parent=1 // pred_region
      _
    $region29: #{encoder_decoder_forward.1} parent=1 // pred_fallthru
      _
    // Predicated region
    $region30: #{encoder_decoder_forward.1} parent=1 // pred_check
      _
    $region31: #{encoder_decoder_forward.1} parent=1 // pred_check_branch
      %39 = sbr.rel (0) target = $region33
    $region32: #{encoder_decoder_forward.1} parent=1 // pred_region
      _
    $region33: #{encoder_decoder_forward.1} parent=1 // pred_fallthru
      _
    // Predicated region
    $region34: #{encoder_decoder_forward.1} parent=1 // pred_check
      _
    $region35: #{encoder_decoder_forward.1} parent=1 // pred_check_branch
      %41 = sbr.rel (0) target = $region37
    $region36: #{encoder_decoder_forward.1} parent=1 // pred_region
      _
    $region37: #{encoder_decoder_forward.1} parent=1 // pred_fallthru
      _
    // Predicated region
    $region38: #{encoder_decoder_forward.1} parent=1 // pred_check
      _
    $region39: #{encoder_decoder_forward.1} parent=1 // pred_check_branch
      %43 = sbr.rel (0) target = $region41
    $region40: #{encoder_decoder_forward.1} parent=1 // pred_region
      _
    $region41: #{encoder_decoder_forward.1} parent=1 // pred_fallthru
      _
    // Predicated region
    $region42: #{encoder_decoder_forward.1} parent=1 // pred_check
      _
    $region43: #{encoder_decoder_forward.1} parent=1 // pred_check_branch
      %45 = sbr.rel (0) target = $region45
    $region44: #{encoder_decoder_forward.1} parent=1 // pred_region
      _
    $region45: #{encoder_decoder_forward.1} parent=1 // pred_fallthru
      _
    // Predicated region
    $region46: #{encoder_decoder_forward.1} parent=1 // pred_check
      _
    $region47: #{encoder_decoder_forward.1} parent=1 // pred_check_branch
      %47 = sbr.rel (0) target = $region49
    $region48: #{encoder_decoder_forward.1} parent=1 // pred_region
      _
    $region49: #{encoder_decoder_forward.1} parent=1 // pred_fallthru
      _
    // Predicated region
    $region50: #{encoder_decoder_forward.1} parent=1 // pred_check
      _
    $region51: #{encoder_decoder_forward.1} parent=1 // pred_check_branch
      %49 = sbr.rel (0) target = $region53
    $region52: #{encoder_decoder_forward.1} parent=1 // pred_region
      _
    $region53: #{encoder_decoder_forward.1} parent=1 // pred_fallthru
      _
    // Predicated region
    $region54: #{encoder_decoder_forward.1} parent=1 // pred_check
      _
    $region55: #{encoder_decoder_forward.1} parent=1 // pred_check_branch
      %51 = sbr.rel (0) target = $region57
    $region56: #{encoder_decoder_forward.1} parent=1 // pred_region
      _
    $region57: #{encoder_decoder_forward.1} parent=1 // pred_fallthru
      _
    // Predicated region
    $region58: #{encoder_decoder_forward.1} parent=1 // pred_check
      _
    $region59: #{encoder_decoder_forward.1} parent=1 // pred_check_branch
      %53 = sbr.rel (0) target = $region61
    $region60: #{encoder_decoder_forward.1} parent=1 // pred_region
      _
    $region61: #{encoder_decoder_forward.1} parent=1 // pred_fallthru
      _
    %v54 = vld [vmem:[%s0] sm:$0xff]
    %v55 = vld [vmem:[%s0 + $0x8] sm:$0xff]
    %v56 = vld [vmem:[%s3] sm:$0xff]
    %v57 = vld [vmem:[%s3 + $0x8] sm:$0xff]
    %v58 = vld [vmem:[%s3 + $0x10] sm:$0xff]
    %v59 = vld [vmem:[%s3 + $0x18] sm:$0xff]
    %v60 = vld [vmem:[%s3 + $0x20] sm:$0xff]
    %v61 = vld [vmem:[%s3 + $0x28] sm:$0xff]
    %v62 = vld [vmem:[%s3 + $0x30] sm:$0xff]
    %v63 = vld [vmem:[%s3 + $0x38] sm:$0xff]
    %v64 = vld [vmem:[%s3 + $0x40] sm:$0xff]
    %v65 = vld [vmem:[%s3 + $0x48] sm:$0xff]
    %v66 = vld [vmem:[%s3 + $0x50] sm:$0xff]
    %v67 = vld [vmem:[%s3 + $0x58] sm:$0xff]
    %v68 = vld [vmem:[%s3 + $0x60] sm:$0xff]
    %v69 = vld [vmem:[%s3 + $0x68] sm:$0xff]
    %v70 = vld [vmem:[%s3 + $0x70] sm:$0xff]
    %v71 = vld [vmem:[%s3 + $0x78] sm:$0xff]
    %v72 = vld [vmem:[%s4] sm:$0x3]
    %v74 = vlaneseq
    %v75 = vshrl.u32 %v74, 7
    %v76 = vsub.s32 0, %v75
    %v77 = vrot.slane %v72, %v76
    %v78 = vlaneseq
    %v79 = vshrl.u32 %v78, 7
    %v80 = vsub.s32 1, %v79
    %v81 = vrot.slane %v72, %v80
    %vm84 = vcmask 523264
    %v86 = vsel %vm84, %v54, 0
    %v89 = vsel %vm84, %v55, 0
    %91 = vmatprep.subr.mxu0 %v57
    %92 = vmatpush1.msra.mxu0 %v56
    %93 = vmatprep.subr.mxu0 %v59
    %94 = vmatpush1.msra.mxu0 %v58
    %95 = vmatprep.subr.mxu0 %v61
    %96 = vmatpush1.msra.mxu0 %v60
    %97 = vmatprep.subr.mxu0 %v63
    %98 = vmatpush1.msra.mxu0 %v62
    %99 = vmatprep.subr.mxu0 %v65
    %100 = vmatpush1.msra.mxu0 %v64
    %101 = vmatprep.subr.mxu0 %v67
    %102 = vmatpush1.msra.mxu0 %v66
    %103 = vmatprep.subr.mxu0 %v69
    %104 = vmatpush1.msra.mxu0 %v68
    %105 = vmatprep.subr.mxu0 %v71
    %106 = vmatpush1.msra.mxu0 %v70
    %107 = vmatprep.subr.mxu0 0.0
    %108 = vmatpush1.msra.mxu0 0.0
    %109 = vmatprep.subr.mxu0 0.0
    %110 = vmatpush1.msra.mxu0 0.0
    %111 = vmatprep.subr.mxu0 0.0
    %112 = vmatpush1.msra.mxu0 0.0
    %113 = vmatprep.subr.mxu0 0.0
    %114 = vmatpush1.msra.mxu0 0.0
    %115 = vmatprep.subr.mxu0 0.0
    %116 = vmatpush1.msra.mxu0 0.0
    %117 = vmatprep.subr.mxu0 0.0
    %118 = vmatpush1.msra.mxu0 0.0
    %119 = vmatprep.subr.mxu0 0.0
    %120 = vmatpush1.msra.mxu0 0.0
    %121 = vmatprep.subr.mxu0 0.0
    %122 = vmatpush1.msra.mxu0 0.0
    %123 = vmatprep.subr.mxu0 0.0
    %124 = vmatpush1.msra.mxu0 0.0
    %125 = vmatprep.subr.mxu0 0.0
    %126 = vmatpush1.msra.mxu0 0.0
    %127 = vmatprep.subr.mxu0 0.0
    %128 = vmatpush1.msra.mxu0 0.0
    %129 = vmatprep.subr.mxu0 0.0
    %130 = vmatpush1.msra.mxu0 0.0
    %131 = vmatprep.subr.mxu0 0.0
    %132 = vmatpush1.msra.mxu0 0.0
    %133 = vmatprep.subr.mxu0 0.0
    %134 = vmatpush1.msra.mxu0 0.0
    %135 = vmatprep.subr.mxu0 0.0
    %136 = vmatpush1.msra.mxu0 0.0
    %137 = vmatprep.subr.mxu0 0.0
    %138 = vmatpush1.msra.mxu0 0.0
    %139 = vmatprep.subr.mxu0 0.0
    %140 = vmatpush1.msra.mxu0 0.0
    %141 = vmatprep.subr.mxu0 0.0
    %142 = vmatpush1.msra.mxu0 0.0
    %143 = vmatprep.subr.mxu0 0.0
    %144 = vmatpush1.msra.mxu0 0.0
    %145 = vmatprep.subr.mxu0 0.0
    %146 = vmatpush1.msra.mxu0 0.0
    %147 = vmatprep.subr.mxu0 0.0
    %148 = vmatpush1.msra.mxu0 0.0
    %149 = vmatprep.subr.mxu0 0.0
    %150 = vmatpush1.msra.mxu0 0.0
    %151 = vmatprep.subr.mxu0 0.0
    %152 = vmatpush1.msra.mxu0 0.0
    %153 = vmatprep.subr.mxu0 0.0
    %154 = vmatpush1.msra.mxu0 0.0
    %155 = vmatprep.mubr.f32.mxu0 0.0
    %156 = vmatmul.mubr.f32.gmra.mrb[0].mxu0 %v86
    %v157 = vpop.f32.mrb[0].mxu0
    %v158 = vadd.f32 %v77, %v157
    %v159 = vpop.f32.mrb[0].mxu0
    %v160 = vadd.f32 %v81, %v159
    %161 = vmatprep.mubr.f32.mxu0 0.0
    %162 = vmatmul.mubr.f32.gmra.mrb[0].mxu0 %v89
    %v163 = vpop.f32.mrb[0].mxu0
    %v164 = vadd.f32 %v77, %v163
    %v165 = vpop.f32.mrb[0].mxu0
    %v166 = vadd.f32 %v81, %v165
    %167 = vdwg.mxu0
    %v168 = vld [vmem:[%s5] sm:$0xff]
    %v169 = vld [vmem:[%s5 + $0x8] sm:$0xff]
    %v170 = vld [vmem:[%s5 + $0x10] sm:$0xff]
    %v171 = vld [vmem:[%s5 + $0x18] sm:$0xff]
    %v172 = vld [vmem:[%s5 + $0x20] sm:$0xff]
    %v173 = vld [vmem:[%s5 + $0x28] sm:$0xff]
    %v174 = vld [vmem:[%s5 + $0x30] sm:$0xff]
    %v175 = vld [vmem:[%s5 + $0x38] sm:$0xff]
    %v176 = vld [vmem:[%s5 + $0x40] sm:$0xff]
    %v177 = vld [vmem:[%s5 + $0x48] sm:$0xff]
    %v178 = vld [vmem:[%s5 + $0x50] sm:$0xff]
    %v179 = vld [vmem:[%s5 + $0x58] sm:$0xff]
    %v180 = vld [vmem:[%s5 + $0x60] sm:$0xff]
    %v181 = vld [vmem:[%s5 + $0x68] sm:$0xff]
    %v182 = vld [vmem:[%s5 + $0x70] sm:$0xff]
    %v183 = vld [vmem:[%s5 + $0x78] sm:$0xff]
    %v184 = vld [vmem:[%s6] sm:$0x1]
    %v186 = vsel %vm84, 0.0, 0
    %188 = vmatprep.subr.mxu0 %v169
    %189 = vmatpush1.msra.mxu0 %v168
    %190 = vmatprep.subr.mxu0 %v171
    %191 = vmatpush1.msra.mxu0 %v170
    %192 = vmatprep.subr.mxu0 %v173
    %193 = vmatpush1.msra.mxu0 %v172
    %194 = vmatprep.subr.mxu0 %v175
    %195 = vmatpush1.msra.mxu0 %v174
    %196 = vmatprep.subr.mxu0 %v177
    %197 = vmatpush1.msra.mxu0 %v176
    %198 = vmatprep.subr.mxu0 %v179
    %199 = vmatpush1.msra.mxu0 %v178
    %200 = vmatprep.subr.mxu0 %v181
    %201 = vmatpush1.msra.mxu0 %v180
    %202 = vmatprep.subr.mxu0 %v183
    %203 = vmatpush1.msra.mxu0 %v182
    %204 = vmatprep.subr.mxu0 0.0
    %205 = vmatpush1.msra.mxu0 0.0
    %206 = vmatprep.subr.mxu0 0.0
    %207 = vmatpush1.msra.mxu0 0.0
    %208 = vmatprep.subr.mxu0 0.0
    %209 = vmatpush1.msra.mxu0 0.0
    %210 = vmatprep.subr.mxu0 0.0
    %211 = vmatpush1.msra.mxu0 0.0
    %212 = vmatprep.subr.mxu0 0.0
    %213 = vmatpush1.msra.mxu0 0.0
    %214 = vmatprep.subr.mxu0 0.0
    %215 = vmatpush1.msra.mxu0 0.0
    %216 = vmatprep.subr.mxu0 0.0
    %217 = vmatpush1.msra.mxu0 0.0
    %218 = vmatprep.subr.mxu0 0.0
    %219 = vmatpush1.msra.mxu0 0.0
    %220 = vmatprep.subr.mxu0 0.0
    %221 = vmatpush1.msra.mxu0 0.0
    %222 = vmatprep.subr.mxu0 0.0
    %223 = vmatpush1.msra.mxu0 0.0
    %224 = vmatprep.subr.mxu0 0.0
    %225 = vmatpush1.msra.mxu0 0.0
    %226 = vmatprep.subr.mxu0 0.0
    %227 = vmatpush1.msra.mxu0 0.0
    %228 = vmatprep.subr.mxu0 0.0
    %229 = vmatpush1.msra.mxu0 0.0
    %230 = vmatprep.subr.mxu0 0.0
    %231 = vmatpush1.msra.mxu0 0.0
    %232 = vmatprep.subr.mxu0 0.0
    %233 = vmatpush1.msra.mxu0 0.0
    %234 = vmatprep.subr.mxu0 0.0
    %235 = vmatpush1.msra.mxu0 0.0
    %236 = vmatprep.subr.mxu0 0.0
    %237 = vmatpush1.msra.mxu0 0.0
    %238 = vmatprep.subr.mxu0 0.0
    %239 = vmatpush1.msra.mxu0 0.0
    %240 = vmatprep.subr.mxu0 0.0
    %241 = vmatpush1.msra.mxu0 0.0
    %242 = vmatprep.subr.mxu0 0.0
    %243 = vmatpush1.msra.mxu0 0.0
    %244 = vmatprep.subr.mxu0 0.0
    %245 = vmatpush1.msra.mxu0 0.0
    %246 = vmatprep.subr.mxu0 0.0
    %247 = vmatpush1.msra.mxu0 0.0
    %248 = vmatprep.subr.mxu0 0.0
    %249 = vmatpush1.msra.mxu0 0.0
    %250 = vmatprep.subr.mxu0 0.0
    %251 = vmatpush1.msra.mxu0 0.0
    %252 = vmatprep.mubr.f32.mxu0 0.0
    %253 = vmatmul.mubr.f32.gmra.mrb[0].mxu0 %v186
    %v254 = vpop.f32.mrb[0].mxu0
    %v255 = vadd.f32 0.0, %v254
    %v256 = vpop.f32.mrb[0].mxu0
    %v257 = vadd.f32 0.0, %v256
    %258 = vdwg.mxu0
    %v259 = vadd.f32 %v158, %v255
    %v260 = vxor.u32 %v259, 2147483648
    %v261 = vmul.f32 %v260, 1.442695
    %v262 = vpow.pop %v261
    %v263 = vadd.f32 %v262, 1.0
    %v264 = vrcp.pop %v263
    %v265 = vmul.f32 1.0, %v264
    %v267 = vlaneseq
    %v268 = vshrl.u32 %v267, 7
    %v269 = vsub.s32 0, %v268
    %v270 = vrot.slane %v184, %v269
    %v272 = vadd.f32 %v257, %v270
    %v273 = vmul.f32 %v265, %v272
    %v274 = vadd.f32 %v160, %v273
    %v275 = vtanh.pop %v274
    %v276 = vsub.f32 1.0, %v265
    %278 = vrot.lane.b32.xlu0 %v275, 64
    %v279 = vpop.permute.xlu0 %278
    %v281 = vmul.f32 %v276, %v279
    %v282 = vmul.f32 %v265, 0.0
    %v283 = vadd.f32 %v281, %v282
    %285 = vrot.lane.b32.xlu0 %v283, 64
    %v286 = vpop.permute.xlu0 %285
    %v287 = vsel %vm84, %v286, 0
    %289 = vmatprep.subr.mxu0 %v169
    %290 = vmatpush1.msra.mxu0 %v168
    %291 = vmatprep.subr.mxu0 %v171
    %292 = vmatpush1.msra.mxu0 %v170
    %293 = vmatprep.subr.mxu0 %v173
    %294 = vmatpush1.msra.mxu0 %v172
    %295 = vmatprep.subr.mxu0 %v175
    %296 = vmatpush1.msra.mxu0 %v174
    %297 = vmatprep.subr.mxu0 %v177
    %298 = vmatpush1.msra.mxu0 %v176
    %299 = vmatprep.subr.mxu0 %v179
    %300 = vmatpush1.msra.mxu0 %v178
    %301 = vmatprep.subr.mxu0 %v181
    %302 = vmatpush1.msra.mxu0 %v180
    %303 = vmatprep.subr.mxu0 %v183
    %304 = vmatpush1.msra.mxu0 %v182
    %305 = vmatprep.subr.mxu0 0.0
    %306 = vmatpush1.msra.mxu0 0.0
    %307 = vmatprep.subr.mxu0 0.0
    %308 = vmatpush1.msra.mxu0 0.0
    %309 = vmatprep.subr.mxu0 0.0
    %310 = vmatpush1.msra.mxu0 0.0
    %311 = vmatprep.subr.mxu0 0.0
    %312 = vmatpush1.msra.mxu0 0.0
    %313 = vmatprep.subr.mxu0 0.0
    %314 = vmatpush1.msra.mxu0 0.0
    %315 = vmatprep.subr.mxu0 0.0
    %316 = vmatpush1.msra.mxu0 0.0
    %317 = vmatprep.subr.mxu0 0.0
    %318 = vmatpush1.msra.mxu0 0.0
    %319 = vmatprep.subr.mxu0 0.0
    %320 = vmatpush1.msra.mxu0 0.0
    %321 = vmatprep.subr.mxu0 0.0
    %322 = vmatpush1.msra.mxu0 0.0
    %323 = vmatprep.subr.mxu0 0.0
    %324 = vmatpush1.msra.mxu0 0.0
    %325 = vmatprep.subr.mxu0 0.0
    %326 = vmatpush1.msra.mxu0 0.0
    %327 = vmatprep.subr.mxu0 0.0
    %328 = vmatpush1.msra.mxu0 0.0
    %329 = vmatprep.subr.mxu0 0.0
    %330 = vmatpush1.msra.mxu0 0.0
    %331 = vmatprep.subr.mxu0 0.0
    %332 = vmatpush1.msra.mxu0 0.0
    %333 = vmatprep.subr.mxu0 0.0
    %334 = vmatpush1.msra.mxu0 0.0
    %335 = vmatprep.subr.mxu0 0.0
    %336 = vmatpush1.msra.mxu0 0.0
    %337 = vmatprep.subr.mxu0 0.0
    %338 = vmatpush1.msra.mxu0 0.0
    %339 = vmatprep.subr.mxu0 0.0
    %340 = vmatpush1.msra.mxu0 0.0
    %341 = vmatprep.subr.mxu0 0.0
    %342 = vmatpush1.msra.mxu0 0.0
    %343 = vmatprep.subr.mxu0 0.0
    %344 = vmatpush1.msra.mxu0 0.0
    %345 = vmatprep.subr.mxu0 0.0
    %346 = vmatpush1.msra.mxu0 0.0
    %347 = vmatprep.subr.mxu0 0.0
    %348 = vmatpush1.msra.mxu0 0.0
    %349 = vmatprep.subr.mxu0 0.0
    %350 = vmatpush1.msra.mxu0 0.0
    %351 = vmatprep.subr.mxu0 0.0
    %352 = vmatpush1.msra.mxu0 0.0
    %353 = vmatprep.mubr.f32.mxu0 0.0
    %354 = vmatmul.mubr.f32.gmra.mrb[0].mxu0 %v287
    %v355 = vpop.f32.mrb[0].mxu0
    %v356 = vadd.f32 0.0, %v355
    %v357 = vpop.f32.mrb[0].mxu0
    %v358 = vadd.f32 0.0, %v357
    %359 = vdwg.mxu0
    %v361 = vrot.slane %v356, 6
    %v363 = vadd.f32 %v158, %v361
    %v364 = vxor.u32 %v363, 2147483648
    %v365 = vmul.f32 %v364, 1.442695
    %v366 = vpow.pop %v365
    %v367 = vadd.f32 %v366, 1.0
    %v368 = vrcp.pop %v367
    %v369 = vmul.f32 1.0, %v368
    %v370 = vadd.f32 %v358, %v270
    %v372 = vrot.slane %v370, 6
    %v374 = vmul.f32 %v369, %v372
    %v375 = vadd.f32 %v160, %v374
    %v376 = vtanh.pop %v375
    %v377 = vsub.f32 1.0, %v369
    %379 = vrot.lane.b32.xlu0 %v376, 64
    %v380 = vpop.permute.xlu0 %379
    %v382 = vmul.f32 %v377, %v380
    %v383 = vrot.slane %v283, 6
    %v385 = vmul.f32 %v369, %v383
    %v386 = vadd.f32 %v382, %v385
    %v388 = vrot.slane %v386, 2
    %389 = vrot.lane.b32.xlu0 %v388, 64
    %v390 = vpop.permute.xlu0 %389
    %v391 = vsel %vm84, %v390, 0
    %393 = vmatprep.subr.mxu0 %v169
    %394 = vmatpush1.msra.mxu0 %v168
    %395 = vmatprep.subr.mxu0 %v171
    %396 = vmatpush1.msra.mxu0 %v170
    %397 = vmatprep.subr.mxu0 %v173
    %398 = vmatpush1.msra.mxu0 %v172
    %399 = vmatprep.subr.mxu0 %v175
    %400 = vmatpush1.msra.mxu0 %v174
    %401 = vmatprep.subr.mxu0 %v177
    %402 = vmatpush1.msra.mxu0 %v176
    %403 = vmatprep.subr.mxu0 %v179
    %404 = vmatpush1.msra.mxu0 %v178
    %405 = vmatprep.subr.mxu0 %v181
    %406 = vmatpush1.msra.mxu0 %v180
    %407 = vmatprep.subr.mxu0 %v183
    %408 = vmatpush1.msra.mxu0 %v182
    %409 = vmatprep.subr.mxu0 0.0
    %410 = vmatpush1.msra.mxu0 0.0
    %411 = vmatprep.subr.mxu0 0.0
    %412 = vmatpush1.msra.mxu0 0.0
    %413 = vmatprep.subr.mxu0 0.0
    %414 = vmatpush1.msra.mxu0 0.0
    %415 = vmatprep.subr.mxu0 0.0
    %416 = vmatpush1.msra.mxu0 0.0
    %417 = vmatprep.subr.mxu0 0.0
    %418 = vmatpush1.msra.mxu0 0.0
    %419 = vmatprep.subr.mxu0 0.0
    %420 = vmatpush1.msra.mxu0 0.0
    %421 = vmatprep.subr.mxu0 0.0
    %422 = vmatpush1.msra.mxu0 0.0
    %423 = vmatprep.subr.mxu0 0.0
    %424 = vmatpush1.msra.mxu0 0.0
    %425 = vmatprep.subr.mxu0 0.0
    %426 = vmatpush1.msra.mxu0 0.0
    %427 = vmatprep.subr.mxu0 0.0
    %428 = vmatpush1.msra.mxu0 0.0
    %429 = vmatprep.subr.mxu0 0.0
    %430 = vmatpush1.msra.mxu0 0.0
    %431 = vmatprep.subr.mxu0 0.0
    %432 = vmatpush1.msra.mxu0 0.0
    %433 = vmatprep.subr.mxu0 0.0
    %434 = vmatpush1.msra.mxu0 0.0
    %435 = vmatprep.subr.mxu0 0.0
    %436 = vmatpush1.msra.mxu0 0.0
    %437 = vmatprep.subr.mxu0 0.0
    %438 = vmatpush1.msra.mxu0 0.0
    %439 = vmatprep.subr.mxu0 0.0
    %440 = vmatpush1.msra.mxu0 0.0
    %441 = vmatprep.subr.mxu0 0.0
    %442 = vmatpush1.msra.mxu0 0.0
    %443 = vmatprep.subr.mxu0 0.0
    %444 = vmatpush1.msra.mxu0 0.0
    %445 = vmatprep.subr.mxu0 0.0
    %446 = vmatpush1.msra.mxu0 0.0
    %447 = vmatprep.subr.mxu0 0.0
    %448 = vmatpush1.msra.mxu0 0.0
    %449 = vmatprep.subr.mxu0 0.0
    %450 = vmatpush1.msra.mxu0 0.0
    %451 = vmatprep.subr.mxu0 0.0
    %452 = vmatpush1.msra.mxu0 0.0
    %453 = vmatprep.subr.mxu0 0.0
    %454 = vmatpush1.msra.mxu0 0.0
    %455 = vmatprep.subr.mxu0 0.0
    %456 = vmatpush1.msra.mxu0 0.0
    %457 = vmatprep.mubr.f32.mxu0 0.0
    %458 = vmatmul.mubr.f32.gmra.mrb[0].mxu0 %v391
    %v459 = vpop.f32.mrb[0].mxu0
    %v460 = vadd.f32 0.0, %v459
    %v461 = vpop.f32.mrb[0].mxu0
    %v462 = vadd.f32 0.0, %v461
    %463 = vdwg.mxu0
    %v465 = vrot.slane %v460, 4
    %v467 = vadd.f32 %v158, %v465
    %v468 = vxor.u32 %v467, 2147483648
    %v469 = vmul.f32 %v468, 1.442695
    %v470 = vpow.pop %v469
    %v471 = vadd.f32 %v470, 1.0
    %v472 = vrcp.pop %v471
    %v473 = vmul.f32 1.0, %v472
    %v474 = vadd.f32 %v462, %v270
    %v476 = vrot.slane %v474, 4
    %v478 = vmul.f32 %v473, %v476
    %v479 = vadd.f32 %v160, %v478
    %v480 = vtanh.pop %v479
    %v481 = vsub.f32 1.0, %v473
    %483 = vrot.lane.b32.xlu0 %v480, 64
    %v484 = vpop.permute.xlu0 %483
    %v486 = vmul.f32 %v481, %v484
    %v487 = vrot.slane %v386, 6
    %v489 = vmul.f32 %v473, %v487
    %v490 = vadd.f32 %v486, %v489
    %v492 = vrot.slane %v490, 4
    %493 = vrot.lane.b32.xlu0 %v492, 64
    %v494 = vpop.permute.xlu0 %493
    %v495 = vsel %vm84, %v494, 0
    %497 = vmatprep.subr.mxu0 %v169
    %498 = vmatpush1.msra.mxu0 %v168
    %499 = vmatprep.subr.mxu0 %v171
    %500 = vmatpush1.msra.mxu0 %v170
    %501 = vmatprep.subr.mxu0 %v173
    %502 = vmatpush1.msra.mxu0 %v172
    %503 = vmatprep.subr.mxu0 %v175
    %504 = vmatpush1.msra.mxu0 %v174
    %505 = vmatprep.subr.mxu0 %v177
    %506 = vmatpush1.msra.mxu0 %v176
    %507 = vmatprep.subr.mxu0 %v179
    %508 = vmatpush1.msra.mxu0 %v178
    %509 = vmatprep.subr.mxu0 %v181
    %510 = vmatpush1.msra.mxu0 %v180
    %511 = vmatprep.subr.mxu0 %v183
    %512 = vmatpush1.msra.mxu0 %v182
    %513 = vmatprep.subr.mxu0 0.0
    %514 = vmatpush1.msra.mxu0 0.0
    %515 = vmatprep.subr.mxu0 0.0
    %516 = vmatpush1.msra.mxu0 0.0
    %517 = vmatprep.subr.mxu0 0.0
    %518 = vmatpush1.msra.mxu0 0.0
    %519 = vmatprep.subr.mxu0 0.0
    %520 = vmatpush1.msra.mxu0 0.0
    %521 = vmatprep.subr.mxu0 0.0
    %522 = vmatpush1.msra.mxu0 0.0
    %523 = vmatprep.subr.mxu0 0.0
    %524 = vmatpush1.msra.mxu0 0.0
    %525 = vmatprep.subr.mxu0 0.0
    %526 = vmatpush1.msra.mxu0 0.0
    %527 = vmatprep.subr.mxu0 0.0
    %528 = vmatpush1.msra.mxu0 0.0
    %529 = vmatprep.subr.mxu0 0.0
    %530 = vmatpush1.msra.mxu0 0.0
    %531 = vmatprep.subr.mxu0 0.0
    %532 = vmatpush1.msra.mxu0 0.0
    %533 = vmatprep.subr.mxu0 0.0
    %534 = vmatpush1.msra.mxu0 0.0
    %535 = vmatprep.subr.mxu0 0.0
    %536 = vmatpush1.msra.mxu0 0.0
    %537 = vmatprep.subr.mxu0 0.0
    %538 = vmatpush1.msra.mxu0 0.0
    %539 = vmatprep.subr.mxu0 0.0
    %540 = vmatpush1.msra.mxu0 0.0
    %541 = vmatprep.subr.mxu0 0.0
    %542 = vmatpush1.msra.mxu0 0.0
    %543 = vmatprep.subr.mxu0 0.0
    %544 = vmatpush1.msra.mxu0 0.0
    %545 = vmatprep.subr.mxu0 0.0
    %546 = vmatpush1.msra.mxu0 0.0
    %547 = vmatprep.subr.mxu0 0.0
    %548 = vmatpush1.msra.mxu0 0.0
    %549 = vmatprep.subr.mxu0 0.0
    %550 = vmatpush1.msra.mxu0 0.0
    %551 = vmatprep.subr.mxu0 0.0
    %552 = vmatpush1.msra.mxu0 0.0
    %553 = vmatprep.subr.mxu0 0.0
    %554 = vmatpush1.msra.mxu0 0.0
    %555 = vmatprep.subr.mxu0 0.0
    %556 = vmatpush1.msra.mxu0 0.0
    %557 = vmatprep.subr.mxu0 0.0
    %558 = vmatpush1.msra.mxu0 0.0
    %559 = vmatprep.subr.mxu0 0.0
    %560 = vmatpush1.msra.mxu0 0.0
    %561 = vmatprep.mubr.f32.mxu0 0.0
    %562 = vmatmul.mubr.f32.gmra.mrb[0].mxu0 %v495
    %v563 = vpop.f32.mrb[0].mxu0
    %v564 = vadd.f32 0.0, %v563
    %v565 = vpop.f32.mrb[0].mxu0
    %v566 = vadd.f32 0.0, %v565
    %567 = vdwg.mxu0
    %v569 = vrot.slane %v564, 2
    %v571 = vadd.f32 %v158, %v569
    %v572 = vxor.u32 %v571, 2147483648
    %v573 = vmul.f32 %v572, 1.442695
    %v574 = vpow.pop %v573
    %v575 = vadd.f32 %v574, 1.0
    %v576 = vrcp.pop %v575
    %v577 = vmul.f32 1.0, %v576
    %v578 = vadd.f32 %v566, %v270
    %v580 = vrot.slane %v578, 2
    %v582 = vmul.f32 %v577, %v580
    %v583 = vadd.f32 %v160, %v582
    %v584 = vtanh.pop %v583
    %v585 = vsub.f32 1.0, %v577
    %587 = vrot.lane.b32.xlu0 %v584, 64
    %v588 = vpop.permute.xlu0 %587
    %v590 = vmul.f32 %v585, %v588
    %v591 = vrot.slane %v490, 6
    %v593 = vmul.f32 %v577, %v591
    %v594 = vadd.f32 %v590, %v593
    %v596 = vrot.slane %v594, 6
    %597 = vrot.lane.b32.xlu0 %v596, 64
    %v598 = vpop.permute.xlu0 %597
    %v599 = vsel %vm84, %v598, 0
    %601 = vmatprep.subr.mxu0 %v169
    %602 = vmatpush1.msra.mxu0 %v168
    %603 = vmatprep.subr.mxu0 %v171
    %604 = vmatpush1.msra.mxu0 %v170
    %605 = vmatprep.subr.mxu0 %v173
    %606 = vmatpush1.msra.mxu0 %v172
    %607 = vmatprep.subr.mxu0 %v175
    %608 = vmatpush1.msra.mxu0 %v174
    %609 = vmatprep.subr.mxu0 %v177
    %610 = vmatpush1.msra.mxu0 %v176
    %611 = vmatprep.subr.mxu0 %v179
    %612 = vmatpush1.msra.mxu0 %v178
    %613 = vmatprep.subr.mxu0 %v181
    %614 = vmatpush1.msra.mxu0 %v180
    %615 = vmatprep.subr.mxu0 %v183
    %616 = vmatpush1.msra.mxu0 %v182
    %617 = vmatprep.subr.mxu0 0.0
    %618 = vmatpush1.msra.mxu0 0.0
    %619 = vmatprep.subr.mxu0 0.0
    %620 = vmatpush1.msra.mxu0 0.0
    %621 = vmatprep.subr.mxu0 0.0
    %622 = vmatpush1.msra.mxu0 0.0
    %623 = vmatprep.subr.mxu0 0.0
    %624 = vmatpush1.msra.mxu0 0.0
    %625 = vmatprep.subr.mxu0 0.0
    %626 = vmatpush1.msra.mxu0 0.0
    %627 = vmatprep.subr.mxu0 0.0
    %628 = vmatpush1.msra.mxu0 0.0
    %629 = vmatprep.subr.mxu0 0.0
    %630 = vmatpush1.msra.mxu0 0.0
    %631 = vmatprep.subr.mxu0 0.0
    %632 = vmatpush1.msra.mxu0 0.0
    %633 = vmatprep.subr.mxu0 0.0
    %634 = vmatpush1.msra.mxu0 0.0
    %635 = vmatprep.subr.mxu0 0.0
    %636 = vmatpush1.msra.mxu0 0.0
    %637 = vmatprep.subr.mxu0 0.0
    %638 = vmatpush1.msra.mxu0 0.0
    %639 = vmatprep.subr.mxu0 0.0
    %640 = vmatpush1.msra.mxu0 0.0
    %641 = vmatprep.subr.mxu0 0.0
    %642 = vmatpush1.msra.mxu0 0.0
    %643 = vmatprep.subr.mxu0 0.0
    %644 = vmatpush1.msra.mxu0 0.0
    %645 = vmatprep.subr.mxu0 0.0
    %646 = vmatpush1.msra.mxu0 0.0
    %647 = vmatprep.subr.mxu0 0.0
    %648 = vmatpush1.msra.mxu0 0.0
    %649 = vmatprep.subr.mxu0 0.0
    %650 = vmatpush1.msra.mxu0 0.0
    %651 = vmatprep.subr.mxu0 0.0
    %652 = vmatpush1.msra.mxu0 0.0
    %653 = vmatprep.subr.mxu0 0.0
    %654 = vmatpush1.msra.mxu0 0.0
    %655 = vmatprep.subr.mxu0 0.0
    %656 = vmatpush1.msra.mxu0 0.0
    %657 = vmatprep.subr.mxu0 0.0
    %658 = vmatpush1.msra.mxu0 0.0
    %659 = vmatprep.subr.mxu0 0.0
    %660 = vmatpush1.msra.mxu0 0.0
    %661 = vmatprep.subr.mxu0 0.0
    %662 = vmatpush1.msra.mxu0 0.0
    %663 = vmatprep.subr.mxu0 0.0
    %664 = vmatpush1.msra.mxu0 0.0
    %665 = vmatprep.mubr.f32.mxu0 0.0
    %666 = vmatmul.mubr.f32.gmra.mrb[0].mxu0 %v599
    %v667 = vpop.f32.mrb[0].mxu0
    %v668 = vadd.f32 0.0, %v667
    %v669 = vpop.f32.mrb[0].mxu0
    %v670 = vadd.f32 0.0, %v669
    %671 = vdwg.mxu0
    %v672 = vadd.f32 %v164, %v668
    %v673 = vxor.u32 %v672, 2147483648
    %v674 = vmul.f32 %v673, 1.442695
    %v675 = vpow.pop %v674
    %v676 = vadd.f32 %v675, 1.0
    %v677 = vrcp.pop %v676
    %v678 = vmul.f32 1.0, %v677
    %v679 = vadd.f32 %v670, %v270
    %v680 = vmul.f32 %v678, %v679
    %v681 = vadd.f32 %v166, %v680
    %v682 = vtanh.pop %v681
    %v683 = vsub.f32 1.0, %v678
    %685 = vrot.lane.b32.xlu0 %v682, 64
    %v686 = vpop.permute.xlu0 %685
    %v688 = vmul.f32 %v683, %v686
    %v690 = vmul.f32 %v678, %v596
    %v691 = vadd.f32 %v688, %v690
    %693 = vrot.lane.b32.xlu0 %v691, 64
    %v694 = vpop.permute.xlu0 %693
    %v695 = vsel %vm84, %v694, 0
    %697 = vmatprep.subr.mxu0 %v169
    %698 = vmatpush1.msra.mxu0 %v168
    %699 = vmatprep.subr.mxu0 %v171
    %700 = vmatpush1.msra.mxu0 %v170
    %701 = vmatprep.subr.mxu0 %v173
    %702 = vmatpush1.msra.mxu0 %v172
    %703 = vmatprep.subr.mxu0 %v175
    %704 = vmatpush1.msra.mxu0 %v174
    %705 = vmatprep.subr.mxu0 %v177
    %706 = vmatpush1.msra.mxu0 %v176
    %707 = vmatprep.subr.mxu0 %v179
    %708 = vmatpush1.msra.mxu0 %v178
    %709 = vmatprep.subr.mxu0 %v181
    %710 = vmatpush1.msra.mxu0 %v180
    %711 = vmatprep.subr.mxu0 %v183
    %712 = vmatpush1.msra.mxu0 %v182
    %713 = vmatprep.subr.mxu0 0.0
    %714 = vmatpush1.msra.mxu0 0.0
    %715 = vmatprep.subr.mxu0 0.0
    %716 = vmatpush1.msra.mxu0 0.0
    %717 = vmatprep.subr.mxu0 0.0
    %718 = vmatpush1.msra.mxu0 0.0
    %719 = vmatprep.subr.mxu0 0.0
    %720 = vmatpush1.msra.mxu0 0.0
    %721 = vmatprep.subr.mxu0 0.0
    %722 = vmatpush1.msra.mxu0 0.0
    %723 = vmatprep.subr.mxu0 0.0
    %724 = vmatpush1.msra.mxu0 0.0
    %725 = vmatprep.subr.mxu0 0.0
    %726 = vmatpush1.msra.mxu0 0.0
    %727 = vmatprep.subr.mxu0 0.0
    %728 = vmatpush1.msra.mxu0 0.0
    %729 = vmatprep.subr.mxu0 0.0
    %730 = vmatpush1.msra.mxu0 0.0
    %731 = vmatprep.subr.mxu0 0.0
    %732 = vmatpush1.msra.mxu0 0.0
    %733 = vmatprep.subr.mxu0 0.0
    %734 = vmatpush1.msra.mxu0 0.0
    %735 = vmatprep.subr.mxu0 0.0
    %736 = vmatpush1.msra.mxu0 0.0
    %737 = vmatprep.subr.mxu0 0.0
    %738 = vmatpush1.msra.mxu0 0.0
    %739 = vmatprep.subr.mxu0 0.0
    %740 = vmatpush1.msra.mxu0 0.0
    %741 = vmatprep.subr.mxu0 0.0
    %742 = vmatpush1.msra.mxu0 0.0
    %743 = vmatprep.subr.mxu0 0.0
    %744 = vmatpush1.msra.mxu0 0.0
    %745 = vmatprep.subr.mxu0 0.0
    %746 = vmatpush1.msra.mxu0 0.0
    %747 = vmatprep.subr.mxu0 0.0
    %748 = vmatpush1.msra.mxu0 0.0
    %749 = vmatprep.subr.mxu0 0.0
    %750 = vmatpush1.msra.mxu0 0.0
    %751 = vmatprep.subr.mxu0 0.0
    %752 = vmatpush1.msra.mxu0 0.0
    %753 = vmatprep.subr.mxu0 0.0
    %754 = vmatpush1.msra.mxu0 0.0
    %755 = vmatprep.subr.mxu0 0.0
    %756 = vmatpush1.msra.mxu0 0.0
    %757 = vmatprep.subr.mxu0 0.0
    %758 = vmatpush1.msra.mxu0 0.0
    %759 = vmatprep.subr.mxu0 0.0
    %760 = vmatpush1.msra.mxu0 0.0
    %761 = vmatprep.mubr.f32.mxu0 0.0
    %762 = vmatmul.mubr.f32.gmra.mrb[0].mxu0 %v695
    %v763 = vpop.f32.mrb[0].mxu0
    %v764 = vadd.f32 0.0, %v763
    %v765 = vpop.f32.mrb[0].mxu0
    %v766 = vadd.f32 0.0, %v765
    %767 = vdwg.mxu0
    %v769 = vrot.slane %v764, 6
    %v771 = vadd.f32 %v164, %v769
    %v772 = vxor.u32 %v771, 2147483648
    %v773 = vmul.f32 %v772, 1.442695
    %v774 = vpow.pop %v773
    %v775 = vadd.f32 %v774, 1.0
    %v776 = vrcp.pop %v775
    %v777 = vmul.f32 1.0, %v776
    %v778 = vadd.f32 %v766, %v270
    %v780 = vrot.slane %v778, 6
    %v782 = vmul.f32 %v777, %v780
    %v783 = vadd.f32 %v166, %v782
    %v784 = vtanh.pop %v783
    %v785 = vsub.f32 1.0, %v777
    %787 = vrot.lane.b32.xlu0 %v784, 64
    %v788 = vpop.permute.xlu0 %787
    %v790 = vmul.f32 %v785, %v788
    %v791 = vrot.slane %v691, 6
    %v793 = vmul.f32 %v777, %v791
    %v794 = vadd.f32 %v790, %v793
    %v796 = vrot.slane %v794, 2
    %797 = vrot.lane.b32.xlu0 %v796, 64
    %v798 = vpop.permute.xlu0 %797
    %v799 = vsel %vm84, %v798, 0
    %801 = vmatprep.subr.mxu0 %v169
    %802 = vmatpush1.msra.mxu0 %v168
    %803 = vmatprep.subr.mxu0 %v171
    %804 = vmatpush1.msra.mxu0 %v170
    %805 = vmatprep.subr.mxu0 %v173
    %806 = vmatpush1.msra.mxu0 %v172
    %807 = vmatprep.subr.mxu0 %v175
    %808 = vmatpush1.msra.mxu0 %v174
    %809 = vmatprep.subr.mxu0 %v177
    %810 = vmatpush1.msra.mxu0 %v176
    %811 = vmatprep.subr.mxu0 %v179
    %812 = vmatpush1.msra.mxu0 %v178
    %813 = vmatprep.subr.mxu0 %v181
    %814 = vmatpush1.msra.mxu0 %v180
    %815 = vmatprep.subr.mxu0 %v183
    %816 = vmatpush1.msra.mxu0 %v182
    %817 = vmatprep.subr.mxu0 0.0
    %818 = vmatpush1.msra.mxu0 0.0
    %819 = vmatprep.subr.mxu0 0.0
    %820 = vmatpush1.msra.mxu0 0.0
    %821 = vmatprep.subr.mxu0 0.0
    %822 = vmatpush1.msra.mxu0 0.0
    %823 = vmatprep.subr.mxu0 0.0
    %824 = vmatpush1.msra.mxu0 0.0
    %825 = vmatprep.subr.mxu0 0.0
    %826 = vmatpush1.msra.mxu0 0.0
    %827 = vmatprep.subr.mxu0 0.0
    %828 = vmatpush1.msra.mxu0 0.0
    %829 = vmatprep.subr.mxu0 0.0
    %830 = vmatpush1.msra.mxu0 0.0
    %831 = vmatprep.subr.mxu0 0.0
    %832 = vmatpush1.msra.mxu0 0.0
    %833 = vmatprep.subr.mxu0 0.0
    %834 = vmatpush1.msra.mxu0 0.0
    %835 = vmatprep.subr.mxu0 0.0
    %836 = vmatpush1.msra.mxu0 0.0
    %837 = vmatprep.subr.mxu0 0.0
    %838 = vmatpush1.msra.mxu0 0.0
    %839 = vmatprep.subr.mxu0 0.0
    %840 = vmatpush1.msra.mxu0 0.0
    %841 = vmatprep.subr.mxu0 0.0
    %842 = vmatpush1.msra.mxu0 0.0
    %843 = vmatprep.subr.mxu0 0.0
    %844 = vmatpush1.msra.mxu0 0.0
    %845 = vmatprep.subr.mxu0 0.0
    %846 = vmatpush1.msra.mxu0 0.0
    %847 = vmatprep.subr.mxu0 0.0
    %848 = vmatpush1.msra.mxu0 0.0
    %849 = vmatprep.subr.mxu0 0.0
    %850 = vmatpush1.msra.mxu0 0.0
    %851 = vmatprep.subr.mxu0 0.0
    %852 = vmatpush1.msra.mxu0 0.0
    %853 = vmatprep.subr.mxu0 0.0
    %854 = vmatpush1.msra.mxu0 0.0
    %855 = vmatprep.subr.mxu0 0.0
    %856 = vmatpush1.msra.mxu0 0.0
    %857 = vmatprep.subr.mxu0 0.0
    %858 = vmatpush1.msra.mxu0 0.0
    %859 = vmatprep.subr.mxu0 0.0
    %860 = vmatpush1.msra.mxu0 0.0
    %861 = vmatprep.subr.mxu0 0.0
    %862 = vmatpush1.msra.mxu0 0.0
    %863 = vmatprep.subr.mxu0 0.0
    %864 = vmatpush1.msra.mxu0 0.0
    %865 = vmatprep.mubr.f32.mxu0 0.0
    %866 = vmatmul.mubr.f32.gmra.mrb[0].mxu0 %v799
    %v867 = vpop.f32.mrb[0].mxu0
    %v868 = vadd.f32 0.0, %v867
    %v869 = vpop.f32.mrb[0].mxu0
    %v870 = vadd.f32 0.0, %v869
    %871 = vdwg.mxu0
    %v873 = vrot.slane %v868, 4
    %v875 = vadd.f32 %v164, %v873
    %v876 = vxor.u32 %v875, 2147483648
    %v877 = vmul.f32 %v876, 1.442695
    %v878 = vpow.pop %v877
    %v879 = vadd.f32 %v878, 1.0
    %v880 = vrcp.pop %v879
    %v881 = vmul.f32 1.0, %v880
    %v882 = vadd.f32 %v870, %v270
    %v884 = vrot.slane %v882, 4
    %v886 = vmul.f32 %v881, %v884
    %v887 = vadd.f32 %v166, %v886
    %v888 = vtanh.pop %v887
    %v889 = vsub.f32 1.0, %v881
    %891 = vrot.lane.b32.xlu0 %v888, 64
    %v892 = vpop.permute.xlu0 %891
    %v894 = vmul.f32 %v889, %v892
    %v895 = vrot.slane %v794, 6
    %v897 = vmul.f32 %v881, %v895
    %v898 = vadd.f32 %v894, %v897
    %v900 = vrot.slane %v898, 4
    %901 = vrot.lane.b32.xlu0 %v900, 64
    %v902 = vpop.permute.xlu0 %901
    %v903 = vsel %vm84, %v902, 0
    %905 = vmatprep.subr.mxu0 %v169
    %906 = vmatpush1.msra.mxu0 %v168
    %907 = vmatprep.subr.mxu0 %v171
    %908 = vmatpush1.msra.mxu0 %v170
    %909 = vmatprep.subr.mxu0 %v173
    %910 = vmatpush1.msra.mxu0 %v172
    %911 = vmatprep.subr.mxu0 %v175
    %912 = vmatpush1.msra.mxu0 %v174
    %913 = vmatprep.subr.mxu0 %v177
    %914 = vmatpush1.msra.mxu0 %v176
    %915 = vmatprep.subr.mxu0 %v179
    %916 = vmatpush1.msra.mxu0 %v178
    %917 = vmatprep.subr.mxu0 %v181
    %918 = vmatpush1.msra.mxu0 %v180
    %919 = vmatprep.subr.mxu0 %v183
    %920 = vmatpush1.msra.mxu0 %v182
    %921 = vmatprep.subr.mxu0 0.0
    %922 = vmatpush1.msra.mxu0 0.0
    %923 = vmatprep.subr.mxu0 0.0
    %924 = vmatpush1.msra.mxu0 0.0
    %925 = vmatprep.subr.mxu0 0.0
    %926 = vmatpush1.msra.mxu0 0.0
    %927 = vmatprep.subr.mxu0 0.0
    %928 = vmatpush1.msra.mxu0 0.0
    %929 = vmatprep.subr.mxu0 0.0
    %930 = vmatpush1.msra.mxu0 0.0
    %931 = vmatprep.subr.mxu0 0.0
    %932 = vmatpush1.msra.mxu0 0.0
    %933 = vmatprep.subr.mxu0 0.0
    %934 = vmatpush1.msra.mxu0 0.0
    %935 = vmatprep.subr.mxu0 0.0
    %936 = vmatpush1.msra.mxu0 0.0
    %937 = vmatprep.subr.mxu0 0.0
    %938 = vmatpush1.msra.mxu0 0.0
    %939 = vmatprep.subr.mxu0 0.0
    %940 = vmatpush1.msra.mxu0 0.0
    %941 = vmatprep.subr.mxu0 0.0
    %942 = vmatpush1.msra.mxu0 0.0
    %943 = vmatprep.subr.mxu0 0.0
    %944 = vmatpush1.msra.mxu0 0.0
    %945 = vmatprep.subr.mxu0 0.0
    %946 = vmatpush1.msra.mxu0 0.0
    %947 = vmatprep.subr.mxu0 0.0
    %948 = vmatpush1.msra.mxu0 0.0
    %949 = vmatprep.subr.mxu0 0.0
    %950 = vmatpush1.msra.mxu0 0.0
    %951 = vmatprep.subr.mxu0 0.0
    %952 = vmatpush1.msra.mxu0 0.0
    %953 = vmatprep.subr.mxu0 0.0
    %954 = vmatpush1.msra.mxu0 0.0
    %955 = vmatprep.subr.mxu0 0.0
    %956 = vmatpush1.msra.mxu0 0.0
    %957 = vmatprep.subr.mxu0 0.0
    %958 = vmatpush1.msra.mxu0 0.0
    %959 = vmatprep.subr.mxu0 0.0
    %960 = vmatpush1.msra.mxu0 0.0
    %961 = vmatprep.subr.mxu0 0.0
    %962 = vmatpush1.msra.mxu0 0.0
    %963 = vmatprep.subr.mxu0 0.0
    %964 = vmatpush1.msra.mxu0 0.0
    %965 = vmatprep.subr.mxu0 0.0
    %966 = vmatpush1.msra.mxu0 0.0
    %967 = vmatprep.subr.mxu0 0.0
    %968 = vmatpush1.msra.mxu0 0.0
    %969 = vmatprep.mubr.f32.mxu0 0.0
    %970 = vmatmul.mubr.f32.gmra.mrb[0].mxu0 %v903
    %v971 = vpop.f32.mrb[0].mxu0
    %v972 = vadd.f32 0.0, %v971
    %v973 = vpop.f32.mrb[0].mxu0
    %v974 = vadd.f32 0.0, %v973
    %975 = vdwg.mxu0
    %v977 = vrot.slane %v972, 2
    %v979 = vadd.f32 %v164, %v977
    %v980 = vxor.u32 %v979, 2147483648
    %v981 = vmul.f32 %v980, 1.442695
    %v982 = vpow.pop %v981
    %v983 = vadd.f32 %v982, 1.0
    %v984 = vrcp.pop %v983
    %v985 = vmul.f32 1.0, %v984
    %v986 = vadd.f32 %v974, %v270
    %v988 = vrot.slane %v986, 2
    %v990 = vmul.f32 %v985, %v988
    %v991 = vadd.f32 %v166, %v990
    %v992 = vtanh.pop %v991
    %v993 = vsub.f32 1.0, %v985
    %995 = vrot.lane.b32.xlu0 %v992, 64
    %v996 = vpop.permute.xlu0 %995
    %v998 = vmul.f32 %v993, %v996
    %v999 = vrot.slane %v898, 6
    %v1001 = vmul.f32 %v985, %v999
    %v1002 = vadd.f32 %v998, %v1001
    %1004 = vrot.lane.b32.xlu0 %v1002, 96
    %v1005 = vpop.permute.xlu0 %1004
    %v1007 = vadd.f32 %v1002, %v1005
    %v1008 = vrot.slane %v1002, 6
    %1009 = vrot.lane.b32.xlu0 %v1008, 96
    %v1010 = vpop.permute.xlu0 %1009
    %v1012 = vadd.f32 %v283, %v1010
    %1014 = vrot.lane.b32.xlu0 %v1012, 64
    %v1015 = vpop.permute.xlu0 %1014
    %vm1017 = vcmask 254976
    %1018 = vst.msk [vmem:[#allocation2] sm:$0x3] %vm1017, %v1015
    %v1019 = vrot.slane %v898, 2
    %1020 = vrot.lane.b32.xlu0 %v1019, 96
    %v1021 = vpop.permute.xlu0 %1020
    %v1023 = vadd.f32 %v386, %v1021
    %1025 = vrot.lane.b32.xlu0 %v1023, 64
    %v1026 = vpop.permute.xlu0 %1025
    %vm1028 = vcmask 257026
    %1029 = vst.msk [vmem:[#allocation2] sm:$0xc] %vm1028, %v1026
    %1030 = vrot.lane.b32.xlu0 %v895, 96
    %v1031 = vpop.permute.xlu0 %1030
    %v1033 = vadd.f32 %v490, %v1031
    %1035 = vrot.lane.b32.xlu0 %v1033, 64
    %v1036 = vpop.permute.xlu0 %1035
    %vm1038 = vcmask 259076
    %1039 = vst.msk [vmem:[#allocation2] sm:$0x30] %vm1038, %v1036
    %v1040 = vrot.slane %v691, 2
    %1041 = vrot.lane.b32.xlu0 %v1040, 96
    %v1042 = vpop.permute.xlu0 %1041
    %v1044 = vadd.f32 %v594, %v1042
    %1046 = vrot.lane.b32.xlu0 %v1044, 64
    %v1047 = vpop.permute.xlu0 %1046
    %vm1049 = vcmask 261126
    %1050 = vst.msk [vmem:[#allocation2] sm:$0xc0] %vm1049, %v1047
    %1051 = vrot.lane.b32.xlu0 %v596, 96
    %v1052 = vpop.permute.xlu0 %1051
    %v1054 = vadd.f32 %v691, %v1052
    %1056 = vrot.lane.b32.xlu0 %v1054, 64
    %v1057 = vpop.permute.xlu0 %1056
    %1059 = vst.msk [vmem:[#allocation2 + $0x8] sm:$0x3] %vm1017, %v1057
    %v1060 = vrot.slane %v490, 2
    %1061 = vrot.lane.b32.xlu0 %v1060, 96
    %v1062 = vpop.permute.xlu0 %1061
    %v1064 = vadd.f32 %v794, %v1062
    %1066 = vrot.lane.b32.xlu0 %v1064, 64
    %v1067 = vpop.permute.xlu0 %1066
    %1069 = vst.msk [vmem:[#allocation2 + $0x8] sm:$0xc] %vm1028, %v1067
    %1070 = vrot.lane.b32.xlu0 %v487, 96
    %v1071 = vpop.permute.xlu0 %1070
    %v1073 = vadd.f32 %v898, %v1071
    %1075 = vrot.lane.b32.xlu0 %v1073, 64
    %v1076 = vpop.permute.xlu0 %1075
    %1078 = vst.msk [vmem:[#allocation2 + $0x8] sm:$0x30] %vm1038, %v1076
    %v1079 = vrot.slane %v283, 2
    %1080 = vrot.lane.b32.xlu0 %v1079, 96
    %v1081 = vpop.permute.xlu0 %1080
    %v1083 = vadd.f32 %v1002, %v1081
    %1085 = vrot.lane.b32.xlu0 %v1083, 64
    %v1086 = vpop.permute.xlu0 %1085
    %1088 = vst.msk [vmem:[#allocation2 + $0x8] sm:$0xc0] %vm1049, %v1086
    %v1089 = vld [vmem:[#allocation2] sm:$0xff]
    %v1090 = vld [vmem:[#allocation2 + $0x8] sm:$0xff]
    %v1091 = vld [vmem:[%s2] sm:$0xff]
    %v1092 = vld [vmem:[%s2 + $0x8] sm:$0xff]
    %v1093 = vld [vmem:[%s8] sm:$0xff]
    %v1094 = vld [vmem:[%s8 + $0x8] sm:$0xff]
    %v1095 = vld [vmem:[%s8 + $0x10] sm:$0xff]
    %v1096 = vld [vmem:[%s8 + $0x18] sm:$0xff]
    %v1097 = vld [vmem:[%s9] sm:$0x1]
    %v1099 = vlaneseq
    %v1100 = vshrl.u32 %v1099, 7
    %v1101 = vsub.s32 0, %v1100
    %v1102 = vrot.slane %v1097, %v1101
    %v1105 = vrot.slane %v1007, 6
    %1106 = vrot.lane.b32.xlu0 %v1105, 64
    %v1107 = vpop.permute.xlu0 %1106
    %vm1108 = vcmask 261120
    %v1109 = vsel %vm1108, %v1107, 0
    %1111 = vmatprep.subr.mxu0 0.0
    %1112 = vmatpush1.msra.mxu0 %v1093
    %1113 = vmatprep.subr.mxu0 0.0
    %1114 = vmatpush1.msra.mxu0 %v1094
    %1115 = vmatprep.subr.mxu0 0.0
    %1116 = vmatpush1.msra.mxu0 %v1095
    %1117 = vmatprep.subr.mxu0 0.0
    %1118 = vmatpush1.msra.mxu0 %v1096
    %1119 = vmatprep.subr.mxu0 0.0
    %1120 = vmatpush1.msra.mxu0 0.0
    %1121 = vmatprep.subr.mxu0 0.0
    %1122 = vmatpush1.msra.mxu0 0.0
    %1123 = vmatprep.subr.mxu0 0.0
    %1124 = vmatpush1.msra.mxu0 0.0
    %1125 = vmatprep.subr.mxu0 0.0
    %1126 = vmatpush1.msra.mxu0 0.0
    %1127 = vmatprep.subr.mxu0 0.0
    %1128 = vmatpush1.msra.mxu0 0.0
    %1129 = vmatprep.subr.mxu0 0.0
    %1130 = vmatpush1.msra.mxu0 0.0
    %1131 = vmatprep.subr.mxu0 0.0
    %1132 = vmatpush1.msra.mxu0 0.0
    %1133 = vmatprep.subr.mxu0 0.0
    %1134 = vmatpush1.msra.mxu0 0.0
    %1135 = vmatprep.subr.mxu0 0.0
    %1136 = vmatpush1.msra.mxu0 0.0
    %1137 = vmatprep.subr.mxu0 0.0
    %1138 = vmatpush1.msra.mxu0 0.0
    %1139 = vmatprep.subr.mxu0 0.0
    %1140 = vmatpush1.msra.mxu0 0.0
    %1141 = vmatprep.subr.mxu0 0.0
    %1142 = vmatpush1.msra.mxu0 0.0
    %1143 = vmatprep.subr.mxu0 0.0
    %1144 = vmatpush1.msra.mxu0 0.0
    %1145 = vmatprep.subr.mxu0 0.0
    %1146 = vmatpush1.msra.mxu0 0.0
    %1147 = vmatprep.subr.mxu0 0.0
    %1148 = vmatpush1.msra.mxu0 0.0
    %1149 = vmatprep.subr.mxu0 0.0
    %1150 = vmatpush1.msra.mxu0 0.0
    %1151 = vmatprep.subr.mxu0 0.0
    %1152 = vmatpush1.msra.mxu0 0.0
    %1153 = vmatprep.subr.mxu0 0.0
    %1154 = vmatpush1.msra.mxu0 0.0
    %1155 = vmatprep.subr.mxu0 0.0
    %1156 = vmatpush1.msra.mxu0 0.0
    %1157 = vmatprep.subr.mxu0 0.0
    %1158 = vmatpush1.msra.mxu0 0.0
    %1159 = vmatprep.subr.mxu0 0.0
    %1160 = vmatpush1.msra.mxu0 0.0
    %1161 = vmatprep.subr.mxu0 0.0
    %1162 = vmatpush1.msra.mxu0 0.0
    %1163 = vmatprep.subr.mxu0 0.0
    %1164 = vmatpush1.msra.mxu0 0.0
    %1165 = vmatprep.subr.mxu0 0.0
    %1166 = vmatpush1.msra.mxu0 0.0
    %1167 = vmatprep.subr.mxu0 0.0
    %1168 = vmatpush1.msra.mxu0 0.0
    %1169 = vmatprep.subr.mxu0 0.0
    %1170 = vmatpush1.msra.mxu0 0.0
    %1171 = vmatprep.subr.mxu0 0.0
    %1172 = vmatpush1.msra.mxu0 0.0
    %1173 = vmatprep.subr.mxu0 0.0
    %1174 = vmatpush1.msra.mxu0 0.0
    %1175 = vmatprep.mubr.f32.mxu0 0.0
    %1176 = vmatmul.mubr.f32.gmra.mrb[0].mxu0 %v1109
    %v1177 = vpop.f32.mrb[0].mxu0
    %v1178 = vadd.f32 %v1102, %v1177
    %v1179 = vpop.f32.mrb[0].mxu0
    %1180 = vdwg.mxu0
    %v1181 = vld [vmem:[%s7] sm:$0xff]
    %v1182 = vld [vmem:[%s7 + $0x8] sm:$0xff]
    %v1183 = vld [vmem:[%s7 + $0x10] sm:$0xff]
    %v1184 = vld [vmem:[%s7 + $0x18] sm:$0xff]
    %vm1185 = vcmask 15360
    %v1187 = vsel %vm1185, %v1091, 0
    %v1190 = vsel %vm1185, %v1092, 0
    %vm1192 = vcmask 1041408
    %v1194 = vsel %vm1192, %v1178, 0
    %1196 = vmatprep.subr.mxu0 0.0
    %1197 = vmatpush1.msra.mxu0 %v1194
    %1198 = vmatprep.subr.mxu0 0.0
    %1199 = vmatpush1.msra.mxu0 0.0
    %1200 = vmatprep.subr.mxu0 0.0
    %1201 = vmatpush1.msra.mxu0 0.0
    %1202 = vmatprep.subr.mxu0 0.0
    %1203 = vmatpush1.msra.mxu0 0.0
    %1204 = vmatprep.subr.mxu0 0.0
    %1205 = vmatpush1.msra.mxu0 0.0
    %1206 = vmatprep.subr.mxu0 0.0
    %1207 = vmatpush1.msra.mxu0 0.0
    %1208 = vmatprep.subr.mxu0 0.0
    %1209 = vmatpush1.msra.mxu0 0.0
    %1210 = vmatprep.subr.mxu0 0.0
    %1211 = vmatpush1.msra.mxu0 0.0
    %1212 = vmatprep.subr.mxu0 0.0
    %1213 = vmatpush1.msra.mxu0 0.0
    %1214 = vmatprep.subr.mxu0 0.0
    %1215 = vmatpush1.msra.mxu0 0.0
    %1216 = vmatprep.subr.mxu0 0.0
    %1217 = vmatpush1.msra.mxu0 0.0
    %1218 = vmatprep.subr.mxu0 0.0
    %1219 = vmatpush1.msra.mxu0 0.0
    %1220 = vmatprep.subr.mxu0 0.0
    %1221 = vmatpush1.msra.mxu0 0.0
    %1222 = vmatprep.subr.mxu0 0.0
    %1223 = vmatpush1.msra.mxu0 0.0
    %1224 = vmatprep.subr.mxu0 0.0
    %1225 = vmatpush1.msra.mxu0 0.0
    %1226 = vmatprep.subr.mxu0 0.0
    %1227 = vmatpush1.msra.mxu0 0.0
    %1228 = vmatprep.subr.mxu0 0.0
    %1229 = vmatpush1.msra.mxu0 0.0
    %1230 = vmatprep.subr.mxu0 0.0
    %1231 = vmatpush1.msra.mxu0 0.0
    %1232 = vmatprep.subr.mxu0 0.0
    %1233 = vmatpush1.msra.mxu0 0.0
    %1234 = vmatprep.subr.mxu0 0.0
    %1235 = vmatpush1.msra.mxu0 0.0
    %1236 = vmatprep.subr.mxu0 0.0
    %1237 = vmatpush1.msra.mxu0 0.0
    %1238 = vmatprep.subr.mxu0 0.0
    %1239 = vmatpush1.msra.mxu0 0.0
    %1240 = vmatprep.subr.mxu0 0.0
    %1241 = vmatpush1.msra.mxu0 0.0
    %1242 = vmatprep.subr.mxu0 0.0
    %1243 = vmatpush1.msra.mxu0 0.0
    %1244 = vmatprep.subr.mxu0 0.0
    %1245 = vmatpush1.msra.mxu0 0.0
    %1246 = vmatprep.subr.mxu0 0.0
    %1247 = vmatpush1.msra.mxu0 0.0
    %1248 = vmatprep.subr.mxu0 0.0
    %1249 = vmatpush1.msra.mxu0 0.0
    %1250 = vmatprep.subr.mxu0 0.0
    %1251 = vmatpush1.msra.mxu0 0.0
    %1252 = vmatprep.subr.mxu0 0.0
    %1253 = vmatpush1.msra.mxu0 0.0
    %1254 = vmatprep.subr.mxu0 0.0
    %1255 = vmatpush1.msra.mxu0 0.0
    %1256 = vmatprep.subr.mxu0 0.0
    %1257 = vmatpush1.msra.mxu0 0.0
    %1258 = vmatprep.subr.mxu0 0.0
    %1259 = vmatpush1.msra.mxu0 0.0
    %1260 = vmatprep.mubr.f32.mxu0 0.0
    %1261 = vmatmul.mubr.f32.gmra.mrb[0].mxu0 %v1187
    %v1262 = vpop.f32.mrb[0].mxu0
    %v1263 = vadd.f32 0.0, %v1262
    %v1264 = vpop.f32.mrb[0].mxu0
    %1265 = vmatprep.mubr.f32.mxu0 0.0
    %1266 = vmatmul.mubr.f32.gmra.mrb[0].mxu0 %v1190
    %v1267 = vpop.f32.mrb[0].mxu0
    %v1268 = vadd.f32 0.0, %v1267
    %v1269 = vpop.f32.mrb[0].mxu0
    %1270 = vdwg.mxu0
    %v1272 = vsel %vm1108, %v1089, 0
    %v1275 = vsel %vm1108, %v1090, 0
    %1277 = vmatprep.subr.mxu0 0.0
    %1278 = vmatpush1.msra.mxu0 %v1181
    %1279 = vmatprep.subr.mxu0 0.0
    %1280 = vmatpush1.msra.mxu0 %v1182
    %1281 = vmatprep.subr.mxu0 0.0
    %1282 = vmatpush1.msra.mxu0 %v1183
    %1283 = vmatprep.subr.mxu0 0.0
    %1284 = vmatpush1.msra.mxu0 %v1184
    %1285 = vmatprep.subr.mxu0 0.0
    %1286 = vmatpush1.msra.mxu0 0.0
    %1287 = vmatprep.subr.mxu0 0.0
    %1288 = vmatpush1.msra.mxu0 0.0
    %1289 = vmatprep.subr.mxu0 0.0
    %1290 = vmatpush1.msra.mxu0 0.0
    %1291 = vmatprep.subr.mxu0 0.0
    %1292 = vmatpush1.msra.mxu0 0.0
    %1293 = vmatprep.subr.mxu0 0.0
    %1294 = vmatpush1.msra.mxu0 0.0
    %1295 = vmatprep.subr.mxu0 0.0
    %1296 = vmatpush1.msra.mxu0 0.0
    %1297 = vmatprep.subr.mxu0 0.0
    %1298 = vmatpush1.msra.mxu0 0.0
    %1299 = vmatprep.subr.mxu0 0.0
    %1300 = vmatpush1.msra.mxu0 0.0
    %1301 = vmatprep.subr.mxu0 0.0
    %1302 = vmatpush1.msra.mxu0 0.0
    %1303 = vmatprep.subr.mxu0 0.0
    %1304 = vmatpush1.msra.mxu0 0.0
    %1305 = vmatprep.subr.mxu0 0.0
    %1306 = vmatpush1.msra.mxu0 0.0
    %1307 = vmatprep.subr.mxu0 0.0
    %1308 = vmatpush1.msra.mxu0 0.0
    %1309 = vmatprep.subr.mxu0 0.0
    %1310 = vmatpush1.msra.mxu0 0.0
    %1311 = vmatprep.subr.mxu0 0.0
    %1312 = vmatpush1.msra.mxu0 0.0
    %1313 = vmatprep.subr.mxu0 0.0
    %1314 = vmatpush1.msra.mxu0 0.0
    %1315 = vmatprep.subr.mxu0 0.0
    %1316 = vmatpush1.msra.mxu0 0.0
    %1317 = vmatprep.subr.mxu0 0.0
    %1318 = vmatpush1.msra.mxu0 0.0
    %1319 = vmatprep.subr.mxu0 0.0
    %1320 = vmatpush1.msra.mxu0 0.0
    %1321 = vmatprep.subr.mxu0 0.0
    %1322 = vmatpush1.msra.mxu0 0.0
    %1323 = vmatprep.subr.mxu0 0.0
    %1324 = vmatpush1.msra.mxu0 0.0
    %1325 = vmatprep.subr.mxu0 0.0
    %1326 = vmatpush1.msra.mxu0 0.0
    %1327 = vmatprep.subr.mxu0 0.0
    %1328 = vmatpush1.msra.mxu0 0.0
    %1329 = vmatprep.subr.mxu0 0.0
    %1330 = vmatpush1.msra.mxu0 0.0
    %1331 = vmatprep.subr.mxu0 0.0
    %1332 = vmatpush1.msra.mxu0 0.0
    %1333 = vmatprep.subr.mxu0 0.0
    %1334 = vmatpush1.msra.mxu0 0.0
    %1335 = vmatprep.subr.mxu0 0.0
    %1336 = vmatpush1.msra.mxu0 0.0
    %1337 = vmatprep.subr.mxu0 0.0
    %1338 = vmatpush1.msra.mxu0 0.0
    %1339 = vmatprep.subr.mxu0 0.0
    %1340 = vmatpush1.msra.mxu0 0.0
    %1341 = vmatprep.mubr.f32.mxu0 0.0
    %1342 = vmatmul.mubr.f32.gmra.mrb[0].mxu0 %v1272
    %v1343 = vpop.f32.mrb[0].mxu0
    %v1344 = vadd.f32 %v1263, %v1343
    %v1345 = vpop.f32.mrb[0].mxu0
    %1346 = vmatprep.mubr.f32.mxu0 0.0
    %1347 = vmatmul.mubr.f32.gmra.mrb[0].mxu0 %v1275
    %v1348 = vpop.f32.mrb[0].mxu0
    %v1349 = vadd.f32 %v1268, %v1348
    %v1350 = vpop.f32.mrb[0].mxu0
    %1351 = vdwg.mxu0
    %v1352 = vtanh.pop %v1344
    %v1353 = vtanh.pop %v1349
    %v1354 = vld [vmem:[%s10] sm:$0xff]
    %v1355 = vld [vmem:[%s10 + $0x8] sm:$0xff]
    %v1356 = vld [vmem:[%s10 + $0x10] sm:$0xff]
    %v1357 = vld [vmem:[%s10 + $0x18] sm:$0xff]
    %v1359 = vsel %vm1108, %v1352, 0
    %v1362 = vsel %vm1108, %v1353, 0
    %1364 = vmatprep.subr.mxu0 0.0
    %1365 = vmatpush1.msra.mxu0 %v1354
    %1366 = vmatprep.subr.mxu0 0.0
    %1367 = vmatpush1.msra.mxu0 %v1355
    %1368 = vmatprep.subr.mxu0 0.0
    %1369 = vmatpush1.msra.mxu0 %v1356
    %1370 = vmatprep.subr.mxu0 0.0
    %1371 = vmatpush1.msra.mxu0 %v1357
    %1372 = vmatprep.subr.mxu0 0.0
    %1373 = vmatpush1.msra.mxu0 0.0
    %1374 = vmatprep.subr.mxu0 0.0
    %1375 = vmatpush1.msra.mxu0 0.0
    %1376 = vmatprep.subr.mxu0 0.0
    %1377 = vmatpush1.msra.mxu0 0.0
    %1378 = vmatprep.subr.mxu0 0.0
    %1379 = vmatpush1.msra.mxu0 0.0
    %1380 = vmatprep.subr.mxu0 0.0
    %1381 = vmatpush1.msra.mxu0 0.0
    %1382 = vmatprep.subr.mxu0 0.0
    %1383 = vmatpush1.msra.mxu0 0.0
    %1384 = vmatprep.subr.mxu0 0.0
    %1385 = vmatpush1.msra.mxu0 0.0
    %1386 = vmatprep.subr.mxu0 0.0
    %1387 = vmatpush1.msra.mxu0 0.0
    %1388 = vmatprep.subr.mxu0 0.0
    %1389 = vmatpush1.msra.mxu0 0.0
    %1390 = vmatprep.subr.mxu0 0.0
    %1391 = vmatpush1.msra.mxu0 0.0
    %1392 = vmatprep.subr.mxu0 0.0
    %1393 = vmatpush1.msra.mxu0 0.0
    %1394 = vmatprep.subr.mxu0 0.0
    %1395 = vmatpush1.msra.mxu0 0.0
    %1396 = vmatprep.subr.mxu0 0.0
    %1397 = vmatpush1.msra.mxu0 0.0
    %1398 = vmatprep.subr.mxu0 0.0
    %1399 = vmatpush1.msra.mxu0 0.0
    %1400 = vmatprep.subr.mxu0 0.0
    %1401 = vmatpush1.msra.mxu0 0.0
    %1402 = vmatprep.subr.mxu0 0.0
    %1403 = vmatpush1.msra.mxu0 0.0
    %1404 = vmatprep.subr.mxu0 0.0
    %1405 = vmatpush1.msra.mxu0 0.0
    %1406 = vmatprep.subr.mxu0 0.0
    %1407 = vmatpush1.msra.mxu0 0.0
    %1408 = vmatprep.subr.mxu0 0.0
    %1409 = vmatpush1.msra.mxu0 0.0
    %1410 = vmatprep.subr.mxu0 0.0
    %1411 = vmatpush1.msra.mxu0 0.0
    %1412 = vmatprep.subr.mxu0 0.0
    %1413 = vmatpush1.msra.mxu0 0.0
    %1414 = vmatprep.subr.mxu0 0.0
    %1415 = vmatpush1.msra.mxu0 0.0
    %1416 = vmatprep.subr.mxu0 0.0
    %1417 = vmatpush1.msra.mxu0 0.0
    %1418 = vmatprep.subr.mxu0 0.0
    %1419 = vmatpush1.msra.mxu0 0.0
    %1420 = vmatprep.subr.mxu0 0.0
    %1421 = vmatpush1.msra.mxu0 0.0
    %1422 = vmatprep.subr.mxu0 0.0
    %1423 = vmatpush1.msra.mxu0 0.0
    %1424 = vmatprep.subr.mxu0 0.0
    %1425 = vmatpush1.msra.mxu0 0.0
    %1426 = vmatprep.subr.mxu0 0.0
    %1427 = vmatpush1.msra.mxu0 0.0
    %1428 = vmatprep.mubr.f32.mxu0 0.0
    %1429 = vmatmul.mubr.f32.gmra.mrb[0].mxu0 %v1359
    %v1430 = vpop.f32.mrb[0].mxu0
    %v1431 = vadd.f32 0.0, %v1430
    %v1432 = vpop.f32.mrb[0].mxu0
    %1433 = vmatprep.mubr.f32.mxu0 0.0
    %1434 = vmatmul.mubr.f32.gmra.mrb[0].mxu0 %v1362
    %v1435 = vpop.f32.mrb[0].mxu0
    %v1436 = vadd.f32 0.0, %v1435
    %v1437 = vpop.f32.mrb[0].mxu0
    %1438 = vdwg.mxu0
    %v1439 = vld [vmem:[%s1] sm:$0xff]
    %v1440 = vld [vmem:[%s1 + $0x8] sm:$0xff]
    %vm1441 = vcmp.eq.f32.partialorder %v1439, 0.0
    %vm1442 = vcmp.eq.f32.partialorder %v1440, 0.0
    %v1443 = vsel %vm1441, -1e+09, %v1431
    %v1444 = vsel %vm1442, -1e+09, %v1436
    %vm1445 = vcmask 7168
    %v1446 = vsel %vm1445, %v1443, -inf
    %v1447 = vsel %vm1445, %v1444, -inf
    %v1448 = vmax.f32 %v1446, %v1447
    %v1449 = vrot.slane %v1448, 4
    %v1450 = vmax.f32 %v1448, %v1449
    %v1451 = vrot.slane %v1450, 2
    %v1452 = vmax.f32 %v1450, %v1451
    %v1453 = vrot.slane %v1452, 1
    %v1454 = vmax.f32 %v1452, %v1453
    %v1455 = vsub.f32 %v1443, %v1454
    %v1456 = vsub.f32 %v1444, %v1454
    %v1457 = vmul.f32 %v1455, 1.442695
    %v1458 = vpow.pop %v1457
    %v1459 = vmul.f32 %v1456, 1.442695
    %v1460 = vpow.pop %v1459
    %vm1461 = vcmask 130048
    %v1462 = vsel %vm1461, %v1091, 0
    %v1464 = vsel %vm1461, %v1092, 0
    %1466 = vmatprep.subr.mxu0 0.0
    %1467 = vmatpush1.msra.mxu0 %v1458
    %1468 = vmatprep.subr.mxu0 0.0
    %1469 = vmatpush1.msra.mxu0 %v1460
    %1470 = vmatprep.subr.mxu0 0.0
    %1471 = vmatpush1.msra.mxu0 0.0
    %1472 = vmatprep.subr.mxu0 0.0
    %1473 = vmatpush1.msra.mxu0 0.0
    %1474 = vmatprep.subr.mxu0 0.0
    %1475 = vmatpush1.msra.mxu0 0.0
    %1476 = vmatprep.subr.mxu0 0.0
    %1477 = vmatpush1.msra.mxu0 0.0
    %1478 = vmatprep.subr.mxu0 0.0
    %1479 = vmatpush1.msra.mxu0 0.0
    %1480 = vmatprep.subr.mxu0 0.0
    %1481 = vmatpush1.msra.mxu0 0.0
    %1482 = vmatprep.subr.mxu0 0.0
    %1483 = vmatpush1.msra.mxu0 0.0
    %1484 = vmatprep.subr.mxu0 0.0
    %1485 = vmatpush1.msra.mxu0 0.0
    %1486 = vmatprep.subr.mxu0 0.0
    %1487 = vmatpush1.msra.mxu0 0.0
    %1488 = vmatprep.subr.mxu0 0.0
    %1489 = vmatpush1.msra.mxu0 0.0
    %1490 = vmatprep.subr.mxu0 0.0
    %1491 = vmatpush1.msra.mxu0 0.0
    %1492 = vmatprep.subr.mxu0 0.0
    %1493 = vmatpush1.msra.mxu0 0.0
    %1494 = vmatprep.subr.mxu0 0.0
    %1495 = vmatpush1.msra.mxu0 0.0
    %1496 = vmatprep.subr.mxu0 0.0
    %1497 = vmatpush1.msra.mxu0 0.0
    %1498 = vmatprep.subr.mxu0 0.0
    %1499 = vmatpush1.msra.mxu0 0.0
    %1500 = vmatprep.subr.mxu0 0.0
    %1501 = vmatpush1.msra.mxu0 0.0
    %1502 = vmatprep.subr.mxu0 0.0
    %1503 = vmatpush1.msra.mxu0 0.0
    %1504 = vmatprep.subr.mxu0 0.0
    %1505 = vmatpush1.msra.mxu0 0.0
    %1506 = vmatprep.subr.mxu0 0.0
    %1507 = vmatpush1.msra.mxu0 0.0
    %1508 = vmatprep.subr.mxu0 0.0
    %1509 = vmatpush1.msra.mxu0 0.0
    %1510 = vmatprep.subr.mxu0 0.0
    %1511 = vmatpush1.msra.mxu0 0.0
    %1512 = vmatprep.subr.mxu0 0.0
    %1513 = vmatpush1.msra.mxu0 0.0
    %1514 = vmatprep.subr.mxu0 0.0
    %1515 = vmatpush1.msra.mxu0 0.0
    %1516 = vmatprep.subr.mxu0 0.0
    %1517 = vmatpush1.msra.mxu0 0.0
    %1518 = vmatprep.subr.mxu0 0.0
    %1519 = vmatpush1.msra.mxu0 0.0
    %1520 = vmatprep.subr.mxu0 0.0
    %1521 = vmatpush1.msra.mxu0 0.0
    %1522 = vmatprep.subr.mxu0 0.0
    %1523 = vmatpush1.msra.mxu0 0.0
    %1524 = vmatprep.subr.mxu0 0.0
    %1525 = vmatpush1.msra.mxu0 0.0
    %1526 = vmatprep.subr.mxu0 0.0
    %1527 = vmatpush1.msra.mxu0 0.0
    %1528 = vmatprep.subr.mxu0 0.0
    %1529 = vmatpush1.msra.mxu0 0.0
    %1530 = vmatprep.mubr.f32.mxu0 0.0
    %1531 = vmatmul.mubr.f32.gmra.mrb[0].mxu0 %v1462
    %v1532 = vpop.f32.mrb[0].mxu0
    %v1533 = vadd.f32 0.0, %v1532
    %v1534 = vpop.f32.mrb[0].mxu0
    %1535 = vmatprep.mubr.f32.mxu0 0.0
    %1536 = vmatmul.mubr.f32.gmra.mrb[0].mxu0 %v1464
    %v1537 = vpop.f32.mrb[0].mxu0
    %v1538 = vadd.f32 0.0, %v1537
    %v1539 = vpop.f32.mrb[0].mxu0
    %1540 = vdwg.mxu0
    %v1541 = vrcp.pop %v1533
    %v1542 = vmul.f32 %v1458, %v1541
    %v1543 = vrcp.pop %v1538
    %v1544 = vmul.f32 %v1460, %v1543
    %1546 = vset.pattern.permute.xlu0 0
    %1547 = vperm.xlu0 %1546, %v1542
    %v1548 = vpop.permute.xlu0 %1547
    %1551 = vset.pattern.permute.xlu0 0
    %1552 = vperm.xlu0 %1551, %v1544
    %v1553 = vpop.permute.xlu0 %1552
    %v1555 = vmul.f32 %v1089, %v1548
    %v1556 = vmul.f32 %v1090, %v1553
    %v1557 = vld [vmem:[%s11] sm:$0xff]
    %v1558 = vld [vmem:[%s11 + $0x8] sm:$0xff]
    %v1559 = vld [vmem:[%s11 + $0x10] sm:$0xff]
    %v1560 = vld [vmem:[%s11 + $0x18] sm:$0xff]
    %v1561 = vld [vmem:[%s12] sm:$0x1]
    %v1563 = vlaneseq
    %v1564 = vshrl.u32 %v1563, 7
    %v1565 = vsub.s32 0, %v1564
    %v1566 = vrot.slane %v1561, %v1565
    %v1569 = vsel %vm1108, %v1555, 0
    %v1572 = vsel %vm1108, %v1556, 0
    %1574 = vmatprep.subr.mxu0 0.0
    %1575 = vmatpush1.msra.mxu0 %v1557
    %1576 = vmatprep.subr.mxu0 0.0
    %1577 = vmatpush1.msra.mxu0 %v1558
    %1578 = vmatprep.subr.mxu0 0.0
    %1579 = vmatpush1.msra.mxu0 %v1559
    %1580 = vmatprep.subr.mxu0 0.0
    %1581 = vmatpush1.msra.mxu0 %v1560
    %1582 = vmatprep.subr.mxu0 0.0
    %1583 = vmatpush1.msra.mxu0 0.0
    %1584 = vmatprep.subr.mxu0 0.0
    %1585 = vmatpush1.msra.mxu0 0.0
    %1586 = vmatprep.subr.mxu0 0.0
    %1587 = vmatpush1.msra.mxu0 0.0
    %1588 = vmatprep.subr.mxu0 0.0
    %1589 = vmatpush1.msra.mxu0 0.0
    %1590 = vmatprep.subr.mxu0 0.0
    %1591 = vmatpush1.msra.mxu0 0.0
    %1592 = vmatprep.subr.mxu0 0.0
    %1593 = vmatpush1.msra.mxu0 0.0
    %1594 = vmatprep.subr.mxu0 0.0
    %1595 = vmatpush1.msra.mxu0 0.0
    %1596 = vmatprep.subr.mxu0 0.0
    %1597 = vmatpush1.msra.mxu0 0.0
    %1598 = vmatprep.subr.mxu0 0.0
    %1599 = vmatpush1.msra.mxu0 0.0
    %1600 = vmatprep.subr.mxu0 0.0
    %1601 = vmatpush1.msra.mxu0 0.0
    %1602 = vmatprep.subr.mxu0 0.0
    %1603 = vmatpush1.msra.mxu0 0.0
    %1604 = vmatprep.subr.mxu0 0.0
    %1605 = vmatpush1.msra.mxu0 0.0
    %1606 = vmatprep.subr.mxu0 0.0
    %1607 = vmatpush1.msra.mxu0 0.0
    %1608 = vmatprep.subr.mxu0 0.0
    %1609 = vmatpush1.msra.mxu0 0.0
    %1610 = vmatprep.subr.mxu0 0.0
    %1611 = vmatpush1.msra.mxu0 0.0
    %1612 = vmatprep.subr.mxu0 0.0
    %1613 = vmatpush1.msra.mxu0 0.0
    %1614 = vmatprep.subr.mxu0 0.0
    %1615 = vmatpush1.msra.mxu0 0.0
    %1616 = vmatprep.subr.mxu0 0.0
    %1617 = vmatpush1.msra.mxu0 0.0
    %1618 = vmatprep.subr.mxu0 0.0
    %1619 = vmatpush1.msra.mxu0 0.0
    %1620 = vmatprep.subr.mxu0 0.0
    %1621 = vmatpush1.msra.mxu0 0.0
    %1622 = vmatprep.subr.mxu0 0.0
    %1623 = vmatpush1.msra.mxu0 0.0
    %1624 = vmatprep.subr.mxu0 0.0
    %1625 = vmatpush1.msra.mxu0 0.0
    %1626 = vmatprep.subr.mxu0 0.0
    %1627 = vmatpush1.msra.mxu0 0.0
    %1628 = vmatprep.subr.mxu0 0.0
    %1629 = vmatpush1.msra.mxu0 0.0
    %1630 = vmatprep.subr.mxu0 0.0
    %1631 = vmatpush1.msra.mxu0 0.0
    %1632 = vmatprep.subr.mxu0 0.0
    %1633 = vmatpush1.msra.mxu0 0.0
    %1634 = vmatprep.subr.mxu0 0.0
    %1635 = vmatpush1.msra.mxu0 0.0
    %1636 = vmatprep.subr.mxu0 0.0
    %1637 = vmatpush1.msra.mxu0 0.0
    %1638 = vmatprep.mubr.f32.mxu0 0.0
    %1639 = vmatmul.mubr.f32.gmra.mrb[0].mxu0 %v1569
    %v1640 = vpop.f32.mrb[0].mxu0
    %v1641 = vadd.f32 %v1566, %v1640
    %v1642 = vpop.f32.mrb[0].mxu0
    %1643 = vmatprep.mubr.f32.mxu0 0.0
    %1644 = vmatmul.mubr.f32.gmra.mrb[0].mxu0 %v1572
    %v1645 = vpop.f32.mrb[0].mxu0
    %v1646 = vadd.f32 %v1566, %v1645
    %v1647 = vpop.f32.mrb[0].mxu0
    %1648 = vdwg.mxu0
    %v1649 = vld [vmem:[%s13] sm:$0xff]
    %v1650 = vld [vmem:[%s13 + $0x8] sm:$0xff]
    %v1651 = vld [vmem:[%s13 + $0x10] sm:$0xff]
    %v1652 = vld [vmem:[%s13 + $0x18] sm:$0xff]
    %v1653 = vld [vmem:[%s14] sm:$0x1]
    %1654 = vmatprep.subr.mxu0 0.0
    %1655 = vmatpush1.msra.mxu0 %v1649
    %1656 = vmatprep.subr.mxu0 0.0
    %1657 = vmatpush1.msra.mxu0 %v1650
    %1658 = vmatprep.subr.mxu0 0.0
    %1659 = vmatpush1.msra.mxu0 %v1651
    %1660 = vmatprep.subr.mxu0 0.0
    %1661 = vmatpush1.msra.mxu0 %v1652
    %1662 = vmatprep.subr.mxu0 0.0
    %1663 = vmatpush1.msra.mxu0 0.0
    %1664 = vmatprep.subr.mxu0 0.0
    %1665 = vmatpush1.msra.mxu0 0.0
    %1666 = vmatprep.subr.mxu0 0.0
    %1667 = vmatpush1.msra.mxu0 0.0
    %1668 = vmatprep.subr.mxu0 0.0
    %1669 = vmatpush1.msra.mxu0 0.0
    %1670 = vmatprep.subr.mxu0 0.0
    %1671 = vmatpush1.msra.mxu0 0.0
    %1672 = vmatprep.subr.mxu0 0.0
    %1673 = vmatpush1.msra.mxu0 0.0
    %1674 = vmatprep.subr.mxu0 0.0
    %1675 = vmatpush1.msra.mxu0 0.0
    %1676 = vmatprep.subr.mxu0 0.0
    %1677 = vmatpush1.msra.mxu0 0.0
    %1678 = vmatprep.subr.mxu0 0.0
    %1679 = vmatpush1.msra.mxu0 0.0
    %1680 = vmatprep.subr.mxu0 0.0
    %1681 = vmatpush1.msra.mxu0 0.0
    %1682 = vmatprep.subr.mxu0 0.0
    %1683 = vmatpush1.msra.mxu0 0.0
    %1684 = vmatprep.subr.mxu0 0.0
    %1685 = vmatpush1.msra.mxu0 0.0
    %1686 = vmatprep.subr.mxu0 0.0
    %1687 = vmatpush1.msra.mxu0 0.0
    %1688 = vmatprep.subr.mxu0 0.0
    %1689 = vmatpush1.msra.mxu0 0.0
    %1690 = vmatprep.subr.mxu0 0.0
    %1691 = vmatpush1.msra.mxu0 0.0
    %1692 = vmatprep.subr.mxu0 0.0
    %1693 = vmatpush1.msra.mxu0 0.0
    %1694 = vmatprep.subr.mxu0 0.0
    %1695 = vmatpush1.msra.mxu0 0.0
    %1696 = vmatprep.subr.mxu0 0.0
    %1697 = vmatpush1.msra.mxu0 0.0
    %1698 = vmatprep.subr.mxu0 0.0
    %1699 = vmatpush1.msra.mxu0 0.0
    %1700 = vmatprep.subr.mxu0 0.0
    %1701 = vmatpush1.msra.mxu0 0.0
    %1702 = vmatprep.subr.mxu0 0.0
    %1703 = vmatpush1.msra.mxu0 0.0
    %1704 = vmatprep.subr.mxu0 0.0
    %1705 = vmatpush1.msra.mxu0 0.0
    %1706 = vmatprep.subr.mxu0 0.0
    %1707 = vmatpush1.msra.mxu0 0.0
    %1708 = vmatprep.subr.mxu0 0.0
    %1709 = vmatpush1.msra.mxu0 0.0
    %1710 = vmatprep.subr.mxu0 0.0
    %1711 = vmatpush1.msra.mxu0 0.0
    %1712 = vmatprep.subr.mxu0 0.0
    %1713 = vmatpush1.msra.mxu0 0.0
    %1714 = vmatprep.subr.mxu0 0.0
    %1715 = vmatpush1.msra.mxu0 0.0
    %1716 = vmatprep.subr.mxu0 0.0
    %1717 = vmatpush1.msra.mxu0 0.0
    %1718 = vmatprep.mubr.f32.mxu0 0.0
    %1719 = vmatmul.mubr.f32.gmra.mrb[0].mxu0 %v1109
    %v1720 = vpop.f32.mrb[0].mxu0
    %v1721 = vadd.f32 0.0, %v1720
    %v1722 = vpop.f32.mrb[0].mxu0
    %1723 = vdwg.mxu0
    %v1724 = vadd.f32 %v1641, %v1721
    %v1725 = vxor.u32 %v1724, 2147483648
    %v1726 = vmul.f32 %v1725, 1.442695
    %v1727 = vpow.pop %v1726
    %v1728 = vadd.f32 %v1727, 1.0
    %v1729 = vrcp.pop %v1728
    %v1730 = vmul.f32 1.0, %v1729
    %v1732 = vlaneseq
    %v1733 = vshrl.u32 %v1732, 7
    %v1734 = vsub.s32 0, %v1733
    %v1735 = vrot.slane %v1653, %v1734
    %1736 = vrot.lane.b32.xlu0 %v1735, 64
    %v1737 = vpop.permute.xlu0 %1736
    %v1739 = vadd.f32 %v1721, %v1737
    %1741 = vrot.lane.b32.xlu0 %v1739, 64
    %v1742 = vpop.permute.xlu0 %1741
    %v1744 = vmul.f32 %v1730, %v1742
    %1746 = vrot.lane.b32.xlu0 %v1744, 64
    %v1747 = vpop.permute.xlu0 %1746
    %v1749 = vadd.f32 %v1641, %v1747
    %v1750 = vtanh.pop %v1749
    %v1751 = vsub.f32 1.0, %v1730
    %1753 = vrot.lane.b32.xlu0 %v1750, 96
    %v1754 = vpop.permute.xlu0 %1753
    %v1756 = vmul.f32 %v1751, %v1754
    %1757 = vrot.lane.b32.xlu0 %v1105, 96
    %v1758 = vpop.permute.xlu0 %1757
    %v1760 = vmul.f32 %v1730, %v1758
    %v1761 = vadd.f32 %v1756, %v1760
    %1763 = vrot.lane.b32.xlu0 %v1761, 96
    %v1764 = vpop.permute.xlu0 %1763
    %1766 = vst.msk [vmem:[#allocation3] sm:$0x3] %vm1017, %v1764
    %v1767 = vsel %vm1108, %v1764, 0
    %1769 = vmatprep.subr.mxu0 0.0
    %1770 = vmatpush1.msra.mxu0 %v1649
    %1771 = vmatprep.subr.mxu0 0.0
    %1772 = vmatpush1.msra.mxu0 %v1650
    %1773 = vmatprep.subr.mxu0 0.0
    %1774 = vmatpush1.msra.mxu0 %v1651
    %1775 = vmatprep.subr.mxu0 0.0
    %1776 = vmatpush1.msra.mxu0 %v1652
    %1777 = vmatprep.subr.mxu0 0.0
    %1778 = vmatpush1.msra.mxu0 0.0
    %1779 = vmatprep.subr.mxu0 0.0
    %1780 = vmatpush1.msra.mxu0 0.0
    %1781 = vmatprep.subr.mxu0 0.0
    %1782 = vmatpush1.msra.mxu0 0.0
    %1783 = vmatprep.subr.mxu0 0.0
    %1784 = vmatpush1.msra.mxu0 0.0
    %1785 = vmatprep.subr.mxu0 0.0
    %1786 = vmatpush1.msra.mxu0 0.0
    %1787 = vmatprep.subr.mxu0 0.0
    %1788 = vmatpush1.msra.mxu0 0.0
    %1789 = vmatprep.subr.mxu0 0.0
    %1790 = vmatpush1.msra.mxu0 0.0
    %1791 = vmatprep.subr.mxu0 0.0
    %1792 = vmatpush1.msra.mxu0 0.0
    %1793 = vmatprep.subr.mxu0 0.0
    %1794 = vmatpush1.msra.mxu0 0.0
    %1795 = vmatprep.subr.mxu0 0.0
    %1796 = vmatpush1.msra.mxu0 0.0
    %1797 = vmatprep.subr.mxu0 0.0
    %1798 = vmatpush1.msra.mxu0 0.0
    %1799 = vmatprep.subr.mxu0 0.0
    %1800 = vmatpush1.msra.mxu0 0.0
    %1801 = vmatprep.subr.mxu0 0.0
    %1802 = vmatpush1.msra.mxu0 0.0
    %1803 = vmatprep.subr.mxu0 0.0
    %1804 = vmatpush1.msra.mxu0 0.0
    %1805 = vmatprep.subr.mxu0 0.0
    %1806 = vmatpush1.msra.mxu0 0.0
    %1807 = vmatprep.subr.mxu0 0.0
    %1808 = vmatpush1.msra.mxu0 0.0
    %1809 = vmatprep.subr.mxu0 0.0
    %1810 = vmatpush1.msra.mxu0 0.0
    %1811 = vmatprep.subr.mxu0 0.0
    %1812 = vmatpush1.msra.mxu0 0.0
    %1813 = vmatprep.subr.mxu0 0.0
    %1814 = vmatpush1.msra.mxu0 0.0
    %1815 = vmatprep.subr.mxu0 0.0
    %1816 = vmatpush1.msra.mxu0 0.0
    %1817 = vmatprep.subr.mxu0 0.0
    %1818 = vmatpush1.msra.mxu0 0.0
    %1819 = vmatprep.subr.mxu0 0.0
    %1820 = vmatpush1.msra.mxu0 0.0
    %1821 = vmatprep.subr.mxu0 0.0
    %1822 = vmatpush1.msra.mxu0 0.0
    %1823 = vmatprep.subr.mxu0 0.0
    %1824 = vmatpush1.msra.mxu0 0.0
    %1825 = vmatprep.subr.mxu0 0.0
    %1826 = vmatpush1.msra.mxu0 0.0
    %1827 = vmatprep.subr.mxu0 0.0
    %1828 = vmatpush1.msra.mxu0 0.0
    %1829 = vmatprep.subr.mxu0 0.0
    %1830 = vmatpush1.msra.mxu0 0.0
    %1831 = vmatprep.subr.mxu0 0.0
    %1832 = vmatpush1.msra.mxu0 0.0
    %1833 = vmatprep.mubr.f32.mxu0 0.0
    %1834 = vmatmul.mubr.f32.gmra.mrb[0].mxu0 %v1767
    %v1835 = vpop.f32.mrb[0].mxu0
    %v1836 = vadd.f32 0.0, %v1835
    %v1837 = vpop.f32.mrb[0].mxu0
    %1838 = vdwg.mxu0
    %v1840 = vrot.slane %v1836, 6
    %v1842 = vadd.f32 %v1641, %v1840
    %v1843 = vxor.u32 %v1842, 2147483648
    %v1844 = vmul.f32 %v1843, 1.442695
    %v1845 = vpow.pop %v1844
    %v1846 = vadd.f32 %v1845, 1.0
    %v1847 = vrcp.pop %v1846
    %v1848 = vmul.f32 1.0, %v1847
    %v1849 = vadd.f32 %v1836, %v1737
    %v1851 = vrot.slane %v1849, 6
    %1852 = vrot.lane.b32.xlu0 %v1851, 64
    %v1853 = vpop.permute.xlu0 %1852
    %v1855 = vmul.f32 %v1848, %v1853
    %1857 = vrot.lane.b32.xlu0 %v1855, 64
    %v1858 = vpop.permute.xlu0 %1857
    %v1860 = vadd.f32 %v1641, %v1858
    %v1861 = vtanh.pop %v1860
    %v1862 = vsub.f32 1.0, %v1848
    %1864 = vrot.lane.b32.xlu0 %v1861, 96
    %v1865 = vpop.permute.xlu0 %1864
    %v1867 = vmul.f32 %v1862, %v1865
    %v1868 = vrot.slane %v1761, 6
    %v1870 = vmul.f32 %v1848, %v1868
    %v1871 = vadd.f32 %v1867, %v1870
    %v1873 = vrot.slane %v1871, 2
    %1874 = vrot.lane.b32.xlu0 %v1873, 96
    %v1875 = vpop.permute.xlu0 %1874
    %v1876 = vsel %vm1108, %v1875, 0
    %1878 = vmatprep.subr.mxu0 0.0
    %1879 = vmatpush1.msra.mxu0 %v1649
    %1880 = vmatprep.subr.mxu0 0.0
    %1881 = vmatpush1.msra.mxu0 %v1650
    %1882 = vmatprep.subr.mxu0 0.0
    %1883 = vmatpush1.msra.mxu0 %v1651
    %1884 = vmatprep.subr.mxu0 0.0
    %1885 = vmatpush1.msra.mxu0 %v1652
    %1886 = vmatprep.subr.mxu0 0.0
    %1887 = vmatpush1.msra.mxu0 0.0
    %1888 = vmatprep.subr.mxu0 0.0
    %1889 = vmatpush1.msra.mxu0 0.0
    %1890 = vmatprep.subr.mxu0 0.0
    %1891 = vmatpush1.msra.mxu0 0.0
    %1892 = vmatprep.subr.mxu0 0.0
    %1893 = vmatpush1.msra.mxu0 0.0
    %1894 = vmatprep.subr.mxu0 0.0
    %1895 = vmatpush1.msra.mxu0 0.0
    %1896 = vmatprep.subr.mxu0 0.0
    %1897 = vmatpush1.msra.mxu0 0.0
    %1898 = vmatprep.subr.mxu0 0.0
    %1899 = vmatpush1.msra.mxu0 0.0
    %1900 = vmatprep.subr.mxu0 0.0
    %1901 = vmatpush1.msra.mxu0 0.0
    %1902 = vmatprep.subr.mxu0 0.0
    %1903 = vmatpush1.msra.mxu0 0.0
    %1904 = vmatprep.subr.mxu0 0.0
    %1905 = vmatpush1.msra.mxu0 0.0
    %1906 = vmatprep.subr.mxu0 0.0
    %1907 = vmatpush1.msra.mxu0 0.0
    %1908 = vmatprep.subr.mxu0 0.0
    %1909 = vmatpush1.msra.mxu0 0.0
    %1910 = vmatprep.subr.mxu0 0.0
    %1911 = vmatpush1.msra.mxu0 0.0
    %1912 = vmatprep.subr.mxu0 0.0
    %1913 = vmatpush1.msra.mxu0 0.0
    %1914 = vmatprep.subr.mxu0 0.0
    %1915 = vmatpush1.msra.mxu0 0.0
    %1916 = vmatprep.subr.mxu0 0.0
    %1917 = vmatpush1.msra.mxu0 0.0
    %1918 = vmatprep.subr.mxu0 0.0
    %1919 = vmatpush1.msra.mxu0 0.0
    %1920 = vmatprep.subr.mxu0 0.0
    %1921 = vmatpush1.msra.mxu0 0.0
    %1922 = vmatprep.subr.mxu0 0.0
    %1923 = vmatpush1.msra.mxu0 0.0
    %1924 = vmatprep.subr.mxu0 0.0
    %1925 = vmatpush1.msra.mxu0 0.0
    %1926 = vmatprep.subr.mxu0 0.0
    %1927 = vmatpush1.msra.mxu0 0.0
    %1928 = vmatprep.subr.mxu0 0.0
    %1929 = vmatpush1.msra.mxu0 0.0
    %1930 = vmatprep.subr.mxu0 0.0
    %1931 = vmatpush1.msra.mxu0 0.0
    %1932 = vmatprep.subr.mxu0 0.0
    %1933 = vmatpush1.msra.mxu0 0.0
    %1934 = vmatprep.subr.mxu0 0.0
    %1935 = vmatpush1.msra.mxu0 0.0
    %1936 = vmatprep.subr.mxu0 0.0
    %1937 = vmatpush1.msra.mxu0 0.0
    %1938 = vmatprep.subr.mxu0 0.0
    %1939 = vmatpush1.msra.mxu0 0.0
    %1940 = vmatprep.subr.mxu0 0.0
    %1941 = vmatpush1.msra.mxu0 0.0
    %1942 = vmatprep.mubr.f32.mxu0 0.0
    %1943 = vmatmul.mubr.f32.gmra.mrb[0].mxu0 %v1876
    %v1944 = vpop.f32.mrb[0].mxu0
    %v1945 = vadd.f32 0.0, %v1944
    %v1946 = vpop.f32.mrb[0].mxu0
    %1947 = vdwg.mxu0
    %v1949 = vrot.slane %v1945, 4
    %v1951 = vadd.f32 %v1641, %v1949
    %v1952 = vxor.u32 %v1951, 2147483648
    %v1953 = vmul.f32 %v1952, 1.442695
    %v1954 = vpow.pop %v1953
    %v1955 = vadd.f32 %v1954, 1.0
    %v1956 = vrcp.pop %v1955
    %v1957 = vmul.f32 1.0, %v1956
    %v1958 = vadd.f32 %v1945, %v1737
    %v1960 = vrot.slane %v1958, 4
    %1961 = vrot.lane.b32.xlu0 %v1960, 64
    %v1962 = vpop.permute.xlu0 %1961
    %v1964 = vmul.f32 %v1957, %v1962
    %1966 = vrot.lane.b32.xlu0 %v1964, 64
    %v1967 = vpop.permute.xlu0 %1966
    %v1969 = vadd.f32 %v1641, %v1967
    %v1970 = vtanh.pop %v1969
    %v1971 = vsub.f32 1.0, %v1957
    %1973 = vrot.lane.b32.xlu0 %v1970, 96
    %v1974 = vpop.permute.xlu0 %1973
    %v1976 = vmul.f32 %v1971, %v1974
    %v1977 = vrot.slane %v1871, 6
    %v1979 = vmul.f32 %v1957, %v1977
    %v1980 = vadd.f32 %v1976, %v1979
    %v1982 = vrot.slane %v1980, 4
    %1983 = vrot.lane.b32.xlu0 %v1982, 96
    %v1984 = vpop.permute.xlu0 %1983
    %v1985 = vsel %vm1108, %v1984, 0
    %1987 = vmatprep.subr.mxu0 0.0
    %1988 = vmatpush1.msra.mxu0 %v1649
    %1989 = vmatprep.subr.mxu0 0.0
    %1990 = vmatpush1.msra.mxu0 %v1650
    %1991 = vmatprep.subr.mxu0 0.0
    %1992 = vmatpush1.msra.mxu0 %v1651
    %1993 = vmatprep.subr.mxu0 0.0
    %1994 = vmatpush1.msra.mxu0 %v1652
    %1995 = vmatprep.subr.mxu0 0.0
    %1996 = vmatpush1.msra.mxu0 0.0
    %1997 = vmatprep.subr.mxu0 0.0
    %1998 = vmatpush1.msra.mxu0 0.0
    %1999 = vmatprep.subr.mxu0 0.0
    %2000 = vmatpush1.msra.mxu0 0.0
    %2001 = vmatprep.subr.mxu0 0.0
    %2002 = vmatpush1.msra.mxu0 0.0
    %2003 = vmatprep.subr.mxu0 0.0
    %2004 = vmatpush1.msra.mxu0 0.0
    %2005 = vmatprep.subr.mxu0 0.0
    %2006 = vmatpush1.msra.mxu0 0.0
    %2007 = vmatprep.subr.mxu0 0.0
    %2008 = vmatpush1.msra.mxu0 0.0
    %2009 = vmatprep.subr.mxu0 0.0
    %2010 = vmatpush1.msra.mxu0 0.0
    %2011 = vmatprep.subr.mxu0 0.0
    %2012 = vmatpush1.msra.mxu0 0.0
    %2013 = vmatprep.subr.mxu0 0.0
    %2014 = vmatpush1.msra.mxu0 0.0
    %2015 = vmatprep.subr.mxu0 0.0
    %2016 = vmatpush1.msra.mxu0 0.0
    %2017 = vmatprep.subr.mxu0 0.0
    %2018 = vmatpush1.msra.mxu0 0.0
    %2019 = vmatprep.subr.mxu0 0.0
    %2020 = vmatpush1.msra.mxu0 0.0
    %2021 = vmatprep.subr.mxu0 0.0
    %2022 = vmatpush1.msra.mxu0 0.0
    %2023 = vmatprep.subr.mxu0 0.0
    %2024 = vmatpush1.msra.mxu0 0.0
    %2025 = vmatprep.subr.mxu0 0.0
    %2026 = vmatpush1.msra.mxu0 0.0
    %2027 = vmatprep.subr.mxu0 0.0
    %2028 = vmatpush1.msra.mxu0 0.0
    %2029 = vmatprep.subr.mxu0 0.0
    %2030 = vmatpush1.msra.mxu0 0.0
    %2031 = vmatprep.subr.mxu0 0.0
    %2032 = vmatpush1.msra.mxu0 0.0
    %2033 = vmatprep.subr.mxu0 0.0
    %2034 = vmatpush1.msra.mxu0 0.0
    %2035 = vmatprep.subr.mxu0 0.0
    %2036 = vmatpush1.msra.mxu0 0.0
    %2037 = vmatprep.subr.mxu0 0.0
    %2038 = vmatpush1.msra.mxu0 0.0
    %2039 = vmatprep.subr.mxu0 0.0
    %2040 = vmatpush1.msra.mxu0 0.0
    %2041 = vmatprep.subr.mxu0 0.0
    %2042 = vmatpush1.msra.mxu0 0.0
    %2043 = vmatprep.subr.mxu0 0.0
    %2044 = vmatpush1.msra.mxu0 0.0
    %2045 = vmatprep.subr.mxu0 0.0
    %2046 = vmatpush1.msra.mxu0 0.0
    %2047 = vmatprep.subr.mxu0 0.0
    %2048 = vmatpush1.msra.mxu0 0.0
    %2049 = vmatprep.subr.mxu0 0.0
    %2050 = vmatpush1.msra.mxu0 0.0
    %2051 = vmatprep.mubr.f32.mxu0 0.0
    %2052 = vmatmul.mubr.f32.gmra.mrb[0].mxu0 %v1985
    %v2053 = vpop.f32.mrb[0].mxu0
    %v2054 = vadd.f32 0.0, %v2053
    %v2055 = vpop.f32.mrb[0].mxu0
    %2056 = vdwg.mxu0
    %v2058 = vrot.slane %v2054, 2
    %v2060 = vadd.f32 %v1641, %v2058
    %v2061 = vxor.u32 %v2060, 2147483648
    %v2062 = vmul.f32 %v2061, 1.442695
    %v2063 = vpow.pop %v2062
    %v2064 = vadd.f32 %v2063, 1.0
    %v2065 = vrcp.pop %v2064
    %v2066 = vmul.f32 1.0, %v2065
    %v2067 = vadd.f32 %v2054, %v1737
    %v2069 = vrot.slane %v2067, 2
    %2070 = vrot.lane.b32.xlu0 %v2069, 64
    %v2071 = vpop.permute.xlu0 %2070
    %v2073 = vmul.f32 %v2066, %v2071
    %2075 = vrot.lane.b32.xlu0 %v2073, 64
    %v2076 = vpop.permute.xlu0 %2075
    %v2078 = vadd.f32 %v1641, %v2076
    %v2079 = vtanh.pop %v2078
    %v2080 = vsub.f32 1.0, %v2066
    %2082 = vrot.lane.b32.xlu0 %v2079, 96
    %v2083 = vpop.permute.xlu0 %2082
    %v2085 = vmul.f32 %v2080, %v2083
    %v2086 = vrot.slane %v1980, 6
    %v2088 = vmul.f32 %v2066, %v2086
    %v2089 = vadd.f32 %v2085, %v2088
    %v2091 = vrot.slane %v2089, 6
    %2092 = vrot.lane.b32.xlu0 %v2091, 96
    %v2093 = vpop.permute.xlu0 %2092
    %v2094 = vsel %vm1108, %v2093, 0
    %2096 = vmatprep.subr.mxu0 0.0
    %2097 = vmatpush1.msra.mxu0 %v1649
    %2098 = vmatprep.subr.mxu0 0.0
    %2099 = vmatpush1.msra.mxu0 %v1650
    %2100 = vmatprep.subr.mxu0 0.0
    %2101 = vmatpush1.msra.mxu0 %v1651
    %2102 = vmatprep.subr.mxu0 0.0
    %2103 = vmatpush1.msra.mxu0 %v1652
    %2104 = vmatprep.subr.mxu0 0.0
    %2105 = vmatpush1.msra.mxu0 0.0
    %2106 = vmatprep.subr.mxu0 0.0
    %2107 = vmatpush1.msra.mxu0 0.0
    %2108 = vmatprep.subr.mxu0 0.0
    %2109 = vmatpush1.msra.mxu0 0.0
    %2110 = vmatprep.subr.mxu0 0.0
    %2111 = vmatpush1.msra.mxu0 0.0
    %2112 = vmatprep.subr.mxu0 0.0
    %2113 = vmatpush1.msra.mxu0 0.0
    %2114 = vmatprep.subr.mxu0 0.0
    %2115 = vmatpush1.msra.mxu0 0.0
    %2116 = vmatprep.subr.mxu0 0.0
    %2117 = vmatpush1.msra.mxu0 0.0
    %2118 = vmatprep.subr.mxu0 0.0
    %2119 = vmatpush1.msra.mxu0 0.0
    %2120 = vmatprep.subr.mxu0 0.0
    %2121 = vmatpush1.msra.mxu0 0.0
    %2122 = vmatprep.subr.mxu0 0.0
    %2123 = vmatpush1.msra.mxu0 0.0
    %2124 = vmatprep.subr.mxu0 0.0
    %2125 = vmatpush1.msra.mxu0 0.0
    %2126 = vmatprep.subr.mxu0 0.0
    %2127 = vmatpush1.msra.mxu0 0.0
    %2128 = vmatprep.subr.mxu0 0.0
    %2129 = vmatpush1.msra.mxu0 0.0
    %2130 = vmatprep.subr.mxu0 0.0
    %2131 = vmatpush1.msra.mxu0 0.0
    %2132 = vmatprep.subr.mxu0 0.0
    %2133 = vmatpush1.msra.mxu0 0.0
    %2134 = vmatprep.subr.mxu0 0.0
    %2135 = vmatpush1.msra.mxu0 0.0
    %2136 = vmatprep.subr.mxu0 0.0
    %2137 = vmatpush1.msra.mxu0 0.0
    %2138 = vmatprep.subr.mxu0 0.0
    %2139 = vmatpush1.msra.mxu0 0.0
    %2140 = vmatprep.subr.mxu0 0.0
    %2141 = vmatpush1.msra.mxu0 0.0
    %2142 = vmatprep.subr.mxu0 0.0
    %2143 = vmatpush1.msra.mxu0 0.0
    %2144 = vmatprep.subr.mxu0 0.0
    %2145 = vmatpush1.msra.mxu0 0.0
    %2146 = vmatprep.subr.mxu0 0.0
    %2147 = vmatpush1.msra.mxu0 0.0
    %2148 = vmatprep.subr.mxu0 0.0
    %2149 = vmatpush1.msra.mxu0 0.0
    %2150 = vmatprep.subr.mxu0 0.0
    %2151 = vmatpush1.msra.mxu0 0.0
    %2152 = vmatprep.subr.mxu0 0.0
    %2153 = vmatpush1.msra.mxu0 0.0
    %2154 = vmatprep.subr.mxu0 0.0
    %2155 = vmatpush1.msra.mxu0 0.0
    %2156 = vmatprep.subr.mxu0 0.0
    %2157 = vmatpush1.msra.mxu0 0.0
    %2158 = vmatprep.subr.mxu0 0.0
    %2159 = vmatpush1.msra.mxu0 0.0
    %2160 = vmatprep.mubr.f32.mxu0 0.0
    %2161 = vmatmul.mubr.f32.gmra.mrb[0].mxu0 %v2094
    %v2162 = vpop.f32.mrb[0].mxu0
    %v2163 = vadd.f32 0.0, %v2162
    %v2164 = vpop.f32.mrb[0].mxu0
    %2165 = vdwg.mxu0
    %v2166 = vadd.f32 %v1646, %v2163
    %v2167 = vxor.u32 %v2166, 2147483648
    %v2168 = vmul.f32 %v2167, 1.442695
    %v2169 = vpow.pop %v2168
    %v2170 = vadd.f32 %v2169, 1.0
    %v2171 = vrcp.pop %v2170
    %v2172 = vmul.f32 1.0, %v2171
    %v2173 = vadd.f32 %v2163, %v1737
    %2175 = vrot.lane.b32.xlu0 %v2173, 64
    %v2176 = vpop.permute.xlu0 %2175
    %v2178 = vmul.f32 %v2172, %v2176
    %2180 = vrot.lane.b32.xlu0 %v2178, 64
    %v2181 = vpop.permute.xlu0 %2180
    %v2183 = vadd.f32 %v1646, %v2181
    %v2184 = vtanh.pop %v2183
    %v2185 = vsub.f32 1.0, %v2172
    %2187 = vrot.lane.b32.xlu0 %v2184, 96
    %v2188 = vpop.permute.xlu0 %2187
    %v2190 = vmul.f32 %v2185, %v2188
    %v2192 = vmul.f32 %v2172, %v2091
    %v2193 = vadd.f32 %v2190, %v2192
    %2195 = vrot.lane.b32.xlu0 %v2193, 96
    %v2196 = vpop.permute.xlu0 %2195
    %v2197 = vsel %vm1108, %v2196, 0
    %2199 = vmatprep.subr.mxu0 0.0
    %2200 = vmatpush1.msra.mxu0 %v1649
    %2201 = vmatprep.subr.mxu0 0.0
    %2202 = vmatpush1.msra.mxu0 %v1650
    %2203 = vmatprep.subr.mxu0 0.0
    %2204 = vmatpush1.msra.mxu0 %v1651
    %2205 = vmatprep.subr.mxu0 0.0
    %2206 = vmatpush1.msra.mxu0 %v1652
    %2207 = vmatprep.subr.mxu0 0.0
    %2208 = vmatpush1.msra.mxu0 0.0
    %2209 = vmatprep.subr.mxu0 0.0
    %2210 = vmatpush1.msra.mxu0 0.0
    %2211 = vmatprep.subr.mxu0 0.0
    %2212 = vmatpush1.msra.mxu0 0.0
    %2213 = vmatprep.subr.mxu0 0.0
    %2214 = vmatpush1.msra.mxu0 0.0
    %2215 = vmatprep.subr.mxu0 0.0
    %2216 = vmatpush1.msra.mxu0 0.0
    %2217 = vmatprep.subr.mxu0 0.0
    %2218 = vmatpush1.msra.mxu0 0.0
    %2219 = vmatprep.subr.mxu0 0.0
    %2220 = vmatpush1.msra.mxu0 0.0
    %2221 = vmatprep.subr.mxu0 0.0
    %2222 = vmatpush1.msra.mxu0 0.0
    %2223 = vmatprep.subr.mxu0 0.0
    %2224 = vmatpush1.msra.mxu0 0.0
    %2225 = vmatprep.subr.mxu0 0.0
    %2226 = vmatpush1.msra.mxu0 0.0
    %2227 = vmatprep.subr.mxu0 0.0
    %2228 = vmatpush1.msra.mxu0 0.0
    %2229 = vmatprep.subr.mxu0 0.0
    %2230 = vmatpush1.msra.mxu0 0.0
    %2231 = vmatprep.subr.mxu0 0.0
    %2232 = vmatpush1.msra.mxu0 0.0
    %2233 = vmatprep.subr.mxu0 0.0
    %2234 = vmatpush1.msra.mxu0 0.0
    %2235 = vmatprep.subr.mxu0 0.0
    %2236 = vmatpush1.msra.mxu0 0.0
    %2237 = vmatprep.subr.mxu0 0.0
    %2238 = vmatpush1.msra.mxu0 0.0
    %2239 = vmatprep.subr.mxu0 0.0
    %2240 = vmatpush1.msra.mxu0 0.0
    %2241 = vmatprep.subr.mxu0 0.0
    %2242 = vmatpush1.msra.mxu0 0.0
    %2243 = vmatprep.subr.mxu0 0.0
    %2244 = vmatpush1.msra.mxu0 0.0
    %2245 = vmatprep.subr.mxu0 0.0
    %2246 = vmatpush1.msra.mxu0 0.0
    %2247 = vmatprep.subr.mxu0 0.0
    %2248 = vmatpush1.msra.mxu0 0.0
    %2249 = vmatprep.subr.mxu0 0.0
    %2250 = vmatpush1.msra.mxu0 0.0
    %2251 = vmatprep.subr.mxu0 0.0
    %2252 = vmatpush1.msra.mxu0 0.0
    %2253 = vmatprep.subr.mxu0 0.0
    %2254 = vmatpush1.msra.mxu0 0.0
    %2255 = vmatprep.subr.mxu0 0.0
    %2256 = vmatpush1.msra.mxu0 0.0
    %2257 = vmatprep.subr.mxu0 0.0
    %2258 = vmatpush1.msra.mxu0 0.0
    %2259 = vmatprep.subr.mxu0 0.0
    %2260 = vmatpush1.msra.mxu0 0.0
    %2261 = vmatprep.subr.mxu0 0.0
    %2262 = vmatpush1.msra.mxu0 0.0
    %2263 = vmatprep.mubr.f32.mxu0 0.0
    %2264 = vmatmul.mubr.f32.gmra.mrb[0].mxu0 %v2197
    %v2265 = vpop.f32.mrb[0].mxu0
    %v2266 = vadd.f32 0.0, %v2265
    %v2267 = vpop.f32.mrb[0].mxu0
    %2268 = vdwg.mxu0
    %v2270 = vrot.slane %v2266, 6
    %v2272 = vadd.f32 %v1646, %v2270
    %v2273 = vxor.u32 %v2272, 2147483648
    %v2274 = vmul.f32 %v2273, 1.442695
    %v2275 = vpow.pop %v2274
    %v2276 = vadd.f32 %v2275, 1.0
    %v2277 = vrcp.pop %v2276
    %v2278 = vmul.f32 1.0, %v2277
    %v2279 = vadd.f32 %v2266, %v1737
    %v2281 = vrot.slane %v2279, 6
    %2282 = vrot.lane.b32.xlu0 %v2281, 64
    %v2283 = vpop.permute.xlu0 %2282
    %v2285 = vmul.f32 %v2278, %v2283
    %2287 = vrot.lane.b32.xlu0 %v2285, 64
    %v2288 = vpop.permute.xlu0 %2287
    %v2290 = vadd.f32 %v1646, %v2288
    %v2291 = vtanh.pop %v2290
    %v2292 = vsub.f32 1.0, %v2278
    %2294 = vrot.lane.b32.xlu0 %v2291, 96
    %v2295 = vpop.permute.xlu0 %2294
    %v2297 = vmul.f32 %v2292, %v2295
    %v2298 = vrot.slane %v2193, 6
    %v2300 = vmul.f32 %v2278, %v2298
    %v2301 = vadd.f32 %v2297, %v2300
    %v2303 = vrot.slane %v2301, 2
    %2304 = vrot.lane.b32.xlu0 %v2303, 96
    %v2305 = vpop.permute.xlu0 %2304
    %v2306 = vsel %vm1108, %v2305, 0
    %2308 = vmatprep.subr.mxu0 0.0
    %2309 = vmatpush1.msra.mxu0 %v1649
    %2310 = vmatprep.subr.mxu0 0.0
    %2311 = vmatpush1.msra.mxu0 %v1650
    %2312 = vmatprep.subr.mxu0 0.0
    %2313 = vmatpush1.msra.mxu0 %v1651
    %2314 = vmatprep.subr.mxu0 0.0
    %2315 = vmatpush1.msra.mxu0 %v1652
    %2316 = vmatprep.subr.mxu0 0.0
    %2317 = vmatpush1.msra.mxu0 0.0
    %2318 = vmatprep.subr.mxu0 0.0
    %2319 = vmatpush1.msra.mxu0 0.0
    %2320 = vmatprep.subr.mxu0 0.0
    %2321 = vmatpush1.msra.mxu0 0.0
    %2322 = vmatprep.subr.mxu0 0.0
    %2323 = vmatpush1.msra.mxu0 0.0
    %2324 = vmatprep.subr.mxu0 0.0
    %2325 = vmatpush1.msra.mxu0 0.0
    %2326 = vmatprep.subr.mxu0 0.0
    %2327 = vmatpush1.msra.mxu0 0.0
    %2328 = vmatprep.subr.mxu0 0.0
    %2329 = vmatpush1.msra.mxu0 0.0
    %2330 = vmatprep.subr.mxu0 0.0
    %2331 = vmatpush1.msra.mxu0 0.0
    %2332 = vmatprep.subr.mxu0 0.0
    %2333 = vmatpush1.msra.mxu0 0.0
    %2334 = vmatprep.subr.mxu0 0.0
    %2335 = vmatpush1.msra.mxu0 0.0
    %2336 = vmatprep.subr.mxu0 0.0
    %2337 = vmatpush1.msra.mxu0 0.0
    %2338 = vmatprep.subr.mxu0 0.0
    %2339 = vmatpush1.msra.mxu0 0.0
    %2340 = vmatprep.subr.mxu0 0.0
    %2341 = vmatpush1.msra.mxu0 0.0
    %2342 = vmatprep.subr.mxu0 0.0
    %2343 = vmatpush1.msra.mxu0 0.0
    %2344 = vmatprep.subr.mxu0 0.0
    %2345 = vmatpush1.msra.mxu0 0.0
    %2346 = vmatprep.subr.mxu0 0.0
    %2347 = vmatpush1.msra.mxu0 0.0
    %2348 = vmatprep.subr.mxu0 0.0
    %2349 = vmatpush1.msra.mxu0 0.0
    %2350 = vmatprep.subr.mxu0 0.0
    %2351 = vmatpush1.msra.mxu0 0.0
    %2352 = vmatprep.subr.mxu0 0.0
    %2353 = vmatpush1.msra.mxu0 0.0
    %2354 = vmatprep.subr.mxu0 0.0
    %2355 = vmatpush1.msra.mxu0 0.0
    %2356 = vmatprep.subr.mxu0 0.0
    %2357 = vmatpush1.msra.mxu0 0.0
    %2358 = vmatprep.subr.mxu0 0.0
    %2359 = vmatpush1.msra.mxu0 0.0
    %2360 = vmatprep.subr.mxu0 0.0
    %2361 = vmatpush1.msra.mxu0 0.0
    %2362 = vmatprep.subr.mxu0 0.0
    %2363 = vmatpush1.msra.mxu0 0.0
    %2364 = vmatprep.subr.mxu0 0.0
    %2365 = vmatpush1.msra.mxu0 0.0
    %2366 = vmatprep.subr.mxu0 0.0
    %2367 = vmatpush1.msra.mxu0 0.0
    %2368 = vmatprep.subr.mxu0 0.0
    %2369 = vmatpush1.msra.mxu0 0.0
    %2370 = vmatprep.subr.mxu0 0.0
    %2371 = vmatpush1.msra.mxu0 0.0
    %2372 = vmatprep.mubr.f32.mxu0 0.0
    %2373 = vmatmul.mubr.f32.gmra.mrb[0].mxu0 %v2306
    %v2374 = vpop.f32.mrb[0].mxu0
    %v2375 = vadd.f32 0.0, %v2374
    %v2376 = vpop.f32.mrb[0].mxu0
    %2377 = vdwg.mxu0
    %v2379 = vrot.slane %v2375, 4
    %v2381 = vadd.f32 %v1646, %v2379
    %v2382 = vxor.u32 %v2381, 2147483648
    %v2383 = vmul.f32 %v2382, 1.442695
    %v2384 = vpow.pop %v2383
    %v2385 = vadd.f32 %v2384, 1.0
    %v2386 = vrcp.pop %v2385
    %v2387 = vmul.f32 1.0, %v2386
    %v2388 = vadd.f32 %v2375, %v1737
    %v2390 = vrot.slane %v2388, 4
    %2391 = vrot.lane.b32.xlu0 %v2390, 64
    %v2392 = vpop.permute.xlu0 %2391
    %v2394 = vmul.f32 %v2387, %v2392
    %2396 = vrot.lane.b32.xlu0 %v2394, 64
    %v2397 = vpop.permute.xlu0 %2396
    %v2399 = vadd.f32 %v1646, %v2397
    %v2400 = vtanh.pop %v2399
    %v2401 = vsub.f32 1.0, %v2387
    %2403 = vrot.lane.b32.xlu0 %v2400, 96
    %v2404 = vpop.permute.xlu0 %2403
    %v2406 = vmul.f32 %v2401, %v2404
    %v2407 = vrot.slane %v2301, 6
    %v2409 = vmul.f32 %v2387, %v2407
    %v2410 = vadd.f32 %v2406, %v2409
    %v2412 = vrot.slane %v2410, 4
    %2413 = vrot.lane.b32.xlu0 %v2412, 96
    %v2414 = vpop.permute.xlu0 %2413
    %v2415 = vsel %vm1108, %v2414, 0
    %2417 = vmatprep.subr.mxu0 0.0
    %2418 = vmatpush1.msra.mxu0 %v1649
    %2419 = vmatprep.subr.mxu0 0.0
    %2420 = vmatpush1.msra.mxu0 %v1650
    %2421 = vmatprep.subr.mxu0 0.0
    %2422 = vmatpush1.msra.mxu0 %v1651
    %2423 = vmatprep.subr.mxu0 0.0
    %2424 = vmatpush1.msra.mxu0 %v1652
    %2425 = vmatprep.subr.mxu0 0.0
    %2426 = vmatpush1.msra.mxu0 0.0
    %2427 = vmatprep.subr.mxu0 0.0
    %2428 = vmatpush1.msra.mxu0 0.0
    %2429 = vmatprep.subr.mxu0 0.0
    %2430 = vmatpush1.msra.mxu0 0.0
    %2431 = vmatprep.subr.mxu0 0.0
    %2432 = vmatpush1.msra.mxu0 0.0
    %2433 = vmatprep.subr.mxu0 0.0
    %2434 = vmatpush1.msra.mxu0 0.0
    %2435 = vmatprep.subr.mxu0 0.0
    %2436 = vmatpush1.msra.mxu0 0.0
    %2437 = vmatprep.subr.mxu0 0.0
    %2438 = vmatpush1.msra.mxu0 0.0
    %2439 = vmatprep.subr.mxu0 0.0
    %2440 = vmatpush1.msra.mxu0 0.0
    %2441 = vmatprep.subr.mxu0 0.0
    %2442 = vmatpush1.msra.mxu0 0.0
    %2443 = vmatprep.subr.mxu0 0.0
    %2444 = vmatpush1.msra.mxu0 0.0
    %2445 = vmatprep.subr.mxu0 0.0
    %2446 = vmatpush1.msra.mxu0 0.0
    %2447 = vmatprep.subr.mxu0 0.0
    %2448 = vmatpush1.msra.mxu0 0.0
    %2449 = vmatprep.subr.mxu0 0.0
    %2450 = vmatpush1.msra.mxu0 0.0
    %2451 = vmatprep.subr.mxu0 0.0
    %2452 = vmatpush1.msra.mxu0 0.0
    %2453 = vmatprep.subr.mxu0 0.0
    %2454 = vmatpush1.msra.mxu0 0.0
    %2455 = vmatprep.subr.mxu0 0.0
    %2456 = vmatpush1.msra.mxu0 0.0
    %2457 = vmatprep.subr.mxu0 0.0
    %2458 = vmatpush1.msra.mxu0 0.0
    %2459 = vmatprep.subr.mxu0 0.0
    %2460 = vmatpush1.msra.mxu0 0.0
    %2461 = vmatprep.subr.mxu0 0.0
    %2462 = vmatpush1.msra.mxu0 0.0
    %2463 = vmatprep.subr.mxu0 0.0
    %2464 = vmatpush1.msra.mxu0 0.0
    %2465 = vmatprep.subr.mxu0 0.0
    %2466 = vmatpush1.msra.mxu0 0.0
    %2467 = vmatprep.subr.mxu0 0.0
    %2468 = vmatpush1.msra.mxu0 0.0
    %2469 = vmatprep.subr.mxu0 0.0
    %2470 = vmatpush1.msra.mxu0 0.0
    %2471 = vmatprep.subr.mxu0 0.0
    %2472 = vmatpush1.msra.mxu0 0.0
    %2473 = vmatprep.subr.mxu0 0.0
    %2474 = vmatpush1.msra.mxu0 0.0
    %2475 = vmatprep.subr.mxu0 0.0
    %2476 = vmatpush1.msra.mxu0 0.0
    %2477 = vmatprep.subr.mxu0 0.0
    %2478 = vmatpush1.msra.mxu0 0.0
    %2479 = vmatprep.subr.mxu0 0.0
    %2480 = vmatpush1.msra.mxu0 0.0
    %2481 = vmatprep.mubr.f32.mxu0 0.0
    %2482 = vmatmul.mubr.f32.gmra.mrb[0].mxu0 %v2415
    %v2483 = vpop.f32.mrb[0].mxu0
    %v2484 = vadd.f32 0.0, %v2483
    %v2485 = vpop.f32.mrb[0].mxu0
    %2486 = vdwg.mxu0
    %v2488 = vrot.slane %v2484, 2
    %v2490 = vadd.f32 %v1646, %v2488
    %v2491 = vxor.u32 %v2490, 2147483648
    %v2492 = vmul.f32 %v2491, 1.442695
    %v2493 = vpow.pop %v2492
    %v2494 = vadd.f32 %v2493, 1.0
    %v2495 = vrcp.pop %v2494
    %v2496 = vmul.f32 1.0, %v2495
    %v2497 = vadd.f32 %v2484, %v1737
    %v2499 = vrot.slane %v2497, 2
    %2500 = vrot.lane.b32.xlu0 %v2499, 64
    %v2501 = vpop.permute.xlu0 %2500
    %v2503 = vmul.f32 %v2496, %v2501
    %2505 = vrot.lane.b32.xlu0 %v2503, 64
    %v2506 = vpop.permute.xlu0 %2505
    %v2508 = vadd.f32 %v1646, %v2506
    %v2509 = vtanh.pop %v2508
    %v2510 = vsub.f32 1.0, %v2496
    %2512 = vrot.lane.b32.xlu0 %v2509, 96
    %v2513 = vpop.permute.xlu0 %2512
    %v2515 = vmul.f32 %v2510, %v2513
    %v2516 = vrot.slane %v2410, 6
    %v2518 = vmul.f32 %v2496, %v2516
    %v2519 = vadd.f32 %v2515, %v2518
    %2521 = vrot.lane.b32.xlu0 %v2519, 96
    %v2522 = vpop.permute.xlu0 %2521
    %2524 = vst.msk [vmem:[#allocation5 - $0x6] sm:$0xc0] %vm1049, %v2522
    // Predicated region
    $region62: #{encoder_decoder_forward.1} parent=1 // pred_check
      _
    $region63: #{encoder_decoder_forward.1} parent=1 // pred_check_branch
      %2526 = sbr.rel (0) target = $region65
    $region64: #{encoder_decoder_forward.1} parent=1 // pred_region
      %s2528 = ssub.s32 32, 32
      %2529 = vsyncadd [#allocation4], %s2528
      %s2531 = sshll.u32 [#allocation3], 4
      %s2532 = int_to_ptr.vmem [resolvable:$true] %s2531
      %2534 = dma.vmem_to_hbm [thread:$0]  %s2532, 32, %s15, [#allocation4]
    $region65: #{encoder_decoder_forward.1} parent=1 // pred_fallthru
      _
    // Predicated region
    $region66: #{encoder_decoder_forward.1} parent=1 // pred_check
      _
    $region67: #{encoder_decoder_forward.1} parent=1 // pred_check_branch
      %2536 = sbr.rel (0) target = $region69
    $region68: #{encoder_decoder_forward.1} parent=1 // pred_region
      %s2538 = ssub.s32 32, 32
      %2539 = vsyncadd [#allocation6], %s2538
      %s2541 = sshll.u32 [#allocation5], 4
      %s2542 = int_to_ptr.vmem [resolvable:$true] %s2541
      %2544 = dma.vmem_to_hbm [thread:$0]  %s2542, 32, %s16, [#allocation6]
    $region69: #{encoder_decoder_forward.1} parent=1 // pred_fallthru
      _
    // Predicated region
    $region70: #{encoder_decoder_forward.1} parent=1 // pred_check
      _
    $region71: #{encoder_decoder_forward.1} parent=1 // pred_check_branch
      %2546 = sbr.rel (0) target = $region73
    $region72: #{encoder_decoder_forward.1} parent=1 // pred_region
      %2547 = dma.done [#allocation4], 32
    $region73: #{encoder_decoder_forward.1} parent=1 // pred_fallthru
      _
    // Predicated region
    $region74: #{encoder_decoder_forward.1} parent=1 // pred_check
      _
    $region75: #{encoder_decoder_forward.1} parent=1 // pred_check_branch
      %2549 = sbr.rel (0) target = $region77
    $region76: #{encoder_decoder_forward.1} parent=1 // pred_region
      %2550 = dma.done [#allocation6], 32
    $region77: #{encoder_decoder_forward.1} parent=1 // pred_fallthru
      _
    %2551 = vsyncpa [#allocation4], 1
    %2552 = vsyncpa [#allocation6], 1

</llo_original>
